<compile_context>
chip_gen: v5e
topology: v5e:2x2
jax: 0.10.0
libtpu: 0.0.40
codegen_flags: <defaults>
</compile_context>

<pallas_src>
import jax
import jax.numpy as jnp
import numpy as np
from jax.experimental import pallas as pl
from jax.experimental.pallas import tpu as pltpu


def _round_up(x, m):
    return ((x + m - 1) // m) * m


def lstm_tag_kernel(tok_ref, wz_ref, b_ref, wout_ref, bout_ref, o_ref,
                    z_scr, c_scr):
    """Runs the whole sequence in one invocation.

    tok_ref : (T, B_pad, 1) int32            time-major token ids
    wz_ref  : (V_pad + H_pad, 4*H_pad) bf16  stacked [Emb @ W_ih^T ; W_hh^T], gate-padded
    b_ref   : (1, 4*H_pad) f32               b_ih + b_hh, gate-padded
    wout_ref: (H_pad, C_pad) bf16            W_out^T, padded
    bout_ref: (1, C_pad)    f32
    o_ref   : (B_pad, C_pad) f32
    z_scr   : (B_pad, V_pad + H_pad) bf16    persistent [onehot_t | h_t] (MXU operand)
    c_scr   : (B_pad, H_pad) f32             cell state
    """
    T = tok_ref.shape[0]
    B_pad, VH = z_scr.shape
    H_pad = c_scr.shape[-1]
    V_pad = VH - H_pad

    z_scr[...] = jnp.zeros_like(z_scr)   # h_0 = 0 (and clear one-hot slot)
    c_scr[...] = jnp.zeros_like(c_scr)   # c_0 = 0

    # Hoisted out of the loop (JAX does not CSE broadcasts).
    lane_iota = jax.lax.broadcasted_iota(jnp.int32, (B_pad, V_pad), 1)
    bias = b_ref[...]                    # (1, 4*H_pad) f32, loaded once

    def step(t, carry):
        tok_t = tok_ref[t]                                        # (B_pad, 1) int32
        z_scr[:, :V_pad] = (lane_iota == tok_t).astype(z_scr.dtype)

        # Single fused MXU pass: [onehot | h] @ [Emb@W_ih^T ; W_hh^T]  (bf16 in, f32 acc)
        gates = jnp.dot(z_scr[...], wz_ref[...],
                        preferred_element_type=jnp.float32) + bias

        # Each gate occupies its own full 128-lane block -> full-vreg slices.
        i_g = jax.nn.sigmoid(gates[:, 0 * H_pad:1 * H_pad])
        f_g = jax.nn.sigmoid(gates[:, 1 * H_pad:2 * H_pad])
        g_g = jnp.tanh(gates[:, 2 * H_pad:3 * H_pad])
        o_g = jax.nn.sigmoid(gates[:, 3 * H_pad:4 * H_pad])

        c_new = f_g * c_scr[...] + i_g * g_g
        h_new = o_g * jnp.tanh(c_new)

        c_scr[...] = c_new
        z_scr[:, V_pad:] = h_new.astype(z_scr.dtype)
        return carry

    jax.lax.fori_loop(0, T, step, 0, unroll=True)

    # hidden2tag on the last hidden state; lane-dense (B_pad, C_pad) store.
    h_T = z_scr[:, V_pad:]
    o_ref[...] = (jnp.dot(h_T, wout_ref[...],
                          preferred_element_type=jnp.float32)
                  + bout_ref[...]).astype(o_ref.dtype)


@jax.jit
def language_module_forward(token_ids, emb_weight, w_ih, w_hh, b_ih, b_hh,
                            w_out, b_out):
    """token_ids: (B, T) int32.  Returns (B, target_size) float32."""
    B, T = token_ids.shape
    VOCAB, E = emb_weight.shape
    H = w_hh.shape[1]
    C = w_out.shape[0]

    B_pad = _round_up(max(B, 16), 16)    # full packed bf16 (16,128) sublane tiles
    V_pad = _round_up(VOCAB, 128)
    H_pad = _round_up(H, 128)
    C_pad = _round_up(C, 128)
    mxu_dtype = jnp.bfloat16
    f32 = jnp.float32

    # Fold the embedding gather into the input->gate weights:
    #   x_t @ W_ih^T == onehot(tok_t) @ (Emb @ W_ih^T)
    w_emb_ih = emb_weight.astype(f32) @ w_ih.T.astype(f32)      # (VOCAB, 4H)
    w_hh_t = w_hh.T.astype(f32)                                 # (H, 4H)
    b_sum = (b_ih + b_hh).astype(f32)                           # (4H,)

    # Stack + pad so each gate lands in its own 128-lane block.
    # Padded gate lanes (zero weights/bias) give i=f=o=0.5, g=0 -> padded h/c stay 0.
    w_z = jnp.zeros((V_pad + H_pad, 4 * H_pad), f32)
    bias = jnp.zeros((1, 4 * H_pad), f32)
    for g in range(4):
        w_z = w_z.at[:VOCAB, g * H_pad:g * H_pad + H].set(
            w_emb_ih[:, g * H:(g + 1) * H])
        w_z = w_z.at[V_pad:V_pad + H, g * H_pad:g * H_pad + H].set(
            w_hh_t[:, g * H:(g + 1) * H])
        bias = bias.at[0, g * H_pad:g * H_pad + H].set(b_sum[g * H:(g + 1) * H])

    w_out_p = jnp.zeros((H_pad, C_pad), f32).at[:H, :C].set(w_out.T.astype(f32))
    b_out_p = jnp.zeros((1, C_pad), f32).at[0, :C].set(b_out.astype(f32))

    # Time-major, batch-padded token ids with a trailing singleton lane dim.
    tok = jnp.zeros((B_pad, T), jnp.int32).at[:B, :].set(token_ids.astype(jnp.int32))
    tok_tm = jnp.transpose(tok, (1, 0))[:, :, None]             # (T, B_pad, 1)

    out_padded = pl.pallas_call(
        lstm_tag_kernel,
        out_shape=jax.ShapeDtypeStruct((B_pad, C_pad), jnp.float32),
        grid_spec=pltpu.PrefetchScalarGridSpec(
            num_scalar_prefetch=0,
            grid=(1,),                              # whole recurrence in one grid step
            in_specs=[
                pl.BlockSpec((T, B_pad, 1), lambda i: (0, 0, 0)),             # tokens
                pl.BlockSpec((V_pad + H_pad, 4 * H_pad), lambda i: (0, 0)),   # stacked W
                pl.BlockSpec((1, 4 * H_pad), lambda i: (0, 0)),               # bias
                pl.BlockSpec((H_pad, C_pad), lambda i: (0, 0)),               # W_out^T
                pl.BlockSpec((1, C_pad), lambda i: (0, 0)),                   # b_out
            ],
            out_specs=pl.BlockSpec((B_pad, C_pad), lambda i: (0, 0)),
            scratch_shapes=[
                pltpu.VMEM((B_pad, V_pad + H_pad), mxu_dtype),    # [onehot | h] (bf16)
                pltpu.VMEM((B_pad, H_pad), jnp.float32),          # cell state (f32)
            ]),
        compiler_params=pltpu.CompilerParams(
            dimension_semantics=("arbitrary",)),    # serial recurrence
    )(tok_tm, w_z.astype(mxu_dtype), bias, w_out_p.astype(mxu_dtype), b_out_p)

    return out_padded[:B, :C]


def reference_forward(token_ids, emb_weight, w_ih, w_hh, b_ih, b_hh, w_out, b_out):
    """Pure-JAX f32 reference matching torch.nn.LSTM(batch_first=True) semantics."""
    x = jnp.take(emb_weight, token_ids, axis=0)   # (B, T, E)
    B, T, E = x.shape
    H = w_hh.shape[1]

    def step(carry, x_t):
        h, c = carry
        gates = x_t @ w_ih.T + b_ih + h @ w_hh.T + b_hh
        i = jax.nn.sigmoid(gates[:, 0 * H:1 * H])
        f = jax.nn.sigmoid(gates[:, 1 * H:2 * H])
        g = jnp.tanh(gates[:, 2 * H:3 * H])
        o = jax.nn.sigmoid(gates[:, 3 * H:4 * H])
        c = f * c + i * g
        h = o * jnp.tanh(c)
        return (h, c), h

    h0 = jnp.zeros((B, H), jnp.float32)
    c0 = jnp.zeros((B, H), jnp.float32)
    (h_T, _), _ = jax.lax.scan(step, (h0, c0), jnp.transpose(x, (1, 0, 2)))
    return h_T @ w_out.T + b_out


if __name__ == "__main__":
    # Small shapes implied by the module: vocab x E embedding, hidden_dim H, target_size C.
    VOCAB, E, H, C = 16, 32, 32, 8
    B, T = 2, 8

    key = jax.random.PRNGKey(0)
    ks = jax.random.split(key, 8)

    emb_weight = jax.random.normal(ks[0], (VOCAB, E), jnp.float32) * 0.5   # weights_matrix
    w_ih = jax.random.normal(ks[1], (4 * H, E), jnp.float32) * 0.1
    w_hh = jax.random.normal(ks[2], (4 * H, H), jnp.float32) * 0.1
    b_ih = jax.random.normal(ks[3], (4 * H,), jnp.float32) * 0.1
    b_hh = jax.random.normal(ks[4], (4 * H,), jnp.float32) * 0.1
    w_out = jax.random.normal(ks[5], (C, H), jnp.float32) * 0.1
    b_out = jax.random.normal(ks[6], (C,), jnp.float32) * 0.1
    token_ids = jax.random.randint(ks[7], (B, T), 0, VOCAB, jnp.int32)

    out = language_module_forward(token_ids, emb_weight, w_ih, w_hh, b_ih, b_hh,
                                  w_out, b_out)
    out = jax.block_until_ready(out)

    ref = reference_forward(token_ids, emb_weight, w_ih, w_hh, b_ih, b_hh,
                            w_out, b_out)
    # bf16 MXU operands (f32 accumulation) vs. pure-f32 reference -> relaxed tolerance.
    np.testing.assert_allclose(np.asarray(out), np.asarray(ref),
                               rtol=2e-2, atol=2e-2)

    print("KERNEL_OK")
</pallas_src>

<mosaic_0001>
module attributes {stable_mosaic.version = 11 : i64} {
  func.func @lstm_tag_kernel(%arg0: i32, %arg1: memref<8x16x1xi32, #tpu.memory_space<vmem>>, %arg2: memref<256x512xbf16, #tpu.memory_space<vmem>>, %arg3: memref<1x512xf32, #tpu.memory_space<vmem>>, %arg4: memref<128x128xbf16, #tpu.memory_space<vmem>>, %arg5: memref<1x128xf32, #tpu.memory_space<vmem>>, %arg6: memref<16x128xf32, #tpu.memory_space<vmem>>, %arg7: memref<16x256xbf16, #tpu.memory_space<vmem>>, %arg8: memref<16x128xf32, #tpu.memory_space<vmem>>) attributes {dimension_semantics = [#tpu.dimension_semantics<arbitrary>], iteration_bounds = array<i64: 1>, scalar_prefetch = 0 : i64, scratch_operands = 2 : i64, tpu.core_type = #tpu.core_type<tc>, window_params = [{pipeline_mode = #tpu.pipeline_mode<synchronous>, transform_indices = @transform_0, window_bounds = array<i64: 8, 16, 1>}, {pipeline_mode = #tpu.pipeline_mode<synchronous>, transform_indices = @transform_1, window_bounds = array<i64: 256, 512>}, {pipeline_mode = #tpu.pipeline_mode<synchronous>, transform_indices = @transform_2, window_bounds = array<i64: 1, 512>}, {pipeline_mode = #tpu.pipeline_mode<synchronous>, transform_indices = @transform_3, window_bounds = array<i64: 128, 128>}, {pipeline_mode = #tpu.pipeline_mode<synchronous>, transform_indices = @transform_4, window_bounds = array<i64: 1, 128>}, {pipeline_mode = #tpu.pipeline_mode<synchronous>, transform_indices = @transform_5, window_bounds = array<i64: 16, 128>}]} {
    %cst = arith.constant 0.000000e+00 : bf16
    %0 = vector.broadcast %cst : bf16 to vector<16x256xbf16>
    %c0 = arith.constant 0 : index
    %c0_0 = arith.constant 0 : index
    %1 = vector.load %arg7[%c0, %c0_0] : memref<16x256xbf16, #tpu.memory_space<vmem>>, vector<16x256xbf16>
    tpu.vector_store %arg7[%c0, %c0_0], %0 {strides = array<i32>} : memref<16x256xbf16, #tpu.memory_space<vmem>>, vector<16x256xbf16>,
    %cst_1 = arith.constant 0.000000e+00 : f32
    %2 = vector.broadcast %cst_1 : f32 to vector<16x128xf32>
    %c0_2 = arith.constant 0 : index
    %c0_3 = arith.constant 0 : index
    %3 = vector.load %arg8[%c0_2, %c0_3] : memref<16x128xf32, #tpu.memory_space<vmem>>, vector<16x128xf32>
    tpu.vector_store %arg8[%c0_2, %c0_3], %2 {strides = array<i32>} : memref<16x128xf32, #tpu.memory_space<vmem>>, vector<16x128xf32>,
    %4 = tpu.iota {dimensions = array<i32: 1>} : vector<16x128xi32>
    %c0_4 = arith.constant 0 : index
    %c0_5 = arith.constant 0 : index
    %5 = vector.load %arg3[%c0_4, %c0_5] : memref<1x512xf32, #tpu.memory_space<vmem>>, vector<1x512xf32>
    %c0_i32 = arith.constant 0 : i32
    %6 = arith.index_cast %c0_i32 : i32 to index
    %c0_6 = arith.constant 0 : index
    %c0_7 = arith.constant 0 : index
    %7 = vector.load %arg1[%6, %c0_6, %c0_7] : memref<8x16x1xi32, #tpu.memory_space<vmem>>, vector<1x16x1xi32>
    %8 = vector.shape_cast %7 : vector<1x16x1xi32> to vector<16x1xi32>
    %9 = vector.broadcast %8 : vector<16x1xi32> to vector<16x128xi32>
    %10 = arith.cmpi eq, %4, %9 : vector<16x128xi32>
    %11 = arith.extui %10 : vector<16x128xi1> to vector<16x128xi32>
    %12 = arith.sitofp %11 : vector<16x128xi32> to vector<16x128xf32>
    %13 = arith.truncf %12 : vector<16x128xf32> to vector<16x128xbf16>
    %c0_8 = arith.constant 0 : index
    %c0_9 = arith.constant 0 : index
    %14 = vector.load %arg7[%c0_8, %c0_9] : memref<16x256xbf16, #tpu.memory_space<vmem>>, vector<16x128xbf16>
    tpu.vector_store %arg7[%c0_8, %c0_9], %13 {strides = array<i32>} : memref<16x256xbf16, #tpu.memory_space<vmem>>, vector<16x128xbf16>,
    %c0_10 = arith.constant 0 : index
    %c0_11 = arith.constant 0 : index
    %15 = vector.load %arg7[%c0_10, %c0_11] : memref<16x256xbf16, #tpu.memory_space<vmem>>, vector<16x256xbf16>
    %c0_12 = arith.constant 0 : index
    %c0_13 = arith.constant 0 : index
    %16 = vector.load %arg2[%c0_12, %c0_13] : memref<256x512xbf16, #tpu.memory_space<vmem>>, vector<256x512xbf16>
    %cst_14 = arith.constant dense<0.000000e+00> : vector<16x512xf32>
    %17 = tpu.matmul %15, %16, %cst_14 {dimension_numbers = #tpu.dot_dimension_numbers<[1], [0], [0], [1], [0, 0, 1, 1], [], []>} : vector<16x256xbf16>, vector<256x512xbf16>, vector<16x512xf32> -> vector<16x512xf32>
    %18 = vector.broadcast %5 : vector<1x512xf32> to vector<16x512xf32>
    %19 = arith.addf %17, %18 : vector<16x512xf32>
    %20 = vector.extract_strided_slice %19 {offsets = [0, 0], sizes = [16, 128], strides = [1, 1]} : vector<16x512xf32> to vector<16x128xf32>
    %21 = arith.negf %20 : vector<16x128xf32>
    %22 = math.exp %21 : vector<16x128xf32>
    %cst_15 = arith.constant 1.000000e+00 : f32
    %23 = vector.broadcast %cst_15 : f32 to vector<16x128xf32>
    %24 = arith.addf %23, %22 : vector<16x128xf32>
    %25 = arith.divf %23, %24 : vector<16x128xf32>
    %26 = vector.extract_strided_slice %19 {offsets = [0, 128], sizes = [16, 128], strides = [1, 1]} : vector<16x512xf32> to vector<16x128xf32>
    %27 = arith.negf %26 : vector<16x128xf32>
    %28 = math.exp %27 : vector<16x128xf32>
    %cst_16 = arith.constant 1.000000e+00 : f32
    %29 = vector.broadcast %cst_16 : f32 to vector<16x128xf32>
    %30 = arith.addf %29, %28 : vector<16x128xf32>
    %31 = arith.divf %29, %30 : vector<16x128xf32>
    %32 = vector.extract_strided_slice %19 {offsets = [0, 256], sizes = [16, 128], strides = [1, 1]} : vector<16x512xf32> to vector<16x128xf32>
    %33 = math.tanh %32 : vector<16x128xf32>
    %34 = vector.extract_strided_slice %19 {offsets = [0, 384], sizes = [16, 128], strides = [1, 1]} : vector<16x512xf32> to vector<16x128xf32>
    %35 = arith.negf %34 : vector<16x128xf32>
    %36 = math.exp %35 : vector<16x128xf32>
    %cst_17 = arith.constant 1.000000e+00 : f32
    %37 = vector.broadcast %cst_17 : f32 to vector<16x128xf32>
    %38 = arith.addf %37, %36 : vector<16x128xf32>
    %39 = arith.divf %37, %38 : vector<16x128xf32>
    %c0_18 = arith.constant 0 : index
    %c0_19 = arith.constant 0 : index
    %40 = vector.load %arg8[%c0_18, %c0_19] : memref<16x128xf32, #tpu.memory_space<vmem>>, vector<16x128xf32>
    %41 = arith.mulf %31, %40 : vector<16x128xf32>
    %42 = arith.mulf %25, %33 : vector<16x128xf32>
    %43 = arith.addf %41, %42 : vector<16x128xf32>
    %44 = math.tanh %43 : vector<16x128xf32>
    %45 = arith.mulf %39, %44 : vector<16x128xf32>
    %c0_20 = arith.constant 0 : index
    %c0_21 = arith.constant 0 : index
    %46 = vector.load %arg8[%c0_20, %c0_21] : memref<16x128xf32, #tpu.memory_space<vmem>>, vector<16x128xf32>
    tpu.vector_store %arg8[%c0_20, %c0_21], %43 {strides = array<i32>} : memref<16x128xf32, #tpu.memory_space<vmem>>, vector<16x128xf32>,
    %47 = arith.truncf %45 : vector<16x128xf32> to vector<16x128xbf16>
    %c0_22 = arith.constant 0 : index
    %c128 = arith.constant 128 : index
    %48 = vector.load %arg7[%c0_22, %c128] : memref<16x256xbf16, #tpu.memory_space<vmem>>, vector<16x128xbf16>
    tpu.vector_store %arg7[%c0_22, %c128], %47 {strides = array<i32>} : memref<16x256xbf16, #tpu.memory_space<vmem>>, vector<16x128xbf16>,
    %c1_i32 = arith.constant 1 : i32
    %49 = arith.index_cast %c1_i32 : i32 to index
    %c0_23 = arith.constant 0 : index
    %c0_24 = arith.constant 0 : index
    %50 = vector.load %arg1[%49, %c0_23, %c0_24] : memref<8x16x1xi32, #tpu.memory_space<vmem>>, vector<1x16x1xi32>
    %51 = vector.shape_cast %50 : vector<1x16x1xi32> to vector<16x1xi32>
    %52 = vector.broadcast %51 : vector<16x1xi32> to vector<16x128xi32>
    %53 = arith.cmpi eq, %4, %52 : vector<16x128xi32>
    %54 = arith.extui %53 : vector<16x128xi1> to vector<16x128xi32>
    %55 = arith.sitofp %54 : vector<16x128xi32> to vector<16x128xf32>
    %56 = arith.truncf %55 : vector<16x128xf32> to vector<16x128xbf16>
    %c0_25 = arith.constant 0 : index
    %c0_26 = arith.constant 0 : index
    %57 = vector.load %arg7[%c0_25, %c0_26] : memref<16x256xbf16, #tpu.memory_space<vmem>>, vector<16x128xbf16>
    tpu.vector_store %arg7[%c0_25, %c0_26], %56 {strides = array<i32>} : memref<16x256xbf16, #tpu.memory_space<vmem>>, vector<16x128xbf16>,
    %c0_27 = arith.constant 0 : index
    %c0_28 = arith.constant 0 : index
    %58 = vector.load %arg7[%c0_27, %c0_28] : memref<16x256xbf16, #tpu.memory_space<vmem>>, vector<16x256xbf16>
    %c0_29 = arith.constant 0 : index
    %c0_30 = arith.constant 0 : index
    %59 = vector.load %arg2[%c0_29, %c0_30] : memref<256x512xbf16, #tpu.memory_space<vmem>>, vector<256x512xbf16>
    %cst_31 = arith.constant dense<0.000000e+00> : vector<16x512xf32>
    %60 = tpu.matmul %58, %59, %cst_31 {dimension_numbers = #tpu.dot_dimension_numbers<[1], [0], [0], [1], [0, 0, 1, 1], [], []>} : vector<16x256xbf16>, vector<256x512xbf16>, vector<16x512xf32> -> vector<16x512xf32>
    %61 = vector.broadcast %5 : vector<1x512xf32> to vector<16x512xf32>
    %62 = arith.addf %60, %61 : vector<16x512xf32>
    %63 = vector.extract_strided_slice %62 {offsets = [0, 0], sizes = [16, 128], strides = [1, 1]} : vector<16x512xf32> to vector<16x128xf32>
    %64 = arith.negf %63 : vector<16x128xf32>
    %65 = math.exp %64 : vector<16x128xf32>
    %cst_32 = arith.constant 1.000000e+00 : f32
    %66 = vector.broadcast %cst_32 : f32 to vector<16x128xf32>
    %67 = arith.addf %66, %65 : vector<16x128xf32>
    %68 = arith.divf %66, %67 : vector<16x128xf32>
    %69 = vector.extract_strided_slice %62 {offsets = [0, 128], sizes = [16, 128], strides = [1, 1]} : vector<16x512xf32> to vector<16x128xf32>
    %70 = arith.negf %69 : vector<16x128xf32>
    %71 = math.exp %70 : vector<16x128xf32>
    %cst_33 = arith.constant 1.000000e+00 : f32
    %72 = vector.broadcast %cst_33 : f32 to vector<16x128xf32>
    %73 = arith.addf %72, %71 : vector<16x128xf32>
    %74 = arith.divf %72, %73 : vector<16x128xf32>
    %75 = vector.extract_strided_slice %62 {offsets = [0, 256], sizes = [16, 128], strides = [1, 1]} : vector<16x512xf32> to vector<16x128xf32>
    %76 = math.tanh %75 : vector<16x128xf32>
    %77 = vector.extract_strided_slice %62 {offsets = [0, 384], sizes = [16, 128], strides = [1, 1]} : vector<16x512xf32> to vector<16x128xf32>
    %78 = arith.negf %77 : vector<16x128xf32>
    %79 = math.exp %78 : vector<16x128xf32>
    %cst_34 = arith.constant 1.000000e+00 : f32
    %80 = vector.broadcast %cst_34 : f32 to vector<16x128xf32>
    %81 = arith.addf %80, %79 : vector<16x128xf32>
    %82 = arith.divf %80, %81 : vector<16x128xf32>
    %c0_35 = arith.constant 0 : index
    %c0_36 = arith.constant 0 : index
    %83 = vector.load %arg8[%c0_35, %c0_36] : memref<16x128xf32, #tpu.memory_space<vmem>>, vector<16x128xf32>
    %84 = arith.mulf %74, %83 : vector<16x128xf32>
    %85 = arith.mulf %68, %76 : vector<16x128xf32>
    %86 = arith.addf %84, %85 : vector<16x128xf32>
    %87 = math.tanh %86 : vector<16x128xf32>
    %88 = arith.mulf %82, %87 : vector<16x128xf32>
    %c0_37 = arith.constant 0 : index
    %c0_38 = arith.constant 0 : index
    %89 = vector.load %arg8[%c0_37, %c0_38] : memref<16x128xf32, #tpu.memory_space<vmem>>, vector<16x128xf32>
    tpu.vector_store %arg8[%c0_37, %c0_38], %86 {strides = array<i32>} : memref<16x128xf32, #tpu.memory_space<vmem>>, vector<16x128xf32>,
    %90 = arith.truncf %88 : vector<16x128xf32> to vector<16x128xbf16>
    %c0_39 = arith.constant 0 : index
    %c128_40 = arith.constant 128 : index
    %91 = vector.load %arg7[%c0_39, %c128_40] : memref<16x256xbf16, #tpu.memory_space<vmem>>, vector<16x128xbf16>
    tpu.vector_store %arg7[%c0_39, %c128_40], %90 {strides = array<i32>} : memref<16x256xbf16, #tpu.memory_space<vmem>>, vector<16x128xbf16>,
    %c2_i32 = arith.constant 2 : i32
    %92 = arith.index_cast %c2_i32 : i32 to index
    %c0_41 = arith.constant 0 : index
    %c0_42 = arith.constant 0 : index
    %93 = vector.load %arg1[%92, %c0_41, %c0_42] : memref<8x16x1xi32, #tpu.memory_space<vmem>>, vector<1x16x1xi32>
    %94 = vector.shape_cast %93 : vector<1x16x1xi32> to vector<16x1xi32>
    %95 = vector.broadcast %94 : vector<16x1xi32> to vector<16x128xi32>
    %96 = arith.cmpi eq, %4, %95 : vector<16x128xi32>
    %97 = arith.extui %96 : vector<16x128xi1> to vector<16x128xi32>
    %98 = arith.sitofp %97 : vector<16x128xi32> to vector<16x128xf32>
    %99 = arith.truncf %98 : vector<16x128xf32> to vector<16x128xbf16>
    %c0_43 = arith.constant 0 : index
    %c0_44 = arith.constant 0 : index
    %100 = vector.load %arg7[%c0_43, %c0_44] : memref<16x256xbf16, #tpu.memory_space<vmem>>, vector<16x128xbf16>
    tpu.vector_store %arg7[%c0_43, %c0_44], %99 {strides = array<i32>} : memref<16x256xbf16, #tpu.memory_space<vmem>>, vector<16x128xbf16>,
    %c0_45 = arith.constant 0 : index
    %c0_46 = arith.constant 0 : index
    %101 = vector.load %arg7[%c0_45, %c0_46] : memref<16x256xbf16, #tpu.memory_space<vmem>>, vector<16x256xbf16>
    %c0_47 = arith.constant 0 : index
    %c0_48 = arith.constant 0 : index
    %102 = vector.load %arg2[%c0_47, %c0_48] : memref<256x512xbf16, #tpu.memory_space<vmem>>, vector<256x512xbf16>
    %cst_49 = arith.constant dense<0.000000e+00> : vector<16x512xf32>
    %103 = tpu.matmul %101, %102, %cst_49 {dimension_numbers = #tpu.dot_dimension_numbers<[1], [0], [0], [1], [0, 0, 1, 1], [], []>} : vector<16x256xbf16>, vector<256x512xbf16>, vector<16x512xf32> -> vector<16x512xf32>
    %104 = vector.broadcast %5 : vector<1x512xf32> to vector<16x512xf32>
    %105 = arith.addf %103, %104 : vector<16x512xf32>
    %106 = vector.extract_strided_slice %105 {offsets = [0, 0], sizes = [16, 128], strides = [1, 1]} : vector<16x512xf32> to vector<16x128xf32>
    %107 = arith.negf %106 : vector<16x128xf32>
    %108 = math.exp %107 : vector<16x128xf32>
    %cst_50 = arith.constant 1.000000e+00 : f32
    %109 = vector.broadcast %cst_50 : f32 to vector<16x128xf32>
    %110 = arith.addf %109, %108 : vector<16x128xf32>
    %111 = arith.divf %109, %110 : vector<16x128xf32>
    %112 = vector.extract_strided_slice %105 {offsets = [0, 128], sizes = [16, 128], strides = [1, 1]} : vector<16x512xf32> to vector<16x128xf32>
    %113 = arith.negf %112 : vector<16x128xf32>
    %114 = math.exp %113 : vector<16x128xf32>
    %cst_51 = arith.constant 1.000000e+00 : f32
    %115 = vector.broadcast %cst_51 : f32 to vector<16x128xf32>
    %116 = arith.addf %115, %114 : vector<16x128xf32>
    %117 = arith.divf %115, %116 : vector<16x128xf32>
    %118 = vector.extract_strided_slice %105 {offsets = [0, 256], sizes = [16, 128], strides = [1, 1]} : vector<16x512xf32> to vector<16x128xf32>
    %119 = math.tanh %118 : vector<16x128xf32>
    %120 = vector.extract_strided_slice %105 {offsets = [0, 384], sizes = [16, 128], strides = [1, 1]} : vector<16x512xf32> to vector<16x128xf32>
    %121 = arith.negf %120 : vector<16x128xf32>
    %122 = math.exp %121 : vector<16x128xf32>
    %cst_52 = arith.constant 1.000000e+00 : f32
    %123 = vector.broadcast %cst_52 : f32 to vector<16x128xf32>
    %124 = arith.addf %123, %122 : vector<16x128xf32>
    %125 = arith.divf %123, %124 : vector<16x128xf32>
    %c0_53 = arith.constant 0 : index
    %c0_54 = arith.constant 0 : index
    %126 = vector.load %arg8[%c0_53, %c0_54] : memref<16x128xf32, #tpu.memory_space<vmem>>, vector<16x128xf32>
    %127 = arith.mulf %117, %126 : vector<16x128xf32>
    %128 = arith.mulf %111, %119 : vector<16x128xf32>
    %129 = arith.addf %127, %128 : vector<16x128xf32>
    %130 = math.tanh %129 : vector<16x128xf32>
    %131 = arith.mulf %125, %130 : vector<16x128xf32>
    %c0_55 = arith.constant 0 : index
    %c0_56 = arith.constant 0 : index
    %132 = vector.load %arg8[%c0_55, %c0_56] : memref<16x128xf32, #tpu.memory_space<vmem>>, vector<16x128xf32>
    tpu.vector_store %arg8[%c0_55, %c0_56], %129 {strides = array<i32>} : memref<16x128xf32, #tpu.memory_space<vmem>>, vector<16x128xf32>,
    %133 = arith.truncf %131 : vector<16x128xf32> to vector<16x128xbf16>
    %c0_57 = arith.constant 0 : index
    %c128_58 = arith.constant 128 : index
    %134 = vector.load %arg7[%c0_57, %c128_58] : memref<16x256xbf16, #tpu.memory_space<vmem>>, vector<16x128xbf16>
    tpu.vector_store %arg7[%c0_57, %c128_58], %133 {strides = array<i32>} : memref<16x256xbf16, #tpu.memory_space<vmem>>, vector<16x128xbf16>,
    %c3_i32 = arith.constant 3 : i32
    %135 = arith.index_cast %c3_i32 : i32 to index
    %c0_59 = arith.constant 0 : index
    %c0_60 = arith.constant 0 : index
    %136 = vector.load %arg1[%135, %c0_59, %c0_60] : memref<8x16x1xi32, #tpu.memory_space<vmem>>, vector<1x16x1xi32>
    %137 = vector.shape_cast %136 : vector<1x16x1xi32> to vector<16x1xi32>
    %138 = vector.broadcast %137 : vector<16x1xi32> to vector<16x128xi32>
    %139 = arith.cmpi eq, %4, %138 : vector<16x128xi32>
    %140 = arith.extui %139 : vector<16x128xi1> to vector<16x128xi32>
    %141 = arith.sitofp %140 : vector<16x128xi32> to vector<16x128xf32>
    %142 = arith.truncf %141 : vector<16x128xf32> to vector<16x128xbf16>
    %c0_61 = arith.constant 0 : index
    %c0_62 = arith.constant 0 : index
    %143 = vector.load %arg7[%c0_61, %c0_62] : memref<16x256xbf16, #tpu.memory_space<vmem>>, vector<16x128xbf16>
    tpu.vector_store %arg7[%c0_61, %c0_62], %142 {strides = array<i32>} : memref<16x256xbf16, #tpu.memory_space<vmem>>, vector<16x128xbf16>,
    %c0_63 = arith.constant 0 : index
    %c0_64 = arith.constant 0 : index
    %144 = vector.load %arg7[%c0_63, %c0_64] : memref<16x256xbf16, #tpu.memory_space<vmem>>, vector<16x256xbf16>
    %c0_65 = arith.constant 0 : index
    %c0_66 = arith.constant 0 : index
    %145 = vector.load %arg2[%c0_65, %c0_66] : memref<256x512xbf16, #tpu.memory_space<vmem>>, vector<256x512xbf16>
    %cst_67 = arith.constant dense<0.000000e+00> : vector<16x512xf32>
    %146 = tpu.matmul %144, %145, %cst_67 {dimension_numbers = #tpu.dot_dimension_numbers<[1], [0], [0], [1], [0, 0, 1, 1], [], []>} : vector<16x256xbf16>, vector<256x512xbf16>, vector<16x512xf32> -> vector<16x512xf32>
    %147 = vector.broadcast %5 : vector<1x512xf32> to vector<16x512xf32>
    %148 = arith.addf %146, %147 : vector<16x512xf32>
    %149 = vector.extract_strided_slice %148 {offsets = [0, 0], sizes = [16, 128], strides = [1, 1]} : vector<16x512xf32> to vector<16x128xf32>
    %150 = arith.negf %149 : vector<16x128xf32>
    %151 = math.exp %150 : vector<16x128xf32>
    %cst_68 = arith.constant 1.000000e+00 : f32
    %152 = vector.broadcast %cst_68 : f32 to vector<16x128xf32>
    %153 = arith.addf %152, %151 : vector<16x128xf32>
    %154 = arith.divf %152, %153 : vector<16x128xf32>
    %155 = vector.extract_strided_slice %148 {offsets = [0, 128], sizes = [16, 128], strides = [1, 1]} : vector<16x512xf32> to vector<16x128xf32>
    %156 = arith.negf %155 : vector<16x128xf32>
    %157 = math.exp %156 : vector<16x128xf32>
    %cst_69 = arith.constant 1.000000e+00 : f32
    %158 = vector.broadcast %cst_69 : f32 to vector<16x128xf32>
    %159 = arith.addf %158, %157 : vector<16x128xf32>
    %160 = arith.divf %158, %159 : vector<16x128xf32>
    %161 = vector.extract_strided_slice %148 {offsets = [0, 256], sizes = [16, 128], strides = [1, 1]} : vector<16x512xf32> to vector<16x128xf32>
    %162 = math.tanh %161 : vector<16x128xf32>
    %163 = vector.extract_strided_slice %148 {offsets = [0, 384], sizes = [16, 128], strides = [1, 1]} : vector<16x512xf32> to vector<16x128xf32>
    %164 = arith.negf %163 : vector<16x128xf32>
    %165 = math.exp %164 : vector<16x128xf32>
    %cst_70 = arith.constant 1.000000e+00 : f32
    %166 = vector.broadcast %cst_70 : f32 to vector<16x128xf32>
    %167 = arith.addf %166, %165 : vector<16x128xf32>
    %168 = arith.divf %166, %167 : vector<16x128xf32>
    %c0_71 = arith.constant 0 : index
    %c0_72 = arith.constant 0 : index
    %169 = vector.load %arg8[%c0_71, %c0_72] : memref<16x128xf32, #tpu.memory_space<vmem>>, vector<16x128xf32>
    %170 = arith.mulf %160, %169 : vector<16x128xf32>
    %171 = arith.mulf %154, %162 : vector<16x128xf32>
    %172 = arith.addf %170, %171 : vector<16x128xf32>
    %173 = math.tanh %172 : vector<16x128xf32>
    %174 = arith.mulf %168, %173 : vector<16x128xf32>
    %c0_73 = arith.constant 0 : index
    %c0_74 = arith.constant 0 : index
    %175 = vector.load %arg8[%c0_73, %c0_74] : memref<16x128xf32, #tpu.memory_space<vmem>>, vector<16x128xf32>
    tpu.vector_store %arg8[%c0_73, %c0_74], %172 {strides = array<i32>} : memref<16x128xf32, #tpu.memory_space<vmem>>, vector<16x128xf32>,
    %176 = arith.truncf %174 : vector<16x128xf32> to vector<16x128xbf16>
    %c0_75 = arith.constant 0 : index
    %c128_76 = arith.constant 128 : index
    %177 = vector.load %arg7[%c0_75, %c128_76] : memref<16x256xbf16, #tpu.memory_space<vmem>>, vector<16x128xbf16>
    tpu.vector_store %arg7[%c0_75, %c128_76], %176 {strides = array<i32>} : memref<16x256xbf16, #tpu.memory_space<vmem>>, vector<16x128xbf16>,
    %c4_i32 = arith.constant 4 : i32
    %178 = arith.index_cast %c4_i32 : i32 to index
    %c0_77 = arith.constant 0 : index
    %c0_78 = arith.constant 0 : index
    %179 = vector.load %arg1[%178, %c0_77, %c0_78] : memref<8x16x1xi32, #tpu.memory_space<vmem>>, vector<1x16x1xi32>
    %180 = vector.shape_cast %179 : vector<1x16x1xi32> to vector<16x1xi32>
    %181 = vector.broadcast %180 : vector<16x1xi32> to vector<16x128xi32>
    %182 = arith.cmpi eq, %4, %181 : vector<16x128xi32>
    %183 = arith.extui %182 : vector<16x128xi1> to vector<16x128xi32>
    %184 = arith.sitofp %183 : vector<16x128xi32> to vector<16x128xf32>
    %185 = arith.truncf %184 : vector<16x128xf32> to vector<16x128xbf16>
    %c0_79 = arith.constant 0 : index
    %c0_80 = arith.constant 0 : index
    %186 = vector.load %arg7[%c0_79, %c0_80] : memref<16x256xbf16, #tpu.memory_space<vmem>>, vector<16x128xbf16>
    tpu.vector_store %arg7[%c0_79, %c0_80], %185 {strides = array<i32>} : memref<16x256xbf16, #tpu.memory_space<vmem>>, vector<16x128xbf16>,
    %c0_81 = arith.constant 0 : index
    %c0_82 = arith.constant 0 : index
    %187 = vector.load %arg7[%c0_81, %c0_82] : memref<16x256xbf16, #tpu.memory_space<vmem>>, vector<16x256xbf16>
    %c0_83 = arith.constant 0 : index
    %c0_84 = arith.constant 0 : index
    %188 = vector.load %arg2[%c0_83, %c0_84] : memref<256x512xbf16, #tpu.memory_space<vmem>>, vector<256x512xbf16>
    %cst_85 = arith.constant dense<0.000000e+00> : vector<16x512xf32>
    %189 = tpu.matmul %187, %188, %cst_85 {dimension_numbers = #tpu.dot_dimension_numbers<[1], [0], [0], [1], [0, 0, 1, 1], [], []>} : vector<16x256xbf16>, vector<256x512xbf16>, vector<16x512xf32> -> vector<16x512xf32>
    %190 = vector.broadcast %5 : vector<1x512xf32> to vector<16x512xf32>
    %191 = arith.addf %189, %190 : vector<16x512xf32>
    %192 = vector.extract_strided_slice %191 {offsets = [0, 0], sizes = [16, 128], strides = [1, 1]} : vector<16x512xf32> to vector<16x128xf32>
    %193 = arith.negf %192 : vector<16x128xf32>
    %194 = math.exp %193 : vector<16x128xf32>
    %cst_86 = arith.constant 1.000000e+00 : f32
    %195 = vector.broadcast %cst_86 : f32 to vector<16x128xf32>
    %196 = arith.addf %195, %194 : vector<16x128xf32>
    %197 = arith.divf %195, %196 : vector<16x128xf32>
    %198 = vector.extract_strided_slice %191 {offsets = [0, 128], sizes = [16, 128], strides = [1, 1]} : vector<16x512xf32> to vector<16x128xf32>
    %199 = arith.negf %198 : vector<16x128xf32>
    %200 = math.exp %199 : vector<16x128xf32>
    %cst_87 = arith.constant 1.000000e+00 : f32
    %201 = vector.broadcast %cst_87 : f32 to vector<16x128xf32>
    %202 = arith.addf %201, %200 : vector<16x128xf32>
    %203 = arith.divf %201, %202 : vector<16x128xf32>
    %204 = vector.extract_strided_slice %191 {offsets = [0, 256], sizes = [16, 128], strides = [1, 1]} : vector<16x512xf32> to vector<16x128xf32>
    %205 = math.tanh %204 : vector<16x128xf32>
    %206 = vector.extract_strided_slice %191 {offsets = [0, 384], sizes = [16, 128], strides = [1, 1]} : vector<16x512xf32> to vector<16x128xf32>
    %207 = arith.negf %206 : vector<16x128xf32>
    %208 = math.exp %207 : vector<16x128xf32>
    %cst_88 = arith.constant 1.000000e+00 : f32
    %209 = vector.broadcast %cst_88 : f32 to vector<16x128xf32>
    %210 = arith.addf %209, %208 : vector<16x128xf32>
    %211 = arith.divf %209, %210 : vector<16x128xf32>
    %c0_89 = arith.constant 0 : index
    %c0_90 = arith.constant 0 : index
    %212 = vector.load %arg8[%c0_89, %c0_90] : memref<16x128xf32, #tpu.memory_space<vmem>>, vector<16x128xf32>
    %213 = arith.mulf %203, %212 : vector<16x128xf32>
    %214 = arith.mulf %197, %205 : vector<16x128xf32>
    %215 = arith.addf %213, %214 : vector<16x128xf32>
    %216 = math.tanh %215 : vector<16x128xf32>
    %217 = arith.mulf %211, %216 : vector<16x128xf32>
    %c0_91 = arith.constant 0 : index
    %c0_92 = arith.constant 0 : index
    %218 = vector.load %arg8[%c0_91, %c0_92] : memref<16x128xf32, #tpu.memory_space<vmem>>, vector<16x128xf32>
    tpu.vector_store %arg8[%c0_91, %c0_92], %215 {strides = array<i32>} : memref<16x128xf32, #tpu.memory_space<vmem>>, vector<16x128xf32>,
    %219 = arith.truncf %217 : vector<16x128xf32> to vector<16x128xbf16>
    %c0_93 = arith.constant 0 : index
    %c128_94 = arith.constant 128 : index
    %220 = vector.load %arg7[%c0_93, %c128_94] : memref<16x256xbf16, #tpu.memory_space<vmem>>, vector<16x128xbf16>
    tpu.vector_store %arg7[%c0_93, %c128_94], %219 {strides = array<i32>} : memref<16x256xbf16, #tpu.memory_space<vmem>>, vector<16x128xbf16>,
    %c5_i32 = arith.constant 5 : i32
    %221 = arith.index_cast %c5_i32 : i32 to index
    %c0_95 = arith.constant 0 : index
    %c0_96 = arith.constant 0 : index
    %222 = vector.load %arg1[%221, %c0_95, %c0_96] : memref<8x16x1xi32, #tpu.memory_space<vmem>>, vector<1x16x1xi32>
    %223 = vector.shape_cast %222 : vector<1x16x1xi32> to vector<16x1xi32>
    %224 = vector.broadcast %223 : vector<16x1xi32> to vector<16x128xi32>
    %225 = arith.cmpi eq, %4, %224 : vector<16x128xi32>
    %226 = arith.extui %225 : vector<16x128xi1> to vector<16x128xi32>
    %227 = arith.sitofp %226 : vector<16x128xi32> to vector<16x128xf32>
    %228 = arith.truncf %227 : vector<16x128xf32> to vector<16x128xbf16>
    %c0_97 = arith.constant 0 : index
    %c0_98 = arith.constant 0 : index
    %229 = vector.load %arg7[%c0_97, %c0_98] : memref<16x256xbf16, #tpu.memory_space<vmem>>, vector<16x128xbf16>
    tpu.vector_store %arg7[%c0_97, %c0_98], %228 {strides = array<i32>} : memref<16x256xbf16, #tpu.memory_space<vmem>>, vector<16x128xbf16>,
    %c0_99 = arith.constant 0 : index
    %c0_100 = arith.constant 0 : index
    %230 = vector.load %arg7[%c0_99, %c0_100] : memref<16x256xbf16, #tpu.memory_space<vmem>>, vector<16x256xbf16>
    %c0_101 = arith.constant 0 : index
    %c0_102 = arith.constant 0 : index
    %231 = vector.load %arg2[%c0_101, %c0_102] : memref<256x512xbf16, #tpu.memory_space<vmem>>, vector<256x512xbf16>
    %cst_103 = arith.constant dense<0.000000e+00> : vector<16x512xf32>
    %232 = tpu.matmul %230, %231, %cst_103 {dimension_numbers = #tpu.dot_dimension_numbers<[1], [0], [0], [1], [0, 0, 1, 1], [], []>} : vector<16x256xbf16>, vector<256x512xbf16>, vector<16x512xf32> -> vector<16x512xf32>
    %233 = vector.broadcast %5 : vector<1x512xf32> to vector<16x512xf32>
    %234 = arith.addf %232, %233 : vector<16x512xf32>
    %235 = vector.extract_strided_slice %234 {offsets = [0, 0], sizes = [16, 128], strides = [1, 1]} : vector<16x512xf32> to vector<16x128xf32>
    %236 = arith.negf %235 : vector<16x128xf32>
    %237 = math.exp %236 : vector<16x128xf32>
    %cst_104 = arith.constant 1.000000e+00 : f32
    %238 = vector.broadcast %cst_104 : f32 to vector<16x128xf32>
    %239 = arith.addf %238, %237 : vector<16x128xf32>
    %240 = arith.divf %238, %239 : vector<16x128xf32>
    %241 = vector.extract_strided_slice %234 {offsets = [0, 128], sizes = [16, 128], strides = [1, 1]} : vector<16x512xf32> to vector<16x128xf32>
    %242 = arith.negf %241 : vector<16x128xf32>
    %243 = math.exp %242 : vector<16x128xf32>
    %cst_105 = arith.constant 1.000000e+00 : f32
    %244 = vector.broadcast %cst_105 : f32 to vector<16x128xf32>
    %245 = arith.addf %244, %243 : vector<16x128xf32>
    %246 = arith.divf %244, %245 : vector<16x128xf32>
    %247 = vector.extract_strided_slice %234 {offsets = [0, 256], sizes = [16, 128], strides = [1, 1]} : vector<16x512xf32> to vector<16x128xf32>
    %248 = math.tanh %247 : vector<16x128xf32>
    %249 = vector.extract_strided_slice %234 {offsets = [0, 384], sizes = [16, 128], strides = [1, 1]} : vector<16x512xf32> to vector<16x128xf32>
    %250 = arith.negf %249 : vector<16x128xf32>
    %251 = math.exp %250 : vector<16x128xf32>
    %cst_106 = arith.constant 1.000000e+00 : f32
    %252 = vector.broadcast %cst_106 : f32 to vector<16x128xf32>
    %253 = arith.addf %252, %251 : vector<16x128xf32>
    %254 = arith.divf %252, %253 : vector<16x128xf32>
    %c0_107 = arith.constant 0 : index
    %c0_108 = arith.constant 0 : index
    %255 = vector.load %arg8[%c0_107, %c0_108] : memref<16x128xf32, #tpu.memory_space<vmem>>, vector<16x128xf32>
    %256 = arith.mulf %246, %255 : vector<16x128xf32>
    %257 = arith.mulf %240, %248 : vector<16x128xf32>
    %258 = arith.addf %256, %257 : vector<16x128xf32>
    %259 = math.tanh %258 : vector<16x128xf32>
    %260 = arith.mulf %254, %259 : vector<16x128xf32>
    %c0_109 = arith.constant 0 : index
    %c0_110 = arith.constant 0 : index
    %261 = vector.load %arg8[%c0_109, %c0_110] : memref<16x128xf32, #tpu.memory_space<vmem>>, vector<16x128xf32>
    tpu.vector_store %arg8[%c0_109, %c0_110], %258 {strides = array<i32>} : memref<16x128xf32, #tpu.memory_space<vmem>>, vector<16x128xf32>,
    %262 = arith.truncf %260 : vector<16x128xf32> to vector<16x128xbf16>
    %c0_111 = arith.constant 0 : index
    %c128_112 = arith.constant 128 : index
    %263 = vector.load %arg7[%c0_111, %c128_112] : memref<16x256xbf16, #tpu.memory_space<vmem>>, vector<16x128xbf16>
    tpu.vector_store %arg7[%c0_111, %c128_112], %262 {strides = array<i32>} : memref<16x256xbf16, #tpu.memory_space<vmem>>, vector<16x128xbf16>,
    %c6_i32 = arith.constant 6 : i32
    %264 = arith.index_cast %c6_i32 : i32 to index
    %c0_113 = arith.constant 0 : index
    %c0_114 = arith.constant 0 : index
    %265 = vector.load %arg1[%264, %c0_113, %c0_114] : memref<8x16x1xi32, #tpu.memory_space<vmem>>, vector<1x16x1xi32>
    %266 = vector.shape_cast %265 : vector<1x16x1xi32> to vector<16x1xi32>
    %267 = vector.broadcast %266 : vector<16x1xi32> to vector<16x128xi32>
    %268 = arith.cmpi eq, %4, %267 : vector<16x128xi32>
    %269 = arith.extui %268 : vector<16x128xi1> to vector<16x128xi32>
    %270 = arith.sitofp %269 : vector<16x128xi32> to vector<16x128xf32>
    %271 = arith.truncf %270 : vector<16x128xf32> to vector<16x128xbf16>
    %c0_115 = arith.constant 0 : index
    %c0_116 = arith.constant 0 : index
    %272 = vector.load %arg7[%c0_115, %c0_116] : memref<16x256xbf16, #tpu.memory_space<vmem>>, vector<16x128xbf16>
    tpu.vector_store %arg7[%c0_115, %c0_116], %271 {strides = array<i32>} : memref<16x256xbf16, #tpu.memory_space<vmem>>, vector<16x128xbf16>,
    %c0_117 = arith.constant 0 : index
    %c0_118 = arith.constant 0 : index
    %273 = vector.load %arg7[%c0_117, %c0_118] : memref<16x256xbf16, #tpu.memory_space<vmem>>, vector<16x256xbf16>
    %c0_119 = arith.constant 0 : index
    %c0_120 = arith.constant 0 : index
    %274 = vector.load %arg2[%c0_119, %c0_120] : memref<256x512xbf16, #tpu.memory_space<vmem>>, vector<256x512xbf16>
    %cst_121 = arith.constant dense<0.000000e+00> : vector<16x512xf32>
    %275 = tpu.matmul %273, %274, %cst_121 {dimension_numbers = #tpu.dot_dimension_numbers<[1], [0], [0], [1], [0, 0, 1, 1], [], []>} : vector<16x256xbf16>, vector<256x512xbf16>, vector<16x512xf32> -> vector<16x512xf32>
    %276 = vector.broadcast %5 : vector<1x512xf32> to vector<16x512xf32>
    %277 = arith.addf %275, %276 : vector<16x512xf32>
    %278 = vector.extract_strided_slice %277 {offsets = [0, 0], sizes = [16, 128], strides = [1, 1]} : vector<16x512xf32> to vector<16x128xf32>
    %279 = arith.negf %278 : vector<16x128xf32>
    %280 = math.exp %279 : vector<16x128xf32>
    %cst_122 = arith.constant 1.000000e+00 : f32
    %281 = vector.broadcast %cst_122 : f32 to vector<16x128xf32>
    %282 = arith.addf %281, %280 : vector<16x128xf32>
    %283 = arith.divf %281, %282 : vector<16x128xf32>
    %284 = vector.extract_strided_slice %277 {offsets = [0, 128], sizes = [16, 128], strides = [1, 1]} : vector<16x512xf32> to vector<16x128xf32>
    %285 = arith.negf %284 : vector<16x128xf32>
    %286 = math.exp %285 : vector<16x128xf32>
    %cst_123 = arith.constant 1.000000e+00 : f32
    %287 = vector.broadcast %cst_123 : f32 to vector<16x128xf32>
    %288 = arith.addf %287, %286 : vector<16x128xf32>
    %289 = arith.divf %287, %288 : vector<16x128xf32>
    %290 = vector.extract_strided_slice %277 {offsets = [0, 256], sizes = [16, 128], strides = [1, 1]} : vector<16x512xf32> to vector<16x128xf32>
    %291 = math.tanh %290 : vector<16x128xf32>
    %292 = vector.extract_strided_slice %277 {offsets = [0, 384], sizes = [16, 128], strides = [1, 1]} : vector<16x512xf32> to vector<16x128xf32>
    %293 = arith.negf %292 : vector<16x128xf32>
    %294 = math.exp %293 : vector<16x128xf32>
    %cst_124 = arith.constant 1.000000e+00 : f32
    %295 = vector.broadcast %cst_124 : f32 to vector<16x128xf32>
    %296 = arith.addf %295, %294 : vector<16x128xf32>
    %297 = arith.divf %295, %296 : vector<16x128xf32>
    %c0_125 = arith.constant 0 : index
    %c0_126 = arith.constant 0 : index
    %298 = vector.load %arg8[%c0_125, %c0_126] : memref<16x128xf32, #tpu.memory_space<vmem>>, vector<16x128xf32>
    %299 = arith.mulf %289, %298 : vector<16x128xf32>
    %300 = arith.mulf %283, %291 : vector<16x128xf32>
    %301 = arith.addf %299, %300 : vector<16x128xf32>
    %302 = math.tanh %301 : vector<16x128xf32>
    %303 = arith.mulf %297, %302 : vector<16x128xf32>
    %c0_127 = arith.constant 0 : index
    %c0_128 = arith.constant 0 : index
    %304 = vector.load %arg8[%c0_127, %c0_128] : memref<16x128xf32, #tpu.memory_space<vmem>>, vector<16x128xf32>
    tpu.vector_store %arg8[%c0_127, %c0_128], %301 {strides = array<i32>} : memref<16x128xf32, #tpu.memory_space<vmem>>, vector<16x128xf32>,
    %305 = arith.truncf %303 : vector<16x128xf32> to vector<16x128xbf16>
    %c0_129 = arith.constant 0 : index
    %c128_130 = arith.constant 128 : index
    %306 = vector.load %arg7[%c0_129, %c128_130] : memref<16x256xbf16, #tpu.memory_space<vmem>>, vector<16x128xbf16>
    tpu.vector_store %arg7[%c0_129, %c128_130], %305 {strides = array<i32>} : memref<16x256xbf16, #tpu.memory_space<vmem>>, vector<16x128xbf16>,
    %c7_i32 = arith.constant 7 : i32
    %307 = arith.index_cast %c7_i32 : i32 to index
    %c0_131 = arith.constant 0 : index
    %c0_132 = arith.constant 0 : index
    %308 = vector.load %arg1[%307, %c0_131, %c0_132] : memref<8x16x1xi32, #tpu.memory_space<vmem>>, vector<1x16x1xi32>
    %309 = vector.shape_cast %308 : vector<1x16x1xi32> to vector<16x1xi32>
    %310 = vector.broadcast %309 : vector<16x1xi32> to vector<16x128xi32>
    %311 = arith.cmpi eq, %4, %310 : vector<16x128xi32>
    %312 = arith.extui %311 : vector<16x128xi1> to vector<16x128xi32>
    %313 = arith.sitofp %312 : vector<16x128xi32> to vector<16x128xf32>
    %314 = arith.truncf %313 : vector<16x128xf32> to vector<16x128xbf16>
    %c0_133 = arith.constant 0 : index
    %c0_134 = arith.constant 0 : index
    %315 = vector.load %arg7[%c0_133, %c0_134] : memref<16x256xbf16, #tpu.memory_space<vmem>>, vector<16x128xbf16>
    tpu.vector_store %arg7[%c0_133, %c0_134], %314 {strides = array<i32>} : memref<16x256xbf16, #tpu.memory_space<vmem>>, vector<16x128xbf16>,
    %c0_135 = arith.constant 0 : index
    %c0_136 = arith.constant 0 : index
    %316 = vector.load %arg7[%c0_135, %c0_136] : memref<16x256xbf16, #tpu.memory_space<vmem>>, vector<16x256xbf16>
    %c0_137 = arith.constant 0 : index
    %c0_138 = arith.constant 0 : index
    %317 = vector.load %arg2[%c0_137, %c0_138] : memref<256x512xbf16, #tpu.memory_space<vmem>>, vector<256x512xbf16>
    %cst_139 = arith.constant dense<0.000000e+00> : vector<16x512xf32>
    %318 = tpu.matmul %316, %317, %cst_139 {dimension_numbers = #tpu.dot_dimension_numbers<[1], [0], [0], [1], [0, 0, 1, 1], [], []>} : vector<16x256xbf16>, vector<256x512xbf16>, vector<16x512xf32> -> vector<16x512xf32>
    %319 = vector.broadcast %5 : vector<1x512xf32> to vector<16x512xf32>
    %320 = arith.addf %318, %319 : vector<16x512xf32>
    %321 = vector.extract_strided_slice %320 {offsets = [0, 0], sizes = [16, 128], strides = [1, 1]} : vector<16x512xf32> to vector<16x128xf32>
    %322 = arith.negf %321 : vector<16x128xf32>
    %323 = math.exp %322 : vector<16x128xf32>
    %cst_140 = arith.constant 1.000000e+00 : f32
    %324 = vector.broadcast %cst_140 : f32 to vector<16x128xf32>
    %325 = arith.addf %324, %323 : vector<16x128xf32>
    %326 = arith.divf %324, %325 : vector<16x128xf32>
    %327 = vector.extract_strided_slice %320 {offsets = [0, 128], sizes = [16, 128], strides = [1, 1]} : vector<16x512xf32> to vector<16x128xf32>
    %328 = arith.negf %327 : vector<16x128xf32>
    %329 = math.exp %328 : vector<16x128xf32>
    %cst_141 = arith.constant 1.000000e+00 : f32
    %330 = vector.broadcast %cst_141 : f32 to vector<16x128xf32>
    %331 = arith.addf %330, %329 : vector<16x128xf32>
    %332 = arith.divf %330, %331 : vector<16x128xf32>
    %333 = vector.extract_strided_slice %320 {offsets = [0, 256], sizes = [16, 128], strides = [1, 1]} : vector<16x512xf32> to vector<16x128xf32>
    %334 = math.tanh %333 : vector<16x128xf32>
    %335 = vector.extract_strided_slice %320 {offsets = [0, 384], sizes = [16, 128], strides = [1, 1]} : vector<16x512xf32> to vector<16x128xf32>
    %336 = arith.negf %335 : vector<16x128xf32>
    %337 = math.exp %336 : vector<16x128xf32>
    %cst_142 = arith.constant 1.000000e+00 : f32
    %338 = vector.broadcast %cst_142 : f32 to vector<16x128xf32>
    %339 = arith.addf %338, %337 : vector<16x128xf32>
    %340 = arith.divf %338, %339 : vector<16x128xf32>
    %c0_143 = arith.constant 0 : index
    %c0_144 = arith.constant 0 : index
    %341 = vector.load %arg8[%c0_143, %c0_144] : memref<16x128xf32, #tpu.memory_space<vmem>>, vector<16x128xf32>
    %342 = arith.mulf %332, %341 : vector<16x128xf32>
    %343 = arith.mulf %326, %334 : vector<16x128xf32>
    %344 = arith.addf %342, %343 : vector<16x128xf32>
    %345 = math.tanh %344 : vector<16x128xf32>
    %346 = arith.mulf %340, %345 : vector<16x128xf32>
    %c0_145 = arith.constant 0 : index
    %c0_146 = arith.constant 0 : index
    %347 = vector.load %arg8[%c0_145, %c0_146] : memref<16x128xf32, #tpu.memory_space<vmem>>, vector<16x128xf32>
    tpu.vector_store %arg8[%c0_145, %c0_146], %344 {strides = array<i32>} : memref<16x128xf32, #tpu.memory_space<vmem>>, vector<16x128xf32>,
    %348 = arith.truncf %346 : vector<16x128xf32> to vector<16x128xbf16>
    %c0_147 = arith.constant 0 : index
    %c128_148 = arith.constant 128 : index
    %349 = vector.load %arg7[%c0_147, %c128_148] : memref<16x256xbf16, #tpu.memory_space<vmem>>, vector<16x128xbf16>
    tpu.vector_store %arg7[%c0_147, %c128_148], %348 {strides = array<i32>} : memref<16x256xbf16, #tpu.memory_space<vmem>>, vector<16x128xbf16>,
    %c8_i32 = arith.constant 8 : i32
    %c0_149 = arith.constant 0 : index
    %c128_150 = arith.constant 128 : index
    %350 = vector.load %arg7[%c0_149, %c128_150] : memref<16x256xbf16, #tpu.memory_space<vmem>>, vector<16x128xbf16>
    %c0_151 = arith.constant 0 : index
    %c0_152 = arith.constant 0 : index
    %351 = vector.load %arg4[%c0_151, %c0_152] : memref<128x128xbf16, #tpu.memory_space<vmem>>, vector<128x128xbf16>
    %cst_153 = arith.constant dense<0.000000e+00> : vector<16x128xf32>
    %352 = tpu.matmul %350, %351, %cst_153 {dimension_numbers = #tpu.dot_dimension_numbers<[1], [0], [0], [1], [0, 0, 1, 1], [], []>} : vector<16x128xbf16>, vector<128x128xbf16>, vector<16x128xf32> -> vector<16x128xf32>
    %c0_154 = arith.constant 0 : index
    %c0_155 = arith.constant 0 : index
    %353 = vector.load %arg5[%c0_154, %c0_155] : memref<1x128xf32, #tpu.memory_space<vmem>>, vector<1x128xf32>
    %354 = vector.broadcast %353 : vector<1x128xf32> to vector<16x128xf32>
    %355 = arith.addf %352, %354 : vector<16x128xf32>
    %c0_156 = arith.constant 0 : index
    %c0_157 = arith.constant 0 : index
    %356 = vector.load %arg6[%c0_156, %c0_157] : memref<16x128xf32, #tpu.memory_space<vmem>>, vector<16x128xf32>
    tpu.vector_store %arg6[%c0_156, %c0_157], %355 {strides = array<i32>} : memref<16x128xf32, #tpu.memory_space<vmem>>, vector<16x128xf32>,
    return
  }
  func.func @transform_0(%arg0: i32) -> (i32, i32, i32) {
    %c0_i32 = arith.constant 0 : i32
    %c0_i32_0 = arith.constant 0 : i32
    %c0_i32_1 = arith.constant 0 : i32
    %c0_i32_2 = arith.constant 0 : i32
    return %c0_i32, %c0_i32_0, %c0_i32_1 : i32, i32, i32
  }
  func.func @transform_1(%arg0: i32) -> (i32, i32) {
    %c0_i32 = arith.constant 0 : i32
    %c0_i32_0 = arith.constant 0 : i32
    %c0_i32_1 = arith.constant 0 : i32
    return %c0_i32, %c0_i32_0 : i32, i32
  }
  func.func @transform_2(%arg0: i32) -> (i32, i32) {
    %c0_i32 = arith.constant 0 : i32
    %c0_i32_0 = arith.constant 0 : i32
    %c0_i32_1 = arith.constant 0 : i32
    return %c0_i32, %c0_i32_0 : i32, i32
  }
  func.func @transform_3(%arg0: i32) -> (i32, i32) {
    %c0_i32 = arith.constant 0 : i32
    %c0_i32_0 = arith.constant 0 : i32
    %c0_i32_1 = arith.constant 0 : i32
    return %c0_i32, %c0_i32_0 : i32, i32
  }
  func.func @transform_4(%arg0: i32) -> (i32, i32) {
    %c0_i32 = arith.constant 0 : i32
    %c0_i32_0 = arith.constant 0 : i32
    %c0_i32_1 = arith.constant 0 : i32
    return %c0_i32, %c0_i32_0 : i32, i32
  }
  func.func @transform_5(%arg0: i32) -> (i32, i32) {
    %c0_i32 = arith.constant 0 : i32
    %c0_i32_0 = arith.constant 0 : i32
    %c0_i32_1 = arith.constant 0 : i32
    return %c0_i32, %c0_i32_0 : i32, i32
  }
}

</mosaic_0001>

<llo_original>
// kernel: language_module_forward.1
$region0: #{language_module_forward.1}
  #allocation0 [shape = 'u32[]', space=smem, size = 0x4, offset = 0x4, fixed_abs, tag = 'smem constant byte address 0x4 - core index']
  #allocation1 [shape = 'u32[72,128]{1,0:T(1,128)}', space=vmem, size = 0x9000, scoped, tag = 'internal scratch']
  #allocation2 [shape = 'bf16[16,256]{1,0:T(8,128)(2,1)}', space=vmem, size = 0x2000, scoped, tag = 'scratch operand']
  #allocation3 [shape = 'f32[16,128]{1,0:T(8,128)}', space=vmem, size = 0x2000, scoped, tag = 'scratch operand']
  %s0 = inlined_call_operand.vmem [shape: s32[8,16,1], index: 0, kind: input, shape index: {}]
  %s1 = inlined_call_operand.vmem [shape: bf16[256,512], index: 1, kind: input, shape index: {}]
  %s2 = inlined_call_operand.vmem [shape: f32[1,512], index: 2, kind: input, shape index: {}]
  %s3 = inlined_call_operand.vmem [shape: bf16[128,128], index: 3, kind: input, shape index: {}]
  %s4 = inlined_call_operand.vmem [shape: f32[1,128], index: 4, kind: input, shape index: {}]
  %s5 = inlined_call_operand.vmem [shape: f32[16,128], index: 5, kind: output, shape index: {}]
  %s6 = sld [smem:[#allocation0]]
  $region30: #{language_module_forward.1} parent=0
    _
  %s8 = ssub.s32 1, %s6
  %s9 = scalar_select 0, %s8, %s6
  // Predicated region
  $region2: #{language_module_forward.1} parent=0 // pred_check
    _
  $region3: #{language_module_forward.1} parent=0 // pred_check_branch
    %11 = sbr.rel (0) target = $region5
  $region4: #{language_module_forward.1} parent=0 // pred_region
    _
  $region5: #{language_module_forward.1} parent=0 // pred_fallthru
    _
  // Predicated region
  $region6: #{language_module_forward.1} parent=0 // pred_check
    _
  $region7: #{language_module_forward.1} parent=0 // pred_check_branch
    %13 = sbr.rel (0) target = $region9
  $region8: #{language_module_forward.1} parent=0 // pred_region
    _
  $region9: #{language_module_forward.1} parent=0 // pred_fallthru
    _
  // Predicated region
  $region10: #{language_module_forward.1} parent=0 // pred_check
    _
  $region11: #{language_module_forward.1} parent=0 // pred_check_branch
    %15 = sbr.rel (0) target = $region13
  $region12: #{language_module_forward.1} parent=0 // pred_region
    _
  $region13: #{language_module_forward.1} parent=0 // pred_fallthru
    _
  // Predicated region
  $region14: #{language_module_forward.1} parent=0 // pred_check
    _
  $region15: #{language_module_forward.1} parent=0 // pred_check_branch
    %17 = sbr.rel (0) target = $region17
  $region16: #{language_module_forward.1} parent=0 // pred_region
    _
  $region17: #{language_module_forward.1} parent=0 // pred_fallthru
    _
  // Predicated region
  $region18: #{language_module_forward.1} parent=0 // pred_check
    _
  $region19: #{language_module_forward.1} parent=0 // pred_check_branch
    %19 = sbr.rel (0) target = $region21
  $region20: #{language_module_forward.1} parent=0 // pred_region
    _
  $region21: #{language_module_forward.1} parent=0 // pred_fallthru
    _
  %21 = vst [vmem:[#allocation2] sm:$0xff] 0
  %22 = vst [vmem:[#allocation2 + $0x8] sm:$0xff] 0
  %23 = vst [vmem:[#allocation3] sm:$0xff] 0.0
  %24 = vst [vmem:[#allocation3 + $0x8] sm:$0xff] 0.0
  %v25 = vlaneseq
  %v26 = vand.u32 %v25, 127
  %v27 = vld [vmem:[%s2] sm:$0xf]
  %v28 = vld [vmem:[%s0] sm:$0xff]
  %v29 = vld [vmem:[%s0 + $0x8] sm:$0xff]
  %30 = vset.pattern.permute.xlu0 0
  %31 = vperm.xlu0 %30, %v28
  %v32 = vpop.permute.xlu0 %31
  %33 = vset.pattern.permute.xlu0 0
  %34 = vperm.xlu0 %33, %v29
  %v35 = vpop.permute.xlu0 %34
  %vm36 = vcmp.eq.s32.totalorder %v26, %v32
  %vm37 = vcmp.eq.s32.totalorder %v26, %v35
  %v38 = vsel %vm36, 1, 0
  %v39 = vsel %vm37, 1, 0
  %v40 = vcvt.s32.f32 %v38
  %v41 = vcvt.s32.f32 %v39
  %v42 = vpack.c.bf16 %v40, %v40
  %v43 = vpack.c.bf16 %v41, %v41
  %44 = vst [vmem:[#allocation2] sm:$0xf] %v42
  %45 = vst [vmem:[#allocation2 + $0x8] sm:$0xf] %v43
  %v46 = vld [vmem:[#allocation2] sm:$0xff]
  %v47 = vld [vmem:[#allocation2 + $0x8] sm:$0xff]
  %v48 = vld [vmem:[%s1] sm:$0xff]
  %v49 = vld [vmem:[%s1 + $0x8] sm:$0xff]
  %v50 = vld [vmem:[%s1 + $0x10] sm:$0xff]
  %v51 = vld [vmem:[%s1 + $0x18] sm:$0xff]
  %v52 = vld [vmem:[%s1 + $0x20] sm:$0xff]
  %v53 = vld [vmem:[%s1 + $0x28] sm:$0xff]
  %v54 = vld [vmem:[%s1 + $0x30] sm:$0xff]
  %v55 = vld [vmem:[%s1 + $0x38] sm:$0xff]
  %v56 = vld [vmem:[%s1 + $0x40] sm:$0xff]
  %v57 = vld [vmem:[%s1 + $0x48] sm:$0xff]
  %v58 = vld [vmem:[%s1 + $0x50] sm:$0xff]
  %v59 = vld [vmem:[%s1 + $0x58] sm:$0xff]
  %v60 = vld [vmem:[%s1 + $0x60] sm:$0xff]
  %v61 = vld [vmem:[%s1 + $0x68] sm:$0xff]
  %v62 = vld [vmem:[%s1 + $0x70] sm:$0xff]
  %v63 = vld [vmem:[%s1 + $0x78] sm:$0xff]
  %v64 = vld [vmem:[%s1 + $0x80] sm:$0xff]
  %v65 = vld [vmem:[%s1 + $0x88] sm:$0xff]
  %v66 = vld [vmem:[%s1 + $0x90] sm:$0xff]
  %v67 = vld [vmem:[%s1 + $0x98] sm:$0xff]
  %v68 = vld [vmem:[%s1 + $0xa0] sm:$0xff]
  %v69 = vld [vmem:[%s1 + $0xa8] sm:$0xff]
  %v70 = vld [vmem:[%s1 + $0xb0] sm:$0xff]
  %v71 = vld [vmem:[%s1 + $0xb8] sm:$0xff]
  %v72 = vld [vmem:[%s1 + $0xc0] sm:$0xff]
  %v73 = vld [vmem:[%s1 + $0xc8] sm:$0xff]
  %v74 = vld [vmem:[%s1 + $0xd0] sm:$0xff]
  %v75 = vld [vmem:[%s1 + $0xd8] sm:$0xff]
  %v76 = vld [vmem:[%s1 + $0xe0] sm:$0xff]
  %v77 = vld [vmem:[%s1 + $0xe8] sm:$0xff]
  %v78 = vld [vmem:[%s1 + $0xf0] sm:$0xff]
  %v79 = vld [vmem:[%s1 + $0xf8] sm:$0xff]
  %v80 = vld [vmem:[%s1 + $0x100] sm:$0xff]
  %v81 = vld [vmem:[%s1 + $0x108] sm:$0xff]
  %v82 = vld [vmem:[%s1 + $0x110] sm:$0xff]
  %v83 = vld [vmem:[%s1 + $0x118] sm:$0xff]
  %v84 = vld [vmem:[%s1 + $0x120] sm:$0xff]
  %v85 = vld [vmem:[%s1 + $0x128] sm:$0xff]
  %v86 = vld [vmem:[%s1 + $0x130] sm:$0xff]
  %v87 = vld [vmem:[%s1 + $0x138] sm:$0xff]
  %v88 = vld [vmem:[%s1 + $0x140] sm:$0xff]
  %v89 = vld [vmem:[%s1 + $0x148] sm:$0xff]
  %v90 = vld [vmem:[%s1 + $0x150] sm:$0xff]
  %v91 = vld [vmem:[%s1 + $0x158] sm:$0xff]
  %v92 = vld [vmem:[%s1 + $0x160] sm:$0xff]
  %v93 = vld [vmem:[%s1 + $0x168] sm:$0xff]
  %v94 = vld [vmem:[%s1 + $0x170] sm:$0xff]
  %v95 = vld [vmem:[%s1 + $0x178] sm:$0xff]
  %v96 = vld [vmem:[%s1 + $0x180] sm:$0xff]
  %v97 = vld [vmem:[%s1 + $0x188] sm:$0xff]
  %v98 = vld [vmem:[%s1 + $0x190] sm:$0xff]
  %v99 = vld [vmem:[%s1 + $0x198] sm:$0xff]
  %v100 = vld [vmem:[%s1 + $0x1a0] sm:$0xff]
  %v101 = vld [vmem:[%s1 + $0x1a8] sm:$0xff]
  %v102 = vld [vmem:[%s1 + $0x1b0] sm:$0xff]
  %v103 = vld [vmem:[%s1 + $0x1b8] sm:$0xff]
  %v104 = vld [vmem:[%s1 + $0x1c0] sm:$0xff]
  %v105 = vld [vmem:[%s1 + $0x1c8] sm:$0xff]
  %v106 = vld [vmem:[%s1 + $0x1d0] sm:$0xff]
  %v107 = vld [vmem:[%s1 + $0x1d8] sm:$0xff]
  %v108 = vld [vmem:[%s1 + $0x1e0] sm:$0xff]
  %v109 = vld [vmem:[%s1 + $0x1e8] sm:$0xff]
  %v110 = vld [vmem:[%s1 + $0x1f0] sm:$0xff]
  %v111 = vld [vmem:[%s1 + $0x1f8] sm:$0xff]
  %v113 = vperm.slane %v27, 0
  %v114 = vperm.slane %v27, 1
  %v115 = vperm.slane %v27, 2
  %v116 = vperm.slane %v27, 3
  %v123 = vunpack.c.l.b16 %v46
  %v124 = vunpack.c.h.b16 %v46
  %v125 = vunpack.c.l.b16 %v47
  %v126 = vunpack.c.h.b16 %v47
  %v127 = vpack.c.b16 %v125, %v123
  %v128 = vpack.c.b16 %v126, %v124
  %v195 = vunpack.c.l.b16 %v48
  %v196 = vunpack.c.h.b16 %v48
  %v197 = vunpack.c.l.b16 %v49
  %v198 = vunpack.c.h.b16 %v49
  %v199 = vunpack.c.l.b16 %v50
  %v200 = vunpack.c.h.b16 %v50
  %v201 = vunpack.c.l.b16 %v51
  %v202 = vunpack.c.h.b16 %v51
  %v203 = vunpack.c.l.b16 %v52
  %v204 = vunpack.c.h.b16 %v52
  %v205 = vunpack.c.l.b16 %v53
  %v206 = vunpack.c.h.b16 %v53
  %v207 = vunpack.c.l.b16 %v54
  %v208 = vunpack.c.h.b16 %v54
  %v209 = vunpack.c.l.b16 %v55
  %v210 = vunpack.c.h.b16 %v55
  %v211 = vunpack.c.l.b16 %v56
  %v212 = vunpack.c.h.b16 %v56
  %v213 = vunpack.c.l.b16 %v57
  %v214 = vunpack.c.h.b16 %v57
  %v215 = vunpack.c.l.b16 %v58
  %v216 = vunpack.c.h.b16 %v58
  %v217 = vunpack.c.l.b16 %v59
  %v218 = vunpack.c.h.b16 %v59
  %v219 = vunpack.c.l.b16 %v60
  %v220 = vunpack.c.h.b16 %v60
  %v221 = vunpack.c.l.b16 %v61
  %v222 = vunpack.c.h.b16 %v61
  %v223 = vunpack.c.l.b16 %v62
  %v224 = vunpack.c.h.b16 %v62
  %v225 = vunpack.c.l.b16 %v63
  %v226 = vunpack.c.h.b16 %v63
  %v227 = vunpack.c.l.b16 %v64
  %v228 = vunpack.c.h.b16 %v64
  %v229 = vunpack.c.l.b16 %v65
  %v230 = vunpack.c.h.b16 %v65
  %v231 = vunpack.c.l.b16 %v66
  %v232 = vunpack.c.h.b16 %v66
  %v233 = vunpack.c.l.b16 %v67
  %v234 = vunpack.c.h.b16 %v67
  %v235 = vunpack.c.l.b16 %v68
  %v236 = vunpack.c.h.b16 %v68
  %v237 = vunpack.c.l.b16 %v69
  %v238 = vunpack.c.h.b16 %v69
  %v239 = vunpack.c.l.b16 %v70
  %v240 = vunpack.c.h.b16 %v70
  %v241 = vunpack.c.l.b16 %v71
  %v242 = vunpack.c.h.b16 %v71
  %v243 = vunpack.c.l.b16 %v72
  %v244 = vunpack.c.h.b16 %v72
  %v245 = vunpack.c.l.b16 %v73
  %v246 = vunpack.c.h.b16 %v73
  %v247 = vunpack.c.l.b16 %v74
  %v248 = vunpack.c.h.b16 %v74
  %v249 = vunpack.c.l.b16 %v75
  %v250 = vunpack.c.h.b16 %v75
  %v251 = vunpack.c.l.b16 %v76
  %v252 = vunpack.c.h.b16 %v76
  %v253 = vunpack.c.l.b16 %v77
  %v254 = vunpack.c.h.b16 %v77
  %v255 = vunpack.c.l.b16 %v78
  %v256 = vunpack.c.h.b16 %v78
  %v257 = vunpack.c.l.b16 %v79
  %v258 = vunpack.c.h.b16 %v79
  %v259 = vunpack.c.l.b16 %v80
  %v260 = vunpack.c.h.b16 %v80
  %v261 = vunpack.c.l.b16 %v81
  %v262 = vunpack.c.h.b16 %v81
  %v263 = vunpack.c.l.b16 %v82
  %v264 = vunpack.c.h.b16 %v82
  %v265 = vunpack.c.l.b16 %v83
  %v266 = vunpack.c.h.b16 %v83
  %v267 = vunpack.c.l.b16 %v84
  %v268 = vunpack.c.h.b16 %v84
  %v269 = vunpack.c.l.b16 %v85
  %v270 = vunpack.c.h.b16 %v85
  %v271 = vunpack.c.l.b16 %v86
  %v272 = vunpack.c.h.b16 %v86
  %v273 = vunpack.c.l.b16 %v87
  %v274 = vunpack.c.h.b16 %v87
  %v275 = vunpack.c.l.b16 %v88
  %v276 = vunpack.c.h.b16 %v88
  %v277 = vunpack.c.l.b16 %v89
  %v278 = vunpack.c.h.b16 %v89
  %v279 = vunpack.c.l.b16 %v90
  %v280 = vunpack.c.h.b16 %v90
  %v281 = vunpack.c.l.b16 %v91
  %v282 = vunpack.c.h.b16 %v91
  %v283 = vunpack.c.l.b16 %v92
  %v284 = vunpack.c.h.b16 %v92
  %v285 = vunpack.c.l.b16 %v93
  %v286 = vunpack.c.h.b16 %v93
  %v287 = vunpack.c.l.b16 %v94
  %v288 = vunpack.c.h.b16 %v94
  %v289 = vunpack.c.l.b16 %v95
  %v290 = vunpack.c.h.b16 %v95
  %v291 = vunpack.c.l.b16 %v96
  %v292 = vunpack.c.h.b16 %v96
  %v293 = vunpack.c.l.b16 %v97
  %v294 = vunpack.c.h.b16 %v97
  %v295 = vunpack.c.l.b16 %v98
  %v296 = vunpack.c.h.b16 %v98
  %v297 = vunpack.c.l.b16 %v99
  %v298 = vunpack.c.h.b16 %v99
  %v299 = vunpack.c.l.b16 %v100
  %v300 = vunpack.c.h.b16 %v100
  %v301 = vunpack.c.l.b16 %v101
  %v302 = vunpack.c.h.b16 %v101
  %v303 = vunpack.c.l.b16 %v102
  %v304 = vunpack.c.h.b16 %v102
  %v305 = vunpack.c.l.b16 %v103
  %v306 = vunpack.c.h.b16 %v103
  %v307 = vunpack.c.l.b16 %v104
  %v308 = vunpack.c.h.b16 %v104
  %v309 = vunpack.c.l.b16 %v105
  %v310 = vunpack.c.h.b16 %v105
  %v311 = vunpack.c.l.b16 %v106
  %v312 = vunpack.c.h.b16 %v106
  %v313 = vunpack.c.l.b16 %v107
  %v314 = vunpack.c.h.b16 %v107
  %v315 = vunpack.c.l.b16 %v108
  %v316 = vunpack.c.h.b16 %v108
  %v317 = vunpack.c.l.b16 %v109
  %v318 = vunpack.c.h.b16 %v109
  %v319 = vunpack.c.l.b16 %v110
  %v320 = vunpack.c.h.b16 %v110
  %v321 = vunpack.c.l.b16 %v111
  %v322 = vunpack.c.h.b16 %v111
  %v323 = vpack.c.b16 %v199, %v195
  %v324 = vpack.c.b16 %v200, %v196
  %v325 = vpack.c.b16 %v201, %v197
  %v326 = vpack.c.b16 %v202, %v198
  %v327 = vpack.c.b16 %v207, %v203
  %v328 = vpack.c.b16 %v208, %v204
  %v329 = vpack.c.b16 %v209, %v205
  %v330 = vpack.c.b16 %v210, %v206
  %v331 = vpack.c.b16 %v215, %v211
  %v332 = vpack.c.b16 %v216, %v212
  %v333 = vpack.c.b16 %v217, %v213
  %v334 = vpack.c.b16 %v218, %v214
  %v335 = vpack.c.b16 %v223, %v219
  %v336 = vpack.c.b16 %v224, %v220
  %v337 = vpack.c.b16 %v225, %v221
  %v338 = vpack.c.b16 %v226, %v222
  %v339 = vpack.c.b16 %v231, %v227
  %v340 = vpack.c.b16 %v232, %v228
  %v341 = vpack.c.b16 %v233, %v229
  %v342 = vpack.c.b16 %v234, %v230
  %v343 = vpack.c.b16 %v239, %v235
  %v344 = vpack.c.b16 %v240, %v236
  %v345 = vpack.c.b16 %v241, %v237
  %v346 = vpack.c.b16 %v242, %v238
  %v347 = vpack.c.b16 %v247, %v243
  %v348 = vpack.c.b16 %v248, %v244
  %v349 = vpack.c.b16 %v249, %v245
  %v350 = vpack.c.b16 %v250, %v246
  %v351 = vpack.c.b16 %v255, %v251
  %v352 = vpack.c.b16 %v256, %v252
  %v353 = vpack.c.b16 %v257, %v253
  %v354 = vpack.c.b16 %v258, %v254
  %v355 = vpack.c.b16 %v263, %v259
  %v356 = vpack.c.b16 %v264, %v260
  %v357 = vpack.c.b16 %v265, %v261
  %v358 = vpack.c.b16 %v266, %v262
  %v359 = vpack.c.b16 %v271, %v267
  %v360 = vpack.c.b16 %v272, %v268
  %v361 = vpack.c.b16 %v273, %v269
  %v362 = vpack.c.b16 %v274, %v270
  %v363 = vpack.c.b16 %v279, %v275
  %v364 = vpack.c.b16 %v280, %v276
  %v365 = vpack.c.b16 %v281, %v277
  %v366 = vpack.c.b16 %v282, %v278
  %v367 = vpack.c.b16 %v287, %v283
  %v368 = vpack.c.b16 %v288, %v284
  %v369 = vpack.c.b16 %v289, %v285
  %v370 = vpack.c.b16 %v290, %v286
  %v371 = vpack.c.b16 %v295, %v291
  %v372 = vpack.c.b16 %v296, %v292
  %v373 = vpack.c.b16 %v297, %v293
  %v374 = vpack.c.b16 %v298, %v294
  %v375 = vpack.c.b16 %v303, %v299
  %v376 = vpack.c.b16 %v304, %v300
  %v377 = vpack.c.b16 %v305, %v301
  %v378 = vpack.c.b16 %v306, %v302
  %v379 = vpack.c.b16 %v311, %v307
  %v380 = vpack.c.b16 %v312, %v308
  %v381 = vpack.c.b16 %v313, %v309
  %v382 = vpack.c.b16 %v314, %v310
  %v383 = vpack.c.b16 %v319, %v315
  %v384 = vpack.c.b16 %v320, %v316
  %v385 = vpack.c.b16 %v321, %v317
  %v386 = vpack.c.b16 %v322, %v318
  %451 = vmatpush.bf16.msra.mxu0 %v351
  %452 = vmatpush.bf16.msra.mxu0 %v347
  %453 = vmatpush.bf16.msra.mxu0 %v343
  %454 = vmatpush.bf16.msra.mxu0 %v339
  %455 = vmatpush.bf16.msra.mxu0 %v335
  %456 = vmatpush.bf16.msra.mxu0 %v331
  %457 = vmatpush.bf16.msra.mxu0 %v327
  %458 = vmatpush.bf16.msra.mxu0 %v323
  %459 = vmatmul.bf16.gmra.mxu0 %v127
  %v460 = vpop.f32.mrf.mxu0
  %v461 = vadd.f32 %v113, %v460
  %v462 = vpop.f32.mrf.mxu0
  %v463 = vadd.f32 %v113, %v462
  %464 = vdwg.mxu0
  %465 = vmatpush.bf16.msra.mxu0 %v383
  %466 = vmatpush.bf16.msra.mxu0 %v379
  %467 = vmatpush.bf16.msra.mxu0 %v375
  %468 = vmatpush.bf16.msra.mxu0 %v371
  %469 = vmatpush.bf16.msra.mxu0 %v367
  %470 = vmatpush.bf16.msra.mxu0 %v363
  %471 = vmatpush.bf16.msra.mxu0 %v359
  %472 = vmatpush.bf16.msra.mxu0 %v355
  %473 = vmatmul.bf16.gmra.mxu0 %v128
  %v474 = vpop.f32.mrf.mxu0
  %v475 = vadd.f32 %v461, %v474
  %v476 = vpop.f32.mrf.mxu0
  %v477 = vadd.f32 %v463, %v476
  %478 = vdwg.mxu0
  %479 = vmatpush.bf16.msra.mxu0 %v352
  %480 = vmatpush.bf16.msra.mxu0 %v348
  %481 = vmatpush.bf16.msra.mxu0 %v344
  %482 = vmatpush.bf16.msra.mxu0 %v340
  %483 = vmatpush.bf16.msra.mxu0 %v336
  %484 = vmatpush.bf16.msra.mxu0 %v332
  %485 = vmatpush.bf16.msra.mxu0 %v328
  %486 = vmatpush.bf16.msra.mxu0 %v324
  %487 = vmatmul.bf16.gmra.mxu0 %v127
  %v488 = vpop.f32.mrf.mxu0
  %v489 = vadd.f32 %v114, %v488
  %v490 = vpop.f32.mrf.mxu0
  %v491 = vadd.f32 %v114, %v490
  %492 = vdwg.mxu0
  %493 = vmatpush.bf16.msra.mxu0 %v384
  %494 = vmatpush.bf16.msra.mxu0 %v380
  %495 = vmatpush.bf16.msra.mxu0 %v376
  %496 = vmatpush.bf16.msra.mxu0 %v372
  %497 = vmatpush.bf16.msra.mxu0 %v368
  %498 = vmatpush.bf16.msra.mxu0 %v364
  %499 = vmatpush.bf16.msra.mxu0 %v360
  %500 = vmatpush.bf16.msra.mxu0 %v356
  %501 = vmatmul.bf16.gmra.mxu0 %v128
  %v502 = vpop.f32.mrf.mxu0
  %v503 = vadd.f32 %v489, %v502
  %v504 = vpop.f32.mrf.mxu0
  %v505 = vadd.f32 %v491, %v504
  %506 = vdwg.mxu0
  %507 = vmatpush.bf16.msra.mxu0 %v353
  %508 = vmatpush.bf16.msra.mxu0 %v349
  %509 = vmatpush.bf16.msra.mxu0 %v345
  %510 = vmatpush.bf16.msra.mxu0 %v341
  %511 = vmatpush.bf16.msra.mxu0 %v337
  %512 = vmatpush.bf16.msra.mxu0 %v333
  %513 = vmatpush.bf16.msra.mxu0 %v329
  %514 = vmatpush.bf16.msra.mxu0 %v325
  %515 = vmatmul.bf16.gmra.mxu0 %v127
  %v516 = vpop.f32.mrf.mxu0
  %v517 = vadd.f32 %v115, %v516
  %v518 = vpop.f32.mrf.mxu0
  %v519 = vadd.f32 %v115, %v518
  %520 = vdwg.mxu0
  %521 = vmatpush.bf16.msra.mxu0 %v385
  %522 = vmatpush.bf16.msra.mxu0 %v381
  %523 = vmatpush.bf16.msra.mxu0 %v377
  %524 = vmatpush.bf16.msra.mxu0 %v373
  %525 = vmatpush.bf16.msra.mxu0 %v369
  %526 = vmatpush.bf16.msra.mxu0 %v365
  %527 = vmatpush.bf16.msra.mxu0 %v361
  %528 = vmatpush.bf16.msra.mxu0 %v357
  %529 = vmatmul.bf16.gmra.mxu0 %v128
  %v530 = vpop.f32.mrf.mxu0
  %v531 = vadd.f32 %v517, %v530
  %v532 = vpop.f32.mrf.mxu0
  %v533 = vadd.f32 %v519, %v532
  %534 = vdwg.mxu0
  %535 = vmatpush.bf16.msra.mxu0 %v354
  %536 = vmatpush.bf16.msra.mxu0 %v350
  %537 = vmatpush.bf16.msra.mxu0 %v346
  %538 = vmatpush.bf16.msra.mxu0 %v342
  %539 = vmatpush.bf16.msra.mxu0 %v338
  %540 = vmatpush.bf16.msra.mxu0 %v334
  %541 = vmatpush.bf16.msra.mxu0 %v330
  %542 = vmatpush.bf16.msra.mxu0 %v326
  %543 = vmatmul.bf16.gmra.mxu0 %v127
  %v544 = vpop.f32.mrf.mxu0
  %v545 = vadd.f32 %v116, %v544
  %v546 = vpop.f32.mrf.mxu0
  %v547 = vadd.f32 %v116, %v546
  %548 = vdwg.mxu0
  %549 = vmatpush.bf16.msra.mxu0 %v386
  %550 = vmatpush.bf16.msra.mxu0 %v382
  %551 = vmatpush.bf16.msra.mxu0 %v378
  %552 = vmatpush.bf16.msra.mxu0 %v374
  %553 = vmatpush.bf16.msra.mxu0 %v370
  %554 = vmatpush.bf16.msra.mxu0 %v366
  %555 = vmatpush.bf16.msra.mxu0 %v362
  %556 = vmatpush.bf16.msra.mxu0 %v358
  %557 = vmatmul.bf16.gmra.mxu0 %v128
  %v558 = vpop.f32.mrf.mxu0
  %v559 = vadd.f32 %v545, %v558
  %v560 = vpop.f32.mrf.mxu0
  %v561 = vadd.f32 %v547, %v560
  %562 = vdwg.mxu0
  %v563 = vxor.u32 %v475, 2147483648
  %v564 = vxor.u32 %v477, 2147483648
  %v565 = vmul.f32 %v563, 1.442695
  %v566 = vpow.pop %v565
  %v567 = vmul.f32 %v564, 1.442695
  %v568 = vpow.pop %v567
  %v569 = vadd.f32 %v566, 1.0
  %v570 = vadd.f32 %v568, 1.0
  %v571 = vrcp.pop %v569
  %v572 = vmul.f32 %v569, %v571
  %v573 = vsub.f32 1.0, %v572
  %v574 = vmul.f32 %v571, %v573
  %v575 = vadd.f32 %v571, %v574
  %vm576 = vweird.f32 %v569
  %vm577 = vweird.f32 %v571
  %vm578 = vmor %vm576, %vm577
  %v579 = vsel %vm578, %v571, %v575
  %v580 = vand.u32 2147483647, %v569
  %vm581 = vcmp.eq.f32.partialorder %v580, 8.507059e+37
  %v582 = vand.u32 %v569, 2147483648
  %v583 = vor.u32 1.1754944e-38, %v582
  %v584 = vsel %vm581, %v583, %v579
  %v585 = vmul.f32 1.0, %v584
  %v586 = vrcp.pop %v570
  %v587 = vmul.f32 %v570, %v586
  %v588 = vsub.f32 1.0, %v587
  %v589 = vmul.f32 %v586, %v588
  %v590 = vadd.f32 %v586, %v589
  %vm591 = vweird.f32 %v570
  %vm592 = vweird.f32 %v586
  %vm593 = vmor %vm591, %vm592
  %v594 = vsel %vm593, %v586, %v590
  %v595 = vand.u32 2147483647, %v570
  %vm596 = vcmp.eq.f32.partialorder %v595, 8.507059e+37
  %v597 = vand.u32 %v570, 2147483648
  %v598 = vor.u32 1.1754944e-38, %v597
  %v599 = vsel %vm596, %v598, %v594
  %v600 = vmul.f32 1.0, %v599
  %v601 = vxor.u32 %v503, 2147483648
  %v602 = vxor.u32 %v505, 2147483648
  %v603 = vmul.f32 %v601, 1.442695
  %v604 = vpow.pop %v603
  %v605 = vmul.f32 %v602, 1.442695
  %v606 = vpow.pop %v605
  %v607 = vadd.f32 %v604, 1.0
  %v608 = vadd.f32 %v606, 1.0
  %v609 = vrcp.pop %v607
  %v610 = vmul.f32 %v607, %v609
  %v611 = vsub.f32 1.0, %v610
  %v612 = vmul.f32 %v609, %v611
  %v613 = vadd.f32 %v609, %v612
  %vm614 = vweird.f32 %v607
  %vm615 = vweird.f32 %v609
  %vm616 = vmor %vm614, %vm615
  %v617 = vsel %vm616, %v609, %v613
  %v618 = vand.u32 2147483647, %v607
  %vm619 = vcmp.eq.f32.partialorder %v618, 8.507059e+37
  %v620 = vand.u32 %v607, 2147483648
  %v621 = vor.u32 1.1754944e-38, %v620
  %v622 = vsel %vm619, %v621, %v617
  %v623 = vmul.f32 1.0, %v622
  %v624 = vrcp.pop %v608
  %v625 = vmul.f32 %v608, %v624
  %v626 = vsub.f32 1.0, %v625
  %v627 = vmul.f32 %v624, %v626
  %v628 = vadd.f32 %v624, %v627
  %vm629 = vweird.f32 %v608
  %vm630 = vweird.f32 %v624
  %vm631 = vmor %vm629, %vm630
  %v632 = vsel %vm631, %v624, %v628
  %v633 = vand.u32 2147483647, %v608
  %vm634 = vcmp.eq.f32.partialorder %v633, 8.507059e+37
  %v635 = vand.u32 %v608, 2147483648
  %v636 = vor.u32 1.1754944e-38, %v635
  %v637 = vsel %vm634, %v636, %v632
  %v638 = vmul.f32 1.0, %v637
  %v639 = vtanh.pop %v531
  %v640 = vtanh.pop %v533
  %v641 = vxor.u32 %v559, 2147483648
  %v642 = vxor.u32 %v561, 2147483648
  %v643 = vmul.f32 %v641, 1.442695
  %v644 = vpow.pop %v643
  %v645 = vmul.f32 %v642, 1.442695
  %v646 = vpow.pop %v645
  %v647 = vadd.f32 %v644, 1.0
  %v648 = vadd.f32 %v646, 1.0
  %v649 = vrcp.pop %v647
  %v650 = vmul.f32 %v647, %v649
  %v651 = vsub.f32 1.0, %v650
  %v652 = vmul.f32 %v649, %v651
  %v653 = vadd.f32 %v649, %v652
  %vm654 = vweird.f32 %v647
  %vm655 = vweird.f32 %v649
  %vm656 = vmor %vm654, %vm655
  %v657 = vsel %vm656, %v649, %v653
  %v658 = vand.u32 2147483647, %v647
  %vm659 = vcmp.eq.f32.partialorder %v658, 8.507059e+37
  %v660 = vand.u32 %v647, 2147483648
  %v661 = vor.u32 1.1754944e-38, %v660
  %v662 = vsel %vm659, %v661, %v657
  %v663 = vmul.f32 1.0, %v662
  %v664 = vrcp.pop %v648
  %v665 = vmul.f32 %v648, %v664
  %v666 = vsub.f32 1.0, %v665
  %v667 = vmul.f32 %v664, %v666
  %v668 = vadd.f32 %v664, %v667
  %vm669 = vweird.f32 %v648
  %vm670 = vweird.f32 %v664
  %vm671 = vmor %vm669, %vm670
  %v672 = vsel %vm671, %v664, %v668
  %v673 = vand.u32 2147483647, %v648
  %vm674 = vcmp.eq.f32.partialorder %v673, 8.507059e+37
  %v675 = vand.u32 %v648, 2147483648
  %v676 = vor.u32 1.1754944e-38, %v675
  %v677 = vsel %vm674, %v676, %v672
  %v678 = vmul.f32 1.0, %v677
  %v679 = vld [vmem:[#allocation3] sm:$0xff]
  %v680 = vld [vmem:[#allocation3 + $0x8] sm:$0xff]
  %v681 = vmul.f32 %v623, %v679
  %v682 = vmul.f32 %v638, %v680
  %v683 = vmul.f32 %v585, %v639
  %v684 = vmul.f32 %v600, %v640
  %v685 = vadd.f32 %v681, %v683
  %v686 = vadd.f32 %v682, %v684
  %v687 = vtanh.pop %v685
  %v688 = vtanh.pop %v686
  %v689 = vmul.f32 %v663, %v687
  %v690 = vmul.f32 %v678, %v688
  %691 = vst [vmem:[#allocation3] sm:$0xff] %v685
  %692 = vst [vmem:[#allocation3 + $0x8] sm:$0xff] %v686
  %v693 = vpack.c.bf16 %v689, %v689
  %v694 = vpack.c.bf16 %v690, %v690
  %695 = vst [vmem:[#allocation2 + $0x4] sm:$0xf] %v693
  %696 = vst [vmem:[#allocation2 + $0xc] sm:$0xf] %v694
  %s697 = scalar_lea.vmem %s0, 16
  %v698 = vld [vmem:[%s697] sm:$0xff]
  %v699 = vld [vmem:[%s697 + $0x8] sm:$0xff]
  %700 = vset.pattern.permute.xlu0 0
  %701 = vperm.xlu0 %700, %v698
  %v702 = vpop.permute.xlu0 %701
  %703 = vset.pattern.permute.xlu0 0
  %704 = vperm.xlu0 %703, %v699
  %v705 = vpop.permute.xlu0 %704
  %vm706 = vcmp.eq.s32.totalorder %v26, %v702
  %vm707 = vcmp.eq.s32.totalorder %v26, %v705
  %v708 = vsel %vm706, 1, 0
  %v709 = vsel %vm707, 1, 0
  %v710 = vcvt.s32.f32 %v708
  %v711 = vcvt.s32.f32 %v709
  %v712 = vpack.c.bf16 %v710, %v710
  %v713 = vpack.c.bf16 %v711, %v711
  %714 = vst [vmem:[#allocation2] sm:$0xf] %v712
  %715 = vst [vmem:[#allocation2 + $0x8] sm:$0xf] %v713
  %v716 = vld [vmem:[#allocation2] sm:$0xff]
  %v717 = vld [vmem:[#allocation2 + $0x8] sm:$0xff]
  %v718 = vld [vmem:[%s1] sm:$0xff]
  %v719 = vld [vmem:[%s1 + $0x8] sm:$0xff]
  %v720 = vld [vmem:[%s1 + $0x10] sm:$0xff]
  %v721 = vld [vmem:[%s1 + $0x18] sm:$0xff]
  %v722 = vld [vmem:[%s1 + $0x20] sm:$0xff]
  %v723 = vld [vmem:[%s1 + $0x28] sm:$0xff]
  %v724 = vld [vmem:[%s1 + $0x30] sm:$0xff]
  %v725 = vld [vmem:[%s1 + $0x38] sm:$0xff]
  %v726 = vld [vmem:[%s1 + $0x40] sm:$0xff]
  %v727 = vld [vmem:[%s1 + $0x48] sm:$0xff]
  %v728 = vld [vmem:[%s1 + $0x50] sm:$0xff]
  %v729 = vld [vmem:[%s1 + $0x58] sm:$0xff]
  %v730 = vld [vmem:[%s1 + $0x60] sm:$0xff]
  %v731 = vld [vmem:[%s1 + $0x68] sm:$0xff]
  %v732 = vld [vmem:[%s1 + $0x70] sm:$0xff]
  %v733 = vld [vmem:[%s1 + $0x78] sm:$0xff]
  %v734 = vld [vmem:[%s1 + $0x80] sm:$0xff]
  %v735 = vld [vmem:[%s1 + $0x88] sm:$0xff]
  %v736 = vld [vmem:[%s1 + $0x90] sm:$0xff]
  %v737 = vld [vmem:[%s1 + $0x98] sm:$0xff]
  %v738 = vld [vmem:[%s1 + $0xa0] sm:$0xff]
  %v739 = vld [vmem:[%s1 + $0xa8] sm:$0xff]
  %v740 = vld [vmem:[%s1 + $0xb0] sm:$0xff]
  %v741 = vld [vmem:[%s1 + $0xb8] sm:$0xff]
  %v742 = vld [vmem:[%s1 + $0xc0] sm:$0xff]
  %v743 = vld [vmem:[%s1 + $0xc8] sm:$0xff]
  %v744 = vld [vmem:[%s1 + $0xd0] sm:$0xff]
  %v745 = vld [vmem:[%s1 + $0xd8] sm:$0xff]
  %v746 = vld [vmem:[%s1 + $0xe0] sm:$0xff]
  %v747 = vld [vmem:[%s1 + $0xe8] sm:$0xff]
  %v748 = vld [vmem:[%s1 + $0xf0] sm:$0xff]
  %v749 = vld [vmem:[%s1 + $0xf8] sm:$0xff]
  %v750 = vld [vmem:[%s1 + $0x100] sm:$0xff]
  %v751 = vld [vmem:[%s1 + $0x108] sm:$0xff]
  %v752 = vld [vmem:[%s1 + $0x110] sm:$0xff]
  %v753 = vld [vmem:[%s1 + $0x118] sm:$0xff]
  %v754 = vld [vmem:[%s1 + $0x120] sm:$0xff]
  %v755 = vld [vmem:[%s1 + $0x128] sm:$0xff]
  %v756 = vld [vmem:[%s1 + $0x130] sm:$0xff]
  %v757 = vld [vmem:[%s1 + $0x138] sm:$0xff]
  %v758 = vld [vmem:[%s1 + $0x140] sm:$0xff]
  %v759 = vld [vmem:[%s1 + $0x148] sm:$0xff]
  %v760 = vld [vmem:[%s1 + $0x150] sm:$0xff]
  %v761 = vld [vmem:[%s1 + $0x158] sm:$0xff]
  %v762 = vld [vmem:[%s1 + $0x160] sm:$0xff]
  %v763 = vld [vmem:[%s1 + $0x168] sm:$0xff]
  %v764 = vld [vmem:[%s1 + $0x170] sm:$0xff]
  %v765 = vld [vmem:[%s1 + $0x178] sm:$0xff]
  %v766 = vld [vmem:[%s1 + $0x180] sm:$0xff]
  %v767 = vld [vmem:[%s1 + $0x188] sm:$0xff]
  %v768 = vld [vmem:[%s1 + $0x190] sm:$0xff]
  %v769 = vld [vmem:[%s1 + $0x198] sm:$0xff]
  %v770 = vld [vmem:[%s1 + $0x1a0] sm:$0xff]
  %v771 = vld [vmem:[%s1 + $0x1a8] sm:$0xff]
  %v772 = vld [vmem:[%s1 + $0x1b0] sm:$0xff]
  %v773 = vld [vmem:[%s1 + $0x1b8] sm:$0xff]
  %v774 = vld [vmem:[%s1 + $0x1c0] sm:$0xff]
  %v775 = vld [vmem:[%s1 + $0x1c8] sm:$0xff]
  %v776 = vld [vmem:[%s1 + $0x1d0] sm:$0xff]
  %v777 = vld [vmem:[%s1 + $0x1d8] sm:$0xff]
  %v778 = vld [vmem:[%s1 + $0x1e0] sm:$0xff]
  %v779 = vld [vmem:[%s1 + $0x1e8] sm:$0xff]
  %v780 = vld [vmem:[%s1 + $0x1f0] sm:$0xff]
  %v781 = vld [vmem:[%s1 + $0x1f8] sm:$0xff]
  %v784 = vunpack.c.l.b16 %v716
  %v785 = vunpack.c.h.b16 %v716
  %v786 = vunpack.c.l.b16 %v717
  %v787 = vunpack.c.h.b16 %v717
  %v788 = vpack.c.b16 %v786, %v784
  %v789 = vpack.c.b16 %v787, %v785
  %v856 = vunpack.c.l.b16 %v718
  %v857 = vunpack.c.h.b16 %v718
  %v858 = vunpack.c.l.b16 %v719
  %v859 = vunpack.c.h.b16 %v719
  %v860 = vunpack.c.l.b16 %v720
  %v861 = vunpack.c.h.b16 %v720
  %v862 = vunpack.c.l.b16 %v721
  %v863 = vunpack.c.h.b16 %v721
  %v864 = vunpack.c.l.b16 %v722
  %v865 = vunpack.c.h.b16 %v722
  %v866 = vunpack.c.l.b16 %v723
  %v867 = vunpack.c.h.b16 %v723
  %v868 = vunpack.c.l.b16 %v724
  %v869 = vunpack.c.h.b16 %v724
  %v870 = vunpack.c.l.b16 %v725
  %v871 = vunpack.c.h.b16 %v725
  %v872 = vunpack.c.l.b16 %v726
  %v873 = vunpack.c.h.b16 %v726
  %v874 = vunpack.c.l.b16 %v727
  %v875 = vunpack.c.h.b16 %v727
  %v876 = vunpack.c.l.b16 %v728
  %v877 = vunpack.c.h.b16 %v728
  %v878 = vunpack.c.l.b16 %v729
  %v879 = vunpack.c.h.b16 %v729
  %v880 = vunpack.c.l.b16 %v730
  %v881 = vunpack.c.h.b16 %v730
  %v882 = vunpack.c.l.b16 %v731
  %v883 = vunpack.c.h.b16 %v731
  %v884 = vunpack.c.l.b16 %v732
  %v885 = vunpack.c.h.b16 %v732
  %v886 = vunpack.c.l.b16 %v733
  %v887 = vunpack.c.h.b16 %v733
  %v888 = vunpack.c.l.b16 %v734
  %v889 = vunpack.c.h.b16 %v734
  %v890 = vunpack.c.l.b16 %v735
  %v891 = vunpack.c.h.b16 %v735
  %v892 = vunpack.c.l.b16 %v736
  %v893 = vunpack.c.h.b16 %v736
  %v894 = vunpack.c.l.b16 %v737
  %v895 = vunpack.c.h.b16 %v737
  %v896 = vunpack.c.l.b16 %v738
  %v897 = vunpack.c.h.b16 %v738
  %v898 = vunpack.c.l.b16 %v739
  %v899 = vunpack.c.h.b16 %v739
  %v900 = vunpack.c.l.b16 %v740
  %v901 = vunpack.c.h.b16 %v740
  %v902 = vunpack.c.l.b16 %v741
  %v903 = vunpack.c.h.b16 %v741
  %v904 = vunpack.c.l.b16 %v742
  %v905 = vunpack.c.h.b16 %v742
  %v906 = vunpack.c.l.b16 %v743
  %v907 = vunpack.c.h.b16 %v743
  %v908 = vunpack.c.l.b16 %v744
  %v909 = vunpack.c.h.b16 %v744
  %v910 = vunpack.c.l.b16 %v745
  %v911 = vunpack.c.h.b16 %v745
  %v912 = vunpack.c.l.b16 %v746
  %v913 = vunpack.c.h.b16 %v746
  %v914 = vunpack.c.l.b16 %v747
  %v915 = vunpack.c.h.b16 %v747
  %v916 = vunpack.c.l.b16 %v748
  %v917 = vunpack.c.h.b16 %v748
  %v918 = vunpack.c.l.b16 %v749
  %v919 = vunpack.c.h.b16 %v749
  %v920 = vunpack.c.l.b16 %v750
  %v921 = vunpack.c.h.b16 %v750
  %v922 = vunpack.c.l.b16 %v751
  %v923 = vunpack.c.h.b16 %v751
  %v924 = vunpack.c.l.b16 %v752
  %v925 = vunpack.c.h.b16 %v752
  %v926 = vunpack.c.l.b16 %v753
  %v927 = vunpack.c.h.b16 %v753
  %v928 = vunpack.c.l.b16 %v754
  %v929 = vunpack.c.h.b16 %v754
  %v930 = vunpack.c.l.b16 %v755
  %v931 = vunpack.c.h.b16 %v755
  %v932 = vunpack.c.l.b16 %v756
  %v933 = vunpack.c.h.b16 %v756
  %v934 = vunpack.c.l.b16 %v757
  %v935 = vunpack.c.h.b16 %v757
  %v936 = vunpack.c.l.b16 %v758
  %v937 = vunpack.c.h.b16 %v758
  %v938 = vunpack.c.l.b16 %v759
  %v939 = vunpack.c.h.b16 %v759
  %v940 = vunpack.c.l.b16 %v760
  %v941 = vunpack.c.h.b16 %v760
  %v942 = vunpack.c.l.b16 %v761
  %v943 = vunpack.c.h.b16 %v761
  %v944 = vunpack.c.l.b16 %v762
  %v945 = vunpack.c.h.b16 %v762
  %v946 = vunpack.c.l.b16 %v763
  %v947 = vunpack.c.h.b16 %v763
  %v948 = vunpack.c.l.b16 %v764
  %v949 = vunpack.c.h.b16 %v764
  %v950 = vunpack.c.l.b16 %v765
  %v951 = vunpack.c.h.b16 %v765
  %v952 = vunpack.c.l.b16 %v766
  %v953 = vunpack.c.h.b16 %v766
  %v954 = vunpack.c.l.b16 %v767
  %v955 = vunpack.c.h.b16 %v767
  %v956 = vunpack.c.l.b16 %v768
  %v957 = vunpack.c.h.b16 %v768
  %v958 = vunpack.c.l.b16 %v769
  %v959 = vunpack.c.h.b16 %v769
  %v960 = vunpack.c.l.b16 %v770
  %v961 = vunpack.c.h.b16 %v770
  %v962 = vunpack.c.l.b16 %v771
  %v963 = vunpack.c.h.b16 %v771
  %v964 = vunpack.c.l.b16 %v772
  %v965 = vunpack.c.h.b16 %v772
  %v966 = vunpack.c.l.b16 %v773
  %v967 = vunpack.c.h.b16 %v773
  %v968 = vunpack.c.l.b16 %v774
  %v969 = vunpack.c.h.b16 %v774
  %v970 = vunpack.c.l.b16 %v775
  %v971 = vunpack.c.h.b16 %v775
  %v972 = vunpack.c.l.b16 %v776
  %v973 = vunpack.c.h.b16 %v776
  %v974 = vunpack.c.l.b16 %v777
  %v975 = vunpack.c.h.b16 %v777
  %v976 = vunpack.c.l.b16 %v778
  %v977 = vunpack.c.h.b16 %v778
  %v978 = vunpack.c.l.b16 %v779
  %v979 = vunpack.c.h.b16 %v779
  %v980 = vunpack.c.l.b16 %v780
  %v981 = vunpack.c.h.b16 %v780
  %v982 = vunpack.c.l.b16 %v781
  %v983 = vunpack.c.h.b16 %v781
  %v984 = vpack.c.b16 %v860, %v856
  %v985 = vpack.c.b16 %v861, %v857
  %v986 = vpack.c.b16 %v862, %v858
  %v987 = vpack.c.b16 %v863, %v859
  %v988 = vpack.c.b16 %v868, %v864
  %v989 = vpack.c.b16 %v869, %v865
  %v990 = vpack.c.b16 %v870, %v866
  %v991 = vpack.c.b16 %v871, %v867
  %v992 = vpack.c.b16 %v876, %v872
  %v993 = vpack.c.b16 %v877, %v873
  %v994 = vpack.c.b16 %v878, %v874
  %v995 = vpack.c.b16 %v879, %v875
  %v996 = vpack.c.b16 %v884, %v880
  %v997 = vpack.c.b16 %v885, %v881
  %v998 = vpack.c.b16 %v886, %v882
  %v999 = vpack.c.b16 %v887, %v883
  %v1000 = vpack.c.b16 %v892, %v888
  %v1001 = vpack.c.b16 %v893, %v889
  %v1002 = vpack.c.b16 %v894, %v890
  %v1003 = vpack.c.b16 %v895, %v891
  %v1004 = vpack.c.b16 %v900, %v896
  %v1005 = vpack.c.b16 %v901, %v897
  %v1006 = vpack.c.b16 %v902, %v898
  %v1007 = vpack.c.b16 %v903, %v899
  %v1008 = vpack.c.b16 %v908, %v904
  %v1009 = vpack.c.b16 %v909, %v905
  %v1010 = vpack.c.b16 %v910, %v906
  %v1011 = vpack.c.b16 %v911, %v907
  %v1012 = vpack.c.b16 %v916, %v912
  %v1013 = vpack.c.b16 %v917, %v913
  %v1014 = vpack.c.b16 %v918, %v914
  %v1015 = vpack.c.b16 %v919, %v915
  %v1016 = vpack.c.b16 %v924, %v920
  %v1017 = vpack.c.b16 %v925, %v921
  %v1018 = vpack.c.b16 %v926, %v922
  %v1019 = vpack.c.b16 %v927, %v923
  %v1020 = vpack.c.b16 %v932, %v928
  %v1021 = vpack.c.b16 %v933, %v929
  %v1022 = vpack.c.b16 %v934, %v930
  %v1023 = vpack.c.b16 %v935, %v931
  %v1024 = vpack.c.b16 %v940, %v936
  %v1025 = vpack.c.b16 %v941, %v937
  %v1026 = vpack.c.b16 %v942, %v938
  %v1027 = vpack.c.b16 %v943, %v939
  %v1028 = vpack.c.b16 %v948, %v944
  %v1029 = vpack.c.b16 %v949, %v945
  %v1030 = vpack.c.b16 %v950, %v946
  %v1031 = vpack.c.b16 %v951, %v947
  %v1032 = vpack.c.b16 %v956, %v952
  %v1033 = vpack.c.b16 %v957, %v953
  %v1034 = vpack.c.b16 %v958, %v954
  %v1035 = vpack.c.b16 %v959, %v955
  %v1036 = vpack.c.b16 %v964, %v960
  %v1037 = vpack.c.b16 %v965, %v961
  %v1038 = vpack.c.b16 %v966, %v962
  %v1039 = vpack.c.b16 %v967, %v963
  %v1040 = vpack.c.b16 %v972, %v968
  %v1041 = vpack.c.b16 %v973, %v969
  %v1042 = vpack.c.b16 %v974, %v970
  %v1043 = vpack.c.b16 %v975, %v971
  %v1044 = vpack.c.b16 %v980, %v976
  %v1045 = vpack.c.b16 %v981, %v977
  %v1046 = vpack.c.b16 %v982, %v978
  %v1047 = vpack.c.b16 %v983, %v979
  %1112 = vmatpush.bf16.msra.mxu0 %v1012
  %1113 = vmatpush.bf16.msra.mxu0 %v1008
  %1114 = vmatpush.bf16.msra.mxu0 %v1004
  %1115 = vmatpush.bf16.msra.mxu0 %v1000
  %1116 = vmatpush.bf16.msra.mxu0 %v996
  %1117 = vmatpush.bf16.msra.mxu0 %v992
  %1118 = vmatpush.bf16.msra.mxu0 %v988
  %1119 = vmatpush.bf16.msra.mxu0 %v984
  %1120 = vmatmul.bf16.gmra.mxu0 %v788
  %v1121 = vpop.f32.mrf.mxu0
  %v1122 = vadd.f32 %v113, %v1121
  %v1123 = vpop.f32.mrf.mxu0
  %v1124 = vadd.f32 %v113, %v1123
  %1125 = vdwg.mxu0
  %1126 = vmatpush.bf16.msra.mxu0 %v1044
  %1127 = vmatpush.bf16.msra.mxu0 %v1040
  %1128 = vmatpush.bf16.msra.mxu0 %v1036
  %1129 = vmatpush.bf16.msra.mxu0 %v1032
  %1130 = vmatpush.bf16.msra.mxu0 %v1028
  %1131 = vmatpush.bf16.msra.mxu0 %v1024
  %1132 = vmatpush.bf16.msra.mxu0 %v1020
  %1133 = vmatpush.bf16.msra.mxu0 %v1016
  %1134 = vmatmul.bf16.gmra.mxu0 %v789
  %v1135 = vpop.f32.mrf.mxu0
  %v1136 = vadd.f32 %v1122, %v1135
  %v1137 = vpop.f32.mrf.mxu0
  %v1138 = vadd.f32 %v1124, %v1137
  %1139 = vdwg.mxu0
  %1140 = vmatpush.bf16.msra.mxu0 %v1013
  %1141 = vmatpush.bf16.msra.mxu0 %v1009
  %1142 = vmatpush.bf16.msra.mxu0 %v1005
  %1143 = vmatpush.bf16.msra.mxu0 %v1001
  %1144 = vmatpush.bf16.msra.mxu0 %v997
  %1145 = vmatpush.bf16.msra.mxu0 %v993
  %1146 = vmatpush.bf16.msra.mxu0 %v989
  %1147 = vmatpush.bf16.msra.mxu0 %v985
  %1148 = vmatmul.bf16.gmra.mxu0 %v788
  %v1149 = vpop.f32.mrf.mxu0
  %v1150 = vadd.f32 %v114, %v1149
  %v1151 = vpop.f32.mrf.mxu0
  %v1152 = vadd.f32 %v114, %v1151
  %1153 = vdwg.mxu0
  %1154 = vmatpush.bf16.msra.mxu0 %v1045
  %1155 = vmatpush.bf16.msra.mxu0 %v1041
  %1156 = vmatpush.bf16.msra.mxu0 %v1037
  %1157 = vmatpush.bf16.msra.mxu0 %v1033
  %1158 = vmatpush.bf16.msra.mxu0 %v1029
  %1159 = vmatpush.bf16.msra.mxu0 %v1025
  %1160 = vmatpush.bf16.msra.mxu0 %v1021
  %1161 = vmatpush.bf16.msra.mxu0 %v1017
  %1162 = vmatmul.bf16.gmra.mxu0 %v789
  %v1163 = vpop.f32.mrf.mxu0
  %v1164 = vadd.f32 %v1150, %v1163
  %v1165 = vpop.f32.mrf.mxu0
  %v1166 = vadd.f32 %v1152, %v1165
  %1167 = vdwg.mxu0
  %1168 = vmatpush.bf16.msra.mxu0 %v1014
  %1169 = vmatpush.bf16.msra.mxu0 %v1010
  %1170 = vmatpush.bf16.msra.mxu0 %v1006
  %1171 = vmatpush.bf16.msra.mxu0 %v1002
  %1172 = vmatpush.bf16.msra.mxu0 %v998
  %1173 = vmatpush.bf16.msra.mxu0 %v994
  %1174 = vmatpush.bf16.msra.mxu0 %v990
  %1175 = vmatpush.bf16.msra.mxu0 %v986
  %1176 = vmatmul.bf16.gmra.mxu0 %v788
  %v1177 = vpop.f32.mrf.mxu0
  %v1178 = vadd.f32 %v115, %v1177
  %v1179 = vpop.f32.mrf.mxu0
  %v1180 = vadd.f32 %v115, %v1179
  %1181 = vdwg.mxu0
  %1182 = vmatpush.bf16.msra.mxu0 %v1046
  %1183 = vmatpush.bf16.msra.mxu0 %v1042
  %1184 = vmatpush.bf16.msra.mxu0 %v1038
  %1185 = vmatpush.bf16.msra.mxu0 %v1034
  %1186 = vmatpush.bf16.msra.mxu0 %v1030
  %1187 = vmatpush.bf16.msra.mxu0 %v1026
  %1188 = vmatpush.bf16.msra.mxu0 %v1022
  %1189 = vmatpush.bf16.msra.mxu0 %v1018
  %1190 = vmatmul.bf16.gmra.mxu0 %v789
  %v1191 = vpop.f32.mrf.mxu0
  %v1192 = vadd.f32 %v1178, %v1191
  %v1193 = vpop.f32.mrf.mxu0
  %v1194 = vadd.f32 %v1180, %v1193
  %1195 = vdwg.mxu0
  %1196 = vmatpush.bf16.msra.mxu0 %v1015
  %1197 = vmatpush.bf16.msra.mxu0 %v1011
  %1198 = vmatpush.bf16.msra.mxu0 %v1007
  %1199 = vmatpush.bf16.msra.mxu0 %v1003
  %1200 = vmatpush.bf16.msra.mxu0 %v999
  %1201 = vmatpush.bf16.msra.mxu0 %v995
  %1202 = vmatpush.bf16.msra.mxu0 %v991
  %1203 = vmatpush.bf16.msra.mxu0 %v987
  %1204 = vmatmul.bf16.gmra.mxu0 %v788
  %v1205 = vpop.f32.mrf.mxu0
  %v1206 = vadd.f32 %v116, %v1205
  %v1207 = vpop.f32.mrf.mxu0
  %v1208 = vadd.f32 %v116, %v1207
  %1209 = vdwg.mxu0
  %1210 = vmatpush.bf16.msra.mxu0 %v1047
  %1211 = vmatpush.bf16.msra.mxu0 %v1043
  %1212 = vmatpush.bf16.msra.mxu0 %v1039
  %1213 = vmatpush.bf16.msra.mxu0 %v1035
  %1214 = vmatpush.bf16.msra.mxu0 %v1031
  %1215 = vmatpush.bf16.msra.mxu0 %v1027
  %1216 = vmatpush.bf16.msra.mxu0 %v1023
  %1217 = vmatpush.bf16.msra.mxu0 %v1019
  %1218 = vmatmul.bf16.gmra.mxu0 %v789
  %v1219 = vpop.f32.mrf.mxu0
  %v1220 = vadd.f32 %v1206, %v1219
  %v1221 = vpop.f32.mrf.mxu0
  %v1222 = vadd.f32 %v1208, %v1221
  %1223 = vdwg.mxu0
  %v1224 = vxor.u32 %v1136, 2147483648
  %v1225 = vxor.u32 %v1138, 2147483648
  %v1226 = vmul.f32 %v1224, 1.442695
  %v1227 = vpow.pop %v1226
  %v1228 = vmul.f32 %v1225, 1.442695
  %v1229 = vpow.pop %v1228
  %v1230 = vadd.f32 %v1227, 1.0
  %v1231 = vadd.f32 %v1229, 1.0
  %v1232 = vrcp.pop %v1230
  %v1233 = vmul.f32 %v1230, %v1232
  %v1234 = vsub.f32 1.0, %v1233
  %v1235 = vmul.f32 %v1232, %v1234
  %v1236 = vadd.f32 %v1232, %v1235
  %vm1237 = vweird.f32 %v1230
  %vm1238 = vweird.f32 %v1232
  %vm1239 = vmor %vm1237, %vm1238
  %v1240 = vsel %vm1239, %v1232, %v1236
  %v1241 = vand.u32 2147483647, %v1230
  %vm1242 = vcmp.eq.f32.partialorder %v1241, 8.507059e+37
  %v1243 = vand.u32 %v1230, 2147483648
  %v1244 = vor.u32 1.1754944e-38, %v1243
  %v1245 = vsel %vm1242, %v1244, %v1240
  %v1246 = vmul.f32 1.0, %v1245
  %v1247 = vrcp.pop %v1231
  %v1248 = vmul.f32 %v1231, %v1247
  %v1249 = vsub.f32 1.0, %v1248
  %v1250 = vmul.f32 %v1247, %v1249
  %v1251 = vadd.f32 %v1247, %v1250
  %vm1252 = vweird.f32 %v1231
  %vm1253 = vweird.f32 %v1247
  %vm1254 = vmor %vm1252, %vm1253
  %v1255 = vsel %vm1254, %v1247, %v1251
  %v1256 = vand.u32 2147483647, %v1231
  %vm1257 = vcmp.eq.f32.partialorder %v1256, 8.507059e+37
  %v1258 = vand.u32 %v1231, 2147483648
  %v1259 = vor.u32 1.1754944e-38, %v1258
  %v1260 = vsel %vm1257, %v1259, %v1255
  %v1261 = vmul.f32 1.0, %v1260
  %v1262 = vxor.u32 %v1164, 2147483648
  %v1263 = vxor.u32 %v1166, 2147483648
  %v1264 = vmul.f32 %v1262, 1.442695
  %v1265 = vpow.pop %v1264
  %v1266 = vmul.f32 %v1263, 1.442695
  %v1267 = vpow.pop %v1266
  %v1268 = vadd.f32 %v1265, 1.0
  %v1269 = vadd.f32 %v1267, 1.0
  %v1270 = vrcp.pop %v1268
  %v1271 = vmul.f32 %v1268, %v1270
  %v1272 = vsub.f32 1.0, %v1271
  %v1273 = vmul.f32 %v1270, %v1272
  %v1274 = vadd.f32 %v1270, %v1273
  %vm1275 = vweird.f32 %v1268
  %vm1276 = vweird.f32 %v1270
  %vm1277 = vmor %vm1275, %vm1276
  %v1278 = vsel %vm1277, %v1270, %v1274
  %v1279 = vand.u32 2147483647, %v1268
  %vm1280 = vcmp.eq.f32.partialorder %v1279, 8.507059e+37
  %v1281 = vand.u32 %v1268, 2147483648
  %v1282 = vor.u32 1.1754944e-38, %v1281
  %v1283 = vsel %vm1280, %v1282, %v1278
  %v1284 = vmul.f32 1.0, %v1283
  %v1285 = vrcp.pop %v1269
  %v1286 = vmul.f32 %v1269, %v1285
  %v1287 = vsub.f32 1.0, %v1286
  %v1288 = vmul.f32 %v1285, %v1287
  %v1289 = vadd.f32 %v1285, %v1288
  %vm1290 = vweird.f32 %v1269
  %vm1291 = vweird.f32 %v1285
  %vm1292 = vmor %vm1290, %vm1291
  %v1293 = vsel %vm1292, %v1285, %v1289
  %v1294 = vand.u32 2147483647, %v1269
  %vm1295 = vcmp.eq.f32.partialorder %v1294, 8.507059e+37
  %v1296 = vand.u32 %v1269, 2147483648
  %v1297 = vor.u32 1.1754944e-38, %v1296
  %v1298 = vsel %vm1295, %v1297, %v1293
  %v1299 = vmul.f32 1.0, %v1298
  %v1300 = vtanh.pop %v1192
  %v1301 = vtanh.pop %v1194
  %v1302 = vxor.u32 %v1220, 2147483648
  %v1303 = vxor.u32 %v1222, 2147483648
  %v1304 = vmul.f32 %v1302, 1.442695
  %v1305 = vpow.pop %v1304
  %v1306 = vmul.f32 %v1303, 1.442695
  %v1307 = vpow.pop %v1306
  %v1308 = vadd.f32 %v1305, 1.0
  %v1309 = vadd.f32 %v1307, 1.0
  %v1310 = vrcp.pop %v1308
  %v1311 = vmul.f32 %v1308, %v1310
  %v1312 = vsub.f32 1.0, %v1311
  %v1313 = vmul.f32 %v1310, %v1312
  %v1314 = vadd.f32 %v1310, %v1313
  %vm1315 = vweird.f32 %v1308
  %vm1316 = vweird.f32 %v1310
  %vm1317 = vmor %vm1315, %vm1316
  %v1318 = vsel %vm1317, %v1310, %v1314
  %v1319 = vand.u32 2147483647, %v1308
  %vm1320 = vcmp.eq.f32.partialorder %v1319, 8.507059e+37
  %v1321 = vand.u32 %v1308, 2147483648
  %v1322 = vor.u32 1.1754944e-38, %v1321
  %v1323 = vsel %vm1320, %v1322, %v1318
  %v1324 = vmul.f32 1.0, %v1323
  %v1325 = vrcp.pop %v1309
  %v1326 = vmul.f32 %v1309, %v1325
  %v1327 = vsub.f32 1.0, %v1326
  %v1328 = vmul.f32 %v1325, %v1327
  %v1329 = vadd.f32 %v1325, %v1328
  %vm1330 = vweird.f32 %v1309
  %vm1331 = vweird.f32 %v1325
  %vm1332 = vmor %vm1330, %vm1331
  %v1333 = vsel %vm1332, %v1325, %v1329
  %v1334 = vand.u32 2147483647, %v1309
  %vm1335 = vcmp.eq.f32.partialorder %v1334, 8.507059e+37
  %v1336 = vand.u32 %v1309, 2147483648
  %v1337 = vor.u32 1.1754944e-38, %v1336
  %v1338 = vsel %vm1335, %v1337, %v1333
  %v1339 = vmul.f32 1.0, %v1338
  %v1340 = vld [vmem:[#allocation3] sm:$0xff]
  %v1341 = vld [vmem:[#allocation3 + $0x8] sm:$0xff]
  %v1342 = vmul.f32 %v1284, %v1340
  %v1343 = vmul.f32 %v1299, %v1341
  %v1344 = vmul.f32 %v1246, %v1300
  %v1345 = vmul.f32 %v1261, %v1301
  %v1346 = vadd.f32 %v1342, %v1344
  %v1347 = vadd.f32 %v1343, %v1345
  %v1348 = vtanh.pop %v1346
  %v1349 = vtanh.pop %v1347
  %v1350 = vmul.f32 %v1324, %v1348
  %v1351 = vmul.f32 %v1339, %v1349
  %1352 = vst [vmem:[#allocation3] sm:$0xff] %v1346
  %1353 = vst [vmem:[#allocation3 + $0x8] sm:$0xff] %v1347
  %v1354 = vpack.c.bf16 %v1350, %v1350
  %v1355 = vpack.c.bf16 %v1351, %v1351
  %1356 = vst [vmem:[#allocation2 + $0x4] sm:$0xf] %v1354
  %1357 = vst [vmem:[#allocation2 + $0xc] sm:$0xf] %v1355
  %s1358 = scalar_lea.vmem %s0, 32
  %v1359 = vld [vmem:[%s1358] sm:$0xff]
  %v1360 = vld [vmem:[%s1358 + $0x8] sm:$0xff]
  %1361 = vset.pattern.permute.xlu0 0
  %1362 = vperm.xlu0 %1361, %v1359
  %v1363 = vpop.permute.xlu0 %1362
  %1364 = vset.pattern.permute.xlu0 0
  %1365 = vperm.xlu0 %1364, %v1360
  %v1366 = vpop.permute.xlu0 %1365
  %vm1367 = vcmp.eq.s32.totalorder %v26, %v1363
  %vm1368 = vcmp.eq.s32.totalorder %v26, %v1366
  %v1369 = vsel %vm1367, 1, 0
  %v1370 = vsel %vm1368, 1, 0
  %v1371 = vcvt.s32.f32 %v1369
  %v1372 = vcvt.s32.f32 %v1370
  %v1373 = vpack.c.bf16 %v1371, %v1371
  %v1374 = vpack.c.bf16 %v1372, %v1372
  %1375 = vst [vmem:[#allocation2] sm:$0xf] %v1373
  %1376 = vst [vmem:[#allocation2 + $0x8] sm:$0xf] %v1374
  %v1377 = vld [vmem:[#allocation2] sm:$0xff]
  %v1378 = vld [vmem:[#allocation2 + $0x8] sm:$0xff]
  %v1379 = vld [vmem:[%s1] sm:$0xff]
  %v1380 = vld [vmem:[%s1 + $0x8] sm:$0xff]
  %v1381 = vld [vmem:[%s1 + $0x10] sm:$0xff]
  %v1382 = vld [vmem:[%s1 + $0x18] sm:$0xff]
  %v1383 = vld [vmem:[%s1 + $0x20] sm:$0xff]
  %v1384 = vld [vmem:[%s1 + $0x28] sm:$0xff]
  %v1385 = vld [vmem:[%s1 + $0x30] sm:$0xff]
  %v1386 = vld [vmem:[%s1 + $0x38] sm:$0xff]
  %v1387 = vld [vmem:[%s1 + $0x40] sm:$0xff]
  %v1388 = vld [vmem:[%s1 + $0x48] sm:$0xff]
  %v1389 = vld [vmem:[%s1 + $0x50] sm:$0xff]
  %v1390 = vld [vmem:[%s1 + $0x58] sm:$0xff]
  %v1391 = vld [vmem:[%s1 + $0x60] sm:$0xff]
  %v1392 = vld [vmem:[%s1 + $0x68] sm:$0xff]
  %v1393 = vld [vmem:[%s1 + $0x70] sm:$0xff]
  %v1394 = vld [vmem:[%s1 + $0x78] sm:$0xff]
  %v1395 = vld [vmem:[%s1 + $0x80] sm:$0xff]
  %v1396 = vld [vmem:[%s1 + $0x88] sm:$0xff]
  %v1397 = vld [vmem:[%s1 + $0x90] sm:$0xff]
  %v1398 = vld [vmem:[%s1 + $0x98] sm:$0xff]
  %v1399 = vld [vmem:[%s1 + $0xa0] sm:$0xff]
  %v1400 = vld [vmem:[%s1 + $0xa8] sm:$0xff]
  %v1401 = vld [vmem:[%s1 + $0xb0] sm:$0xff]
  %v1402 = vld [vmem:[%s1 + $0xb8] sm:$0xff]
  %v1403 = vld [vmem:[%s1 + $0xc0] sm:$0xff]
  %v1404 = vld [vmem:[%s1 + $0xc8] sm:$0xff]
  %v1405 = vld [vmem:[%s1 + $0xd0] sm:$0xff]
  %v1406 = vld [vmem:[%s1 + $0xd8] sm:$0xff]
  %v1407 = vld [vmem:[%s1 + $0xe0] sm:$0xff]
  %v1408 = vld [vmem:[%s1 + $0xe8] sm:$0xff]
  %v1409 = vld [vmem:[%s1 + $0xf0] sm:$0xff]
  %v1410 = vld [vmem:[%s1 + $0xf8] sm:$0xff]
  %v1411 = vld [vmem:[%s1 + $0x100] sm:$0xff]
  %v1412 = vld [vmem:[%s1 + $0x108] sm:$0xff]
  %v1413 = vld [vmem:[%s1 + $0x110] sm:$0xff]
  %v1414 = vld [vmem:[%s1 + $0x118] sm:$0xff]
  %v1415 = vld [vmem:[%s1 + $0x120] sm:$0xff]
  %v1416 = vld [vmem:[%s1 + $0x128] sm:$0xff]
  %v1417 = vld [vmem:[%s1 + $0x130] sm:$0xff]
  %v1418 = vld [vmem:[%s1 + $0x138] sm:$0xff]
  %v1419 = vld [vmem:[%s1 + $0x140] sm:$0xff]
  %v1420 = vld [vmem:[%s1 + $0x148] sm:$0xff]
  %v1421 = vld [vmem:[%s1 + $0x150] sm:$0xff]
  %v1422 = vld [vmem:[%s1 + $0x158] sm:$0xff]
  %v1423 = vld [vmem:[%s1 + $0x160] sm:$0xff]
  %v1424 = vld [vmem:[%s1 + $0x168] sm:$0xff]
  %v1425 = vld [vmem:[%s1 + $0x170] sm:$0xff]
  %v1426 = vld [vmem:[%s1 + $0x178] sm:$0xff]
  %v1427 = vld [vmem:[%s1 + $0x180] sm:$0xff]
  %v1428 = vld [vmem:[%s1 + $0x188] sm:$0xff]
  %v1429 = vld [vmem:[%s1 + $0x190] sm:$0xff]
  %v1430 = vld [vmem:[%s1 + $0x198] sm:$0xff]
  %v1431 = vld [vmem:[%s1 + $0x1a0] sm:$0xff]
  %v1432 = vld [vmem:[%s1 + $0x1a8] sm:$0xff]
  %v1433 = vld [vmem:[%s1 + $0x1b0] sm:$0xff]
  %v1434 = vld [vmem:[%s1 + $0x1b8] sm:$0xff]
  %v1435 = vld [vmem:[%s1 + $0x1c0] sm:$0xff]
  %v1436 = vld [vmem:[%s1 + $0x1c8] sm:$0xff]
  %v1437 = vld [vmem:[%s1 + $0x1d0] sm:$0xff]
  %v1438 = vld [vmem:[%s1 + $0x1d8] sm:$0xff]
  %v1439 = vld [vmem:[%s1 + $0x1e0] sm:$0xff]
  %v1440 = vld [vmem:[%s1 + $0x1e8] sm:$0xff]
  %v1441 = vld [vmem:[%s1 + $0x1f0] sm:$0xff]
  %v1442 = vld [vmem:[%s1 + $0x1f8] sm:$0xff]
  %v1445 = vunpack.c.l.b16 %v1377
  %v1446 = vunpack.c.h.b16 %v1377
  %v1447 = vunpack.c.l.b16 %v1378
  %v1448 = vunpack.c.h.b16 %v1378
  %v1449 = vpack.c.b16 %v1447, %v1445
  %v1450 = vpack.c.b16 %v1448, %v1446
  %v1517 = vunpack.c.l.b16 %v1379
  %v1518 = vunpack.c.h.b16 %v1379
  %v1519 = vunpack.c.l.b16 %v1380
  %v1520 = vunpack.c.h.b16 %v1380
  %v1521 = vunpack.c.l.b16 %v1381
  %v1522 = vunpack.c.h.b16 %v1381
  %v1523 = vunpack.c.l.b16 %v1382
  %v1524 = vunpack.c.h.b16 %v1382
  %v1525 = vunpack.c.l.b16 %v1383
  %v1526 = vunpack.c.h.b16 %v1383
  %v1527 = vunpack.c.l.b16 %v1384
  %v1528 = vunpack.c.h.b16 %v1384
  %v1529 = vunpack.c.l.b16 %v1385
  %v1530 = vunpack.c.h.b16 %v1385
  %v1531 = vunpack.c.l.b16 %v1386
  %v1532 = vunpack.c.h.b16 %v1386
  %v1533 = vunpack.c.l.b16 %v1387
  %v1534 = vunpack.c.h.b16 %v1387
  %v1535 = vunpack.c.l.b16 %v1388
  %v1536 = vunpack.c.h.b16 %v1388
  %v1537 = vunpack.c.l.b16 %v1389
  %v1538 = vunpack.c.h.b16 %v1389
  %v1539 = vunpack.c.l.b16 %v1390
  %v1540 = vunpack.c.h.b16 %v1390
  %v1541 = vunpack.c.l.b16 %v1391
  %v1542 = vunpack.c.h.b16 %v1391
  %v1543 = vunpack.c.l.b16 %v1392
  %v1544 = vunpack.c.h.b16 %v1392
  %v1545 = vunpack.c.l.b16 %v1393
  %v1546 = vunpack.c.h.b16 %v1393
  %v1547 = vunpack.c.l.b16 %v1394
  %v1548 = vunpack.c.h.b16 %v1394
  %v1549 = vunpack.c.l.b16 %v1395
  %v1550 = vunpack.c.h.b16 %v1395
  %v1551 = vunpack.c.l.b16 %v1396
  %v1552 = vunpack.c.h.b16 %v1396
  %v1553 = vunpack.c.l.b16 %v1397
  %v1554 = vunpack.c.h.b16 %v1397
  %v1555 = vunpack.c.l.b16 %v1398
  %v1556 = vunpack.c.h.b16 %v1398
  %v1557 = vunpack.c.l.b16 %v1399
  %v1558 = vunpack.c.h.b16 %v1399
  %v1559 = vunpack.c.l.b16 %v1400
  %v1560 = vunpack.c.h.b16 %v1400
  %v1561 = vunpack.c.l.b16 %v1401
  %v1562 = vunpack.c.h.b16 %v1401
  %v1563 = vunpack.c.l.b16 %v1402
  %v1564 = vunpack.c.h.b16 %v1402
  %v1565 = vunpack.c.l.b16 %v1403
  %v1566 = vunpack.c.h.b16 %v1403
  %v1567 = vunpack.c.l.b16 %v1404
  %v1568 = vunpack.c.h.b16 %v1404
  %v1569 = vunpack.c.l.b16 %v1405
  %v1570 = vunpack.c.h.b16 %v1405
  %v1571 = vunpack.c.l.b16 %v1406
  %v1572 = vunpack.c.h.b16 %v1406
  %v1573 = vunpack.c.l.b16 %v1407
  %v1574 = vunpack.c.h.b16 %v1407
  %v1575 = vunpack.c.l.b16 %v1408
  %v1576 = vunpack.c.h.b16 %v1408
  %v1577 = vunpack.c.l.b16 %v1409
  %v1578 = vunpack.c.h.b16 %v1409
  %v1579 = vunpack.c.l.b16 %v1410
  %v1580 = vunpack.c.h.b16 %v1410
  %v1581 = vunpack.c.l.b16 %v1411
  %v1582 = vunpack.c.h.b16 %v1411
  %v1583 = vunpack.c.l.b16 %v1412
  %v1584 = vunpack.c.h.b16 %v1412
  %v1585 = vunpack.c.l.b16 %v1413
  %v1586 = vunpack.c.h.b16 %v1413
  %v1587 = vunpack.c.l.b16 %v1414
  %v1588 = vunpack.c.h.b16 %v1414
  %v1589 = vunpack.c.l.b16 %v1415
  %v1590 = vunpack.c.h.b16 %v1415
  %v1591 = vunpack.c.l.b16 %v1416
  %v1592 = vunpack.c.h.b16 %v1416
  %v1593 = vunpack.c.l.b16 %v1417
  %v1594 = vunpack.c.h.b16 %v1417
  %v1595 = vunpack.c.l.b16 %v1418
  %v1596 = vunpack.c.h.b16 %v1418
  %v1597 = vunpack.c.l.b16 %v1419
  %v1598 = vunpack.c.h.b16 %v1419
  %v1599 = vunpack.c.l.b16 %v1420
  %v1600 = vunpack.c.h.b16 %v1420
  %v1601 = vunpack.c.l.b16 %v1421
  %v1602 = vunpack.c.h.b16 %v1421
  %v1603 = vunpack.c.l.b16 %v1422
  %v1604 = vunpack.c.h.b16 %v1422
  %v1605 = vunpack.c.l.b16 %v1423
  %v1606 = vunpack.c.h.b16 %v1423
  %v1607 = vunpack.c.l.b16 %v1424
  %v1608 = vunpack.c.h.b16 %v1424
  %v1609 = vunpack.c.l.b16 %v1425
  %v1610 = vunpack.c.h.b16 %v1425
  %v1611 = vunpack.c.l.b16 %v1426
  %v1612 = vunpack.c.h.b16 %v1426
  %v1613 = vunpack.c.l.b16 %v1427
  %v1614 = vunpack.c.h.b16 %v1427
  %v1615 = vunpack.c.l.b16 %v1428
  %v1616 = vunpack.c.h.b16 %v1428
  %v1617 = vunpack.c.l.b16 %v1429
  %v1618 = vunpack.c.h.b16 %v1429
  %v1619 = vunpack.c.l.b16 %v1430
  %v1620 = vunpack.c.h.b16 %v1430
  %v1621 = vunpack.c.l.b16 %v1431
  %v1622 = vunpack.c.h.b16 %v1431
  %v1623 = vunpack.c.l.b16 %v1432
  %v1624 = vunpack.c.h.b16 %v1432
  %v1625 = vunpack.c.l.b16 %v1433
  %v1626 = vunpack.c.h.b16 %v1433
  %v1627 = vunpack.c.l.b16 %v1434
  %v1628 = vunpack.c.h.b16 %v1434
  %v1629 = vunpack.c.l.b16 %v1435
  %v1630 = vunpack.c.h.b16 %v1435
  %v1631 = vunpack.c.l.b16 %v1436
  %v1632 = vunpack.c.h.b16 %v1436
  %v1633 = vunpack.c.l.b16 %v1437
  %v1634 = vunpack.c.h.b16 %v1437
  %v1635 = vunpack.c.l.b16 %v1438
  %v1636 = vunpack.c.h.b16 %v1438
  %v1637 = vunpack.c.l.b16 %v1439
  %v1638 = vunpack.c.h.b16 %v1439
  %v1639 = vunpack.c.l.b16 %v1440
  %v1640 = vunpack.c.h.b16 %v1440
  %v1641 = vunpack.c.l.b16 %v1441
  %v1642 = vunpack.c.h.b16 %v1441
  %v1643 = vunpack.c.l.b16 %v1442
  %v1644 = vunpack.c.h.b16 %v1442
  %v1645 = vpack.c.b16 %v1521, %v1517
  %v1646 = vpack.c.b16 %v1522, %v1518
  %v1647 = vpack.c.b16 %v1523, %v1519
  %v1648 = vpack.c.b16 %v1524, %v1520
  %v1649 = vpack.c.b16 %v1529, %v1525
  %v1650 = vpack.c.b16 %v1530, %v1526
  %v1651 = vpack.c.b16 %v1531, %v1527
  %v1652 = vpack.c.b16 %v1532, %v1528
  %v1653 = vpack.c.b16 %v1537, %v1533
  %v1654 = vpack.c.b16 %v1538, %v1534
  %v1655 = vpack.c.b16 %v1539, %v1535
  %v1656 = vpack.c.b16 %v1540, %v1536
  %v1657 = vpack.c.b16 %v1545, %v1541
  %v1658 = vpack.c.b16 %v1546, %v1542
  %v1659 = vpack.c.b16 %v1547, %v1543
  %v1660 = vpack.c.b16 %v1548, %v1544
  %v1661 = vpack.c.b16 %v1553, %v1549
  %v1662 = vpack.c.b16 %v1554, %v1550
  %v1663 = vpack.c.b16 %v1555, %v1551
  %v1664 = vpack.c.b16 %v1556, %v1552
  %v1665 = vpack.c.b16 %v1561, %v1557
  %v1666 = vpack.c.b16 %v1562, %v1558
  %v1667 = vpack.c.b16 %v1563, %v1559
  %v1668 = vpack.c.b16 %v1564, %v1560
  %v1669 = vpack.c.b16 %v1569, %v1565
  %v1670 = vpack.c.b16 %v1570, %v1566
  %v1671 = vpack.c.b16 %v1571, %v1567
  %v1672 = vpack.c.b16 %v1572, %v1568
  %v1673 = vpack.c.b16 %v1577, %v1573
  %v1674 = vpack.c.b16 %v1578, %v1574
  %v1675 = vpack.c.b16 %v1579, %v1575
  %v1676 = vpack.c.b16 %v1580, %v1576
  %v1677 = vpack.c.b16 %v1585, %v1581
  %v1678 = vpack.c.b16 %v1586, %v1582
  %v1679 = vpack.c.b16 %v1587, %v1583
  %v1680 = vpack.c.b16 %v1588, %v1584
  %v1681 = vpack.c.b16 %v1593, %v1589
  %v1682 = vpack.c.b16 %v1594, %v1590
  %v1683 = vpack.c.b16 %v1595, %v1591
  %v1684 = vpack.c.b16 %v1596, %v1592
  %v1685 = vpack.c.b16 %v1601, %v1597
  %v1686 = vpack.c.b16 %v1602, %v1598
  %v1687 = vpack.c.b16 %v1603, %v1599
  %v1688 = vpack.c.b16 %v1604, %v1600
  %v1689 = vpack.c.b16 %v1609, %v1605
  %v1690 = vpack.c.b16 %v1610, %v1606
  %v1691 = vpack.c.b16 %v1611, %v1607
  %v1692 = vpack.c.b16 %v1612, %v1608
  %v1693 = vpack.c.b16 %v1617, %v1613
  %v1694 = vpack.c.b16 %v1618, %v1614
  %v1695 = vpack.c.b16 %v1619, %v1615
  %v1696 = vpack.c.b16 %v1620, %v1616
  %v1697 = vpack.c.b16 %v1625, %v1621
  %v1698 = vpack.c.b16 %v1626, %v1622
  %v1699 = vpack.c.b16 %v1627, %v1623
  %v1700 = vpack.c.b16 %v1628, %v1624
  %v1701 = vpack.c.b16 %v1633, %v1629
  %v1702 = vpack.c.b16 %v1634, %v1630
  %v1703 = vpack.c.b16 %v1635, %v1631
  %v1704 = vpack.c.b16 %v1636, %v1632
  %v1705 = vpack.c.b16 %v1641, %v1637
  %v1706 = vpack.c.b16 %v1642, %v1638
  %v1707 = vpack.c.b16 %v1643, %v1639
  %v1708 = vpack.c.b16 %v1644, %v1640
  %1773 = vmatpush.bf16.msra.mxu0 %v1673
  %1774 = vmatpush.bf16.msra.mxu0 %v1669
  %1775 = vmatpush.bf16.msra.mxu0 %v1665
  %1776 = vmatpush.bf16.msra.mxu0 %v1661
  %1777 = vmatpush.bf16.msra.mxu0 %v1657
  %1778 = vmatpush.bf16.msra.mxu0 %v1653
  %1779 = vmatpush.bf16.msra.mxu0 %v1649
  %1780 = vmatpush.bf16.msra.mxu0 %v1645
  %1781 = vmatmul.bf16.gmra.mxu0 %v1449
  %v1782 = vpop.f32.mrf.mxu0
  %v1783 = vadd.f32 %v113, %v1782
  %v1784 = vpop.f32.mrf.mxu0
  %v1785 = vadd.f32 %v113, %v1784
  %1786 = vdwg.mxu0
  %1787 = vmatpush.bf16.msra.mxu0 %v1705
  %1788 = vmatpush.bf16.msra.mxu0 %v1701
  %1789 = vmatpush.bf16.msra.mxu0 %v1697
  %1790 = vmatpush.bf16.msra.mxu0 %v1693
  %1791 = vmatpush.bf16.msra.mxu0 %v1689
  %1792 = vmatpush.bf16.msra.mxu0 %v1685
  %1793 = vmatpush.bf16.msra.mxu0 %v1681
  %1794 = vmatpush.bf16.msra.mxu0 %v1677
  %1795 = vmatmul.bf16.gmra.mxu0 %v1450
  %v1796 = vpop.f32.mrf.mxu0
  %v1797 = vadd.f32 %v1783, %v1796
  %v1798 = vpop.f32.mrf.mxu0
  %v1799 = vadd.f32 %v1785, %v1798
  %1800 = vdwg.mxu0
  %1801 = vmatpush.bf16.msra.mxu0 %v1674
  %1802 = vmatpush.bf16.msra.mxu0 %v1670
  %1803 = vmatpush.bf16.msra.mxu0 %v1666
  %1804 = vmatpush.bf16.msra.mxu0 %v1662
  %1805 = vmatpush.bf16.msra.mxu0 %v1658
  %1806 = vmatpush.bf16.msra.mxu0 %v1654
  %1807 = vmatpush.bf16.msra.mxu0 %v1650
  %1808 = vmatpush.bf16.msra.mxu0 %v1646
  %1809 = vmatmul.bf16.gmra.mxu0 %v1449
  %v1810 = vpop.f32.mrf.mxu0
  %v1811 = vadd.f32 %v114, %v1810
  %v1812 = vpop.f32.mrf.mxu0
  %v1813 = vadd.f32 %v114, %v1812
  %1814 = vdwg.mxu0
  %1815 = vmatpush.bf16.msra.mxu0 %v1706
  %1816 = vmatpush.bf16.msra.mxu0 %v1702
  %1817 = vmatpush.bf16.msra.mxu0 %v1698
  %1818 = vmatpush.bf16.msra.mxu0 %v1694
  %1819 = vmatpush.bf16.msra.mxu0 %v1690
  %1820 = vmatpush.bf16.msra.mxu0 %v1686
  %1821 = vmatpush.bf16.msra.mxu0 %v1682
  %1822 = vmatpush.bf16.msra.mxu0 %v1678
  %1823 = vmatmul.bf16.gmra.mxu0 %v1450
  %v1824 = vpop.f32.mrf.mxu0
  %v1825 = vadd.f32 %v1811, %v1824
  %v1826 = vpop.f32.mrf.mxu0
  %v1827 = vadd.f32 %v1813, %v1826
  %1828 = vdwg.mxu0
  %1829 = vmatpush.bf16.msra.mxu0 %v1675
  %1830 = vmatpush.bf16.msra.mxu0 %v1671
  %1831 = vmatpush.bf16.msra.mxu0 %v1667
  %1832 = vmatpush.bf16.msra.mxu0 %v1663
  %1833 = vmatpush.bf16.msra.mxu0 %v1659
  %1834 = vmatpush.bf16.msra.mxu0 %v1655
  %1835 = vmatpush.bf16.msra.mxu0 %v1651
  %1836 = vmatpush.bf16.msra.mxu0 %v1647
  %1837 = vmatmul.bf16.gmra.mxu0 %v1449
  %v1838 = vpop.f32.mrf.mxu0
  %v1839 = vadd.f32 %v115, %v1838
  %v1840 = vpop.f32.mrf.mxu0
  %v1841 = vadd.f32 %v115, %v1840
  %1842 = vdwg.mxu0
  %1843 = vmatpush.bf16.msra.mxu0 %v1707
  %1844 = vmatpush.bf16.msra.mxu0 %v1703
  %1845 = vmatpush.bf16.msra.mxu0 %v1699
  %1846 = vmatpush.bf16.msra.mxu0 %v1695
  %1847 = vmatpush.bf16.msra.mxu0 %v1691
  %1848 = vmatpush.bf16.msra.mxu0 %v1687
  %1849 = vmatpush.bf16.msra.mxu0 %v1683
  %1850 = vmatpush.bf16.msra.mxu0 %v1679
  %1851 = vmatmul.bf16.gmra.mxu0 %v1450
  %v1852 = vpop.f32.mrf.mxu0
  %v1853 = vadd.f32 %v1839, %v1852
  %v1854 = vpop.f32.mrf.mxu0
  %v1855 = vadd.f32 %v1841, %v1854
  %1856 = vdwg.mxu0
  %1857 = vmatpush.bf16.msra.mxu0 %v1676
  %1858 = vmatpush.bf16.msra.mxu0 %v1672
  %1859 = vmatpush.bf16.msra.mxu0 %v1668
  %1860 = vmatpush.bf16.msra.mxu0 %v1664
  %1861 = vmatpush.bf16.msra.mxu0 %v1660
  %1862 = vmatpush.bf16.msra.mxu0 %v1656
  %1863 = vmatpush.bf16.msra.mxu0 %v1652
  %1864 = vmatpush.bf16.msra.mxu0 %v1648
  %1865 = vmatmul.bf16.gmra.mxu0 %v1449
  %v1866 = vpop.f32.mrf.mxu0
  %v1867 = vadd.f32 %v116, %v1866
  %v1868 = vpop.f32.mrf.mxu0
  %v1869 = vadd.f32 %v116, %v1868
  %1870 = vdwg.mxu0
  %1871 = vmatpush.bf16.msra.mxu0 %v1708
  %1872 = vmatpush.bf16.msra.mxu0 %v1704
  %1873 = vmatpush.bf16.msra.mxu0 %v1700
  %1874 = vmatpush.bf16.msra.mxu0 %v1696
  %1875 = vmatpush.bf16.msra.mxu0 %v1692
  %1876 = vmatpush.bf16.msra.mxu0 %v1688
  %1877 = vmatpush.bf16.msra.mxu0 %v1684
  %1878 = vmatpush.bf16.msra.mxu0 %v1680
  %1879 = vmatmul.bf16.gmra.mxu0 %v1450
  %v1880 = vpop.f32.mrf.mxu0
  %v1881 = vadd.f32 %v1867, %v1880
  %v1882 = vpop.f32.mrf.mxu0
  %v1883 = vadd.f32 %v1869, %v1882
  %1884 = vdwg.mxu0
  %v1885 = vxor.u32 %v1797, 2147483648
  %v1886 = vxor.u32 %v1799, 2147483648
  %v1887 = vmul.f32 %v1885, 1.442695
  %v1888 = vpow.pop %v1887
  %v1889 = vmul.f32 %v1886, 1.442695
  %v1890 = vpow.pop %v1889
  %v1891 = vadd.f32 %v1888, 1.0
  %v1892 = vadd.f32 %v1890, 1.0
  %v1893 = vrcp.pop %v1891
  %v1894 = vmul.f32 %v1891, %v1893
  %v1895 = vsub.f32 1.0, %v1894
  %v1896 = vmul.f32 %v1893, %v1895
  %v1897 = vadd.f32 %v1893, %v1896
  %vm1898 = vweird.f32 %v1891
  %vm1899 = vweird.f32 %v1893
  %vm1900 = vmor %vm1898, %vm1899
  %v1901 = vsel %vm1900, %v1893, %v1897
  %v1902 = vand.u32 2147483647, %v1891
  %vm1903 = vcmp.eq.f32.partialorder %v1902, 8.507059e+37
  %v1904 = vand.u32 %v1891, 2147483648
  %v1905 = vor.u32 1.1754944e-38, %v1904
  %v1906 = vsel %vm1903, %v1905, %v1901
  %v1907 = vmul.f32 1.0, %v1906
  %v1908 = vrcp.pop %v1892
  %v1909 = vmul.f32 %v1892, %v1908
  %v1910 = vsub.f32 1.0, %v1909
  %v1911 = vmul.f32 %v1908, %v1910
  %v1912 = vadd.f32 %v1908, %v1911
  %vm1913 = vweird.f32 %v1892
  %vm1914 = vweird.f32 %v1908
  %vm1915 = vmor %vm1913, %vm1914
  %v1916 = vsel %vm1915, %v1908, %v1912
  %v1917 = vand.u32 2147483647, %v1892
  %vm1918 = vcmp.eq.f32.partialorder %v1917, 8.507059e+37
  %v1919 = vand.u32 %v1892, 2147483648
  %v1920 = vor.u32 1.1754944e-38, %v1919
  %v1921 = vsel %vm1918, %v1920, %v1916
  %v1922 = vmul.f32 1.0, %v1921
  %v1923 = vxor.u32 %v1825, 2147483648
  %v1924 = vxor.u32 %v1827, 2147483648
  %v1925 = vmul.f32 %v1923, 1.442695
  %v1926 = vpow.pop %v1925
  %v1927 = vmul.f32 %v1924, 1.442695
  %v1928 = vpow.pop %v1927
  %v1929 = vadd.f32 %v1926, 1.0
  %v1930 = vadd.f32 %v1928, 1.0
  %v1931 = vrcp.pop %v1929
  %v1932 = vmul.f32 %v1929, %v1931
  %v1933 = vsub.f32 1.0, %v1932
  %v1934 = vmul.f32 %v1931, %v1933
  %v1935 = vadd.f32 %v1931, %v1934
  %vm1936 = vweird.f32 %v1929
  %vm1937 = vweird.f32 %v1931
  %vm1938 = vmor %vm1936, %vm1937
  %v1939 = vsel %vm1938, %v1931, %v1935
  %v1940 = vand.u32 2147483647, %v1929
  %vm1941 = vcmp.eq.f32.partialorder %v1940, 8.507059e+37
  %v1942 = vand.u32 %v1929, 2147483648
  %v1943 = vor.u32 1.1754944e-38, %v1942
  %v1944 = vsel %vm1941, %v1943, %v1939
  %v1945 = vmul.f32 1.0, %v1944
  %v1946 = vrcp.pop %v1930
  %v1947 = vmul.f32 %v1930, %v1946
  %v1948 = vsub.f32 1.0, %v1947
  %v1949 = vmul.f32 %v1946, %v1948
  %v1950 = vadd.f32 %v1946, %v1949
  %vm1951 = vweird.f32 %v1930
  %vm1952 = vweird.f32 %v1946
  %vm1953 = vmor %vm1951, %vm1952
  %v1954 = vsel %vm1953, %v1946, %v1950
  %v1955 = vand.u32 2147483647, %v1930
  %vm1956 = vcmp.eq.f32.partialorder %v1955, 8.507059e+37
  %v1957 = vand.u32 %v1930, 2147483648
  %v1958 = vor.u32 1.1754944e-38, %v1957
  %v1959 = vsel %vm1956, %v1958, %v1954
  %v1960 = vmul.f32 1.0, %v1959
  %v1961 = vtanh.pop %v1853
  %v1962 = vtanh.pop %v1855
  %v1963 = vxor.u32 %v1881, 2147483648
  %v1964 = vxor.u32 %v1883, 2147483648
  %v1965 = vmul.f32 %v1963, 1.442695
  %v1966 = vpow.pop %v1965
  %v1967 = vmul.f32 %v1964, 1.442695
  %v1968 = vpow.pop %v1967
  %v1969 = vadd.f32 %v1966, 1.0
  %v1970 = vadd.f32 %v1968, 1.0
  %v1971 = vrcp.pop %v1969
  %v1972 = vmul.f32 %v1969, %v1971
  %v1973 = vsub.f32 1.0, %v1972
  %v1974 = vmul.f32 %v1971, %v1973
  %v1975 = vadd.f32 %v1971, %v1974
  %vm1976 = vweird.f32 %v1969
  %vm1977 = vweird.f32 %v1971
  %vm1978 = vmor %vm1976, %vm1977
  %v1979 = vsel %vm1978, %v1971, %v1975
  %v1980 = vand.u32 2147483647, %v1969
  %vm1981 = vcmp.eq.f32.partialorder %v1980, 8.507059e+37
  %v1982 = vand.u32 %v1969, 2147483648
  %v1983 = vor.u32 1.1754944e-38, %v1982
  %v1984 = vsel %vm1981, %v1983, %v1979
  %v1985 = vmul.f32 1.0, %v1984
  %v1986 = vrcp.pop %v1970
  %v1987 = vmul.f32 %v1970, %v1986
  %v1988 = vsub.f32 1.0, %v1987
  %v1989 = vmul.f32 %v1986, %v1988
  %v1990 = vadd.f32 %v1986, %v1989
  %vm1991 = vweird.f32 %v1970
  %vm1992 = vweird.f32 %v1986
  %vm1993 = vmor %vm1991, %vm1992
  %v1994 = vsel %vm1993, %v1986, %v1990
  %v1995 = vand.u32 2147483647, %v1970
  %vm1996 = vcmp.eq.f32.partialorder %v1995, 8.507059e+37
  %v1997 = vand.u32 %v1970, 2147483648
  %v1998 = vor.u32 1.1754944e-38, %v1997
  %v1999 = vsel %vm1996, %v1998, %v1994
  %v2000 = vmul.f32 1.0, %v1999
  %v2001 = vld [vmem:[#allocation3] sm:$0xff]
  %v2002 = vld [vmem:[#allocation3 + $0x8] sm:$0xff]
  %v2003 = vmul.f32 %v1945, %v2001
  %v2004 = vmul.f32 %v1960, %v2002
  %v2005 = vmul.f32 %v1907, %v1961
  %v2006 = vmul.f32 %v1922, %v1962
  %v2007 = vadd.f32 %v2003, %v2005
  %v2008 = vadd.f32 %v2004, %v2006
  %v2009 = vtanh.pop %v2007
  %v2010 = vtanh.pop %v2008
  %v2011 = vmul.f32 %v1985, %v2009
  %v2012 = vmul.f32 %v2000, %v2010
  %2013 = vst [vmem:[#allocation3] sm:$0xff] %v2007
  %2014 = vst [vmem:[#allocation3 + $0x8] sm:$0xff] %v2008
  %v2015 = vpack.c.bf16 %v2011, %v2011
  %v2016 = vpack.c.bf16 %v2012, %v2012
  %2017 = vst [vmem:[#allocation2 + $0x4] sm:$0xf] %v2015
  %2018 = vst [vmem:[#allocation2 + $0xc] sm:$0xf] %v2016
  %s2019 = scalar_lea.vmem %s0, 48
  %v2020 = vld [vmem:[%s2019] sm:$0xff]
  %v2021 = vld [vmem:[%s2019 + $0x8] sm:$0xff]
  %2022 = vset.pattern.permute.xlu0 0
  %2023 = vperm.xlu0 %2022, %v2020
  %v2024 = vpop.permute.xlu0 %2023
  %2025 = vset.pattern.permute.xlu0 0
  %2026 = vperm.xlu0 %2025, %v2021
  %v2027 = vpop.permute.xlu0 %2026
  %vm2028 = vcmp.eq.s32.totalorder %v26, %v2024
  %vm2029 = vcmp.eq.s32.totalorder %v26, %v2027
  %v2030 = vsel %vm2028, 1, 0
  %v2031 = vsel %vm2029, 1, 0
  %v2032 = vcvt.s32.f32 %v2030
  %v2033 = vcvt.s32.f32 %v2031
  %v2034 = vpack.c.bf16 %v2032, %v2032
  %v2035 = vpack.c.bf16 %v2033, %v2033
  %2036 = vst [vmem:[#allocation2] sm:$0xf] %v2034
  %2037 = vst [vmem:[#allocation2 + $0x8] sm:$0xf] %v2035
  %v2038 = vld [vmem:[#allocation2] sm:$0xff]
  %v2039 = vld [vmem:[#allocation2 + $0x8] sm:$0xff]
  %v2040 = vld [vmem:[%s1] sm:$0xff]
  %v2041 = vld [vmem:[%s1 + $0x8] sm:$0xff]
  %v2042 = vld [vmem:[%s1 + $0x10] sm:$0xff]
  %v2043 = vld [vmem:[%s1 + $0x18] sm:$0xff]
  %v2044 = vld [vmem:[%s1 + $0x20] sm:$0xff]
  %v2045 = vld [vmem:[%s1 + $0x28] sm:$0xff]
  %v2046 = vld [vmem:[%s1 + $0x30] sm:$0xff]
  %v2047 = vld [vmem:[%s1 + $0x38] sm:$0xff]
  %v2048 = vld [vmem:[%s1 + $0x40] sm:$0xff]
  %v2049 = vld [vmem:[%s1 + $0x48] sm:$0xff]
  %v2050 = vld [vmem:[%s1 + $0x50] sm:$0xff]
  %v2051 = vld [vmem:[%s1 + $0x58] sm:$0xff]
  %v2052 = vld [vmem:[%s1 + $0x60] sm:$0xff]
  %v2053 = vld [vmem:[%s1 + $0x68] sm:$0xff]
  %v2054 = vld [vmem:[%s1 + $0x70] sm:$0xff]
  %v2055 = vld [vmem:[%s1 + $0x78] sm:$0xff]
  %v2056 = vld [vmem:[%s1 + $0x80] sm:$0xff]
  %v2057 = vld [vmem:[%s1 + $0x88] sm:$0xff]
  %v2058 = vld [vmem:[%s1 + $0x90] sm:$0xff]
  %v2059 = vld [vmem:[%s1 + $0x98] sm:$0xff]
  %v2060 = vld [vmem:[%s1 + $0xa0] sm:$0xff]
  %v2061 = vld [vmem:[%s1 + $0xa8] sm:$0xff]
  %v2062 = vld [vmem:[%s1 + $0xb0] sm:$0xff]
  %v2063 = vld [vmem:[%s1 + $0xb8] sm:$0xff]
  %v2064 = vld [vmem:[%s1 + $0xc0] sm:$0xff]
  %v2065 = vld [vmem:[%s1 + $0xc8] sm:$0xff]
  %v2066 = vld [vmem:[%s1 + $0xd0] sm:$0xff]
  %v2067 = vld [vmem:[%s1 + $0xd8] sm:$0xff]
  %v2068 = vld [vmem:[%s1 + $0xe0] sm:$0xff]
  %v2069 = vld [vmem:[%s1 + $0xe8] sm:$0xff]
  %v2070 = vld [vmem:[%s1 + $0xf0] sm:$0xff]
  %v2071 = vld [vmem:[%s1 + $0xf8] sm:$0xff]
  %v2072 = vld [vmem:[%s1 + $0x100] sm:$0xff]
  %v2073 = vld [vmem:[%s1 + $0x108] sm:$0xff]
  %v2074 = vld [vmem:[%s1 + $0x110] sm:$0xff]
  %v2075 = vld [vmem:[%s1 + $0x118] sm:$0xff]
  %v2076 = vld [vmem:[%s1 + $0x120] sm:$0xff]
  %v2077 = vld [vmem:[%s1 + $0x128] sm:$0xff]
  %v2078 = vld [vmem:[%s1 + $0x130] sm:$0xff]
  %v2079 = vld [vmem:[%s1 + $0x138] sm:$0xff]
  %v2080 = vld [vmem:[%s1 + $0x140] sm:$0xff]
  %v2081 = vld [vmem:[%s1 + $0x148] sm:$0xff]
  %v2082 = vld [vmem:[%s1 + $0x150] sm:$0xff]
  %v2083 = vld [vmem:[%s1 + $0x158] sm:$0xff]
  %v2084 = vld [vmem:[%s1 + $0x160] sm:$0xff]
  %v2085 = vld [vmem:[%s1 + $0x168] sm:$0xff]
  %v2086 = vld [vmem:[%s1 + $0x170] sm:$0xff]
  %v2087 = vld [vmem:[%s1 + $0x178] sm:$0xff]
  %v2088 = vld [vmem:[%s1 + $0x180] sm:$0xff]
  %v2089 = vld [vmem:[%s1 + $0x188] sm:$0xff]
  %v2090 = vld [vmem:[%s1 + $0x190] sm:$0xff]
  %v2091 = vld [vmem:[%s1 + $0x198] sm:$0xff]
  %v2092 = vld [vmem:[%s1 + $0x1a0] sm:$0xff]
  %v2093 = vld [vmem:[%s1 + $0x1a8] sm:$0xff]
  %v2094 = vld [vmem:[%s1 + $0x1b0] sm:$0xff]
  %v2095 = vld [vmem:[%s1 + $0x1b8] sm:$0xff]
  %v2096 = vld [vmem:[%s1 + $0x1c0] sm:$0xff]
  %v2097 = vld [vmem:[%s1 + $0x1c8] sm:$0xff]
  %v2098 = vld [vmem:[%s1 + $0x1d0] sm:$0xff]
  %v2099 = vld [vmem:[%s1 + $0x1d8] sm:$0xff]
  %v2100 = vld [vmem:[%s1 + $0x1e0] sm:$0xff]
  %v2101 = vld [vmem:[%s1 + $0x1e8] sm:$0xff]
  %v2102 = vld [vmem:[%s1 + $0x1f0] sm:$0xff]
  %v2103 = vld [vmem:[%s1 + $0x1f8] sm:$0xff]
  %v2106 = vunpack.c.l.b16 %v2038
  %v2107 = vunpack.c.h.b16 %v2038
  %v2108 = vunpack.c.l.b16 %v2039
  %v2109 = vunpack.c.h.b16 %v2039
  %v2110 = vpack.c.b16 %v2108, %v2106
  %v2111 = vpack.c.b16 %v2109, %v2107
  %v2178 = vunpack.c.l.b16 %v2040
  %v2179 = vunpack.c.h.b16 %v2040
  %v2180 = vunpack.c.l.b16 %v2041
  %v2181 = vunpack.c.h.b16 %v2041
  %v2182 = vunpack.c.l.b16 %v2042
  %v2183 = vunpack.c.h.b16 %v2042
  %v2184 = vunpack.c.l.b16 %v2043
  %v2185 = vunpack.c.h.b16 %v2043
  %v2186 = vunpack.c.l.b16 %v2044
  %v2187 = vunpack.c.h.b16 %v2044
  %v2188 = vunpack.c.l.b16 %v2045
  %v2189 = vunpack.c.h.b16 %v2045
  %v2190 = vunpack.c.l.b16 %v2046
  %v2191 = vunpack.c.h.b16 %v2046
  %v2192 = vunpack.c.l.b16 %v2047
  %v2193 = vunpack.c.h.b16 %v2047
  %v2194 = vunpack.c.l.b16 %v2048
  %v2195 = vunpack.c.h.b16 %v2048
  %v2196 = vunpack.c.l.b16 %v2049
  %v2197 = vunpack.c.h.b16 %v2049
  %v2198 = vunpack.c.l.b16 %v2050
  %v2199 = vunpack.c.h.b16 %v2050
  %v2200 = vunpack.c.l.b16 %v2051
  %v2201 = vunpack.c.h.b16 %v2051
  %v2202 = vunpack.c.l.b16 %v2052
  %v2203 = vunpack.c.h.b16 %v2052
  %v2204 = vunpack.c.l.b16 %v2053
  %v2205 = vunpack.c.h.b16 %v2053
  %v2206 = vunpack.c.l.b16 %v2054
  %v2207 = vunpack.c.h.b16 %v2054
  %v2208 = vunpack.c.l.b16 %v2055
  %v2209 = vunpack.c.h.b16 %v2055
  %v2210 = vunpack.c.l.b16 %v2056
  %v2211 = vunpack.c.h.b16 %v2056
  %v2212 = vunpack.c.l.b16 %v2057
  %v2213 = vunpack.c.h.b16 %v2057
  %v2214 = vunpack.c.l.b16 %v2058
  %v2215 = vunpack.c.h.b16 %v2058
  %v2216 = vunpack.c.l.b16 %v2059
  %v2217 = vunpack.c.h.b16 %v2059
  %v2218 = vunpack.c.l.b16 %v2060
  %v2219 = vunpack.c.h.b16 %v2060
  %v2220 = vunpack.c.l.b16 %v2061
  %v2221 = vunpack.c.h.b16 %v2061
  %v2222 = vunpack.c.l.b16 %v2062
  %v2223 = vunpack.c.h.b16 %v2062
  %v2224 = vunpack.c.l.b16 %v2063
  %v2225 = vunpack.c.h.b16 %v2063
  %v2226 = vunpack.c.l.b16 %v2064
  %v2227 = vunpack.c.h.b16 %v2064
  %v2228 = vunpack.c.l.b16 %v2065
  %v2229 = vunpack.c.h.b16 %v2065
  %v2230 = vunpack.c.l.b16 %v2066
  %v2231 = vunpack.c.h.b16 %v2066
  %v2232 = vunpack.c.l.b16 %v2067
  %v2233 = vunpack.c.h.b16 %v2067
  %v2234 = vunpack.c.l.b16 %v2068
  %v2235 = vunpack.c.h.b16 %v2068
  %v2236 = vunpack.c.l.b16 %v2069
  %v2237 = vunpack.c.h.b16 %v2069
  %v2238 = vunpack.c.l.b16 %v2070
  %v2239 = vunpack.c.h.b16 %v2070
  %v2240 = vunpack.c.l.b16 %v2071
  %v2241 = vunpack.c.h.b16 %v2071
  %v2242 = vunpack.c.l.b16 %v2072
  %v2243 = vunpack.c.h.b16 %v2072
  %v2244 = vunpack.c.l.b16 %v2073
  %v2245 = vunpack.c.h.b16 %v2073
  %v2246 = vunpack.c.l.b16 %v2074
  %v2247 = vunpack.c.h.b16 %v2074
  %v2248 = vunpack.c.l.b16 %v2075
  %v2249 = vunpack.c.h.b16 %v2075
  %v2250 = vunpack.c.l.b16 %v2076
  %v2251 = vunpack.c.h.b16 %v2076
  %v2252 = vunpack.c.l.b16 %v2077
  %v2253 = vunpack.c.h.b16 %v2077
  %v2254 = vunpack.c.l.b16 %v2078
  %v2255 = vunpack.c.h.b16 %v2078
  %v2256 = vunpack.c.l.b16 %v2079
  %v2257 = vunpack.c.h.b16 %v2079
  %v2258 = vunpack.c.l.b16 %v2080
  %v2259 = vunpack.c.h.b16 %v2080
  %v2260 = vunpack.c.l.b16 %v2081
  %v2261 = vunpack.c.h.b16 %v2081
  %v2262 = vunpack.c.l.b16 %v2082
  %v2263 = vunpack.c.h.b16 %v2082
  %v2264 = vunpack.c.l.b16 %v2083
  %v2265 = vunpack.c.h.b16 %v2083
  %v2266 = vunpack.c.l.b16 %v2084
  %v2267 = vunpack.c.h.b16 %v2084
  %v2268 = vunpack.c.l.b16 %v2085
  %v2269 = vunpack.c.h.b16 %v2085
  %v2270 = vunpack.c.l.b16 %v2086
  %v2271 = vunpack.c.h.b16 %v2086
  %v2272 = vunpack.c.l.b16 %v2087
  %v2273 = vunpack.c.h.b16 %v2087
  %v2274 = vunpack.c.l.b16 %v2088
  %v2275 = vunpack.c.h.b16 %v2088
  %v2276 = vunpack.c.l.b16 %v2089
  %v2277 = vunpack.c.h.b16 %v2089
  %v2278 = vunpack.c.l.b16 %v2090
  %v2279 = vunpack.c.h.b16 %v2090
  %v2280 = vunpack.c.l.b16 %v2091
  %v2281 = vunpack.c.h.b16 %v2091
  %v2282 = vunpack.c.l.b16 %v2092
  %v2283 = vunpack.c.h.b16 %v2092
  %v2284 = vunpack.c.l.b16 %v2093
  %v2285 = vunpack.c.h.b16 %v2093
  %v2286 = vunpack.c.l.b16 %v2094
  %v2287 = vunpack.c.h.b16 %v2094
  %v2288 = vunpack.c.l.b16 %v2095
  %v2289 = vunpack.c.h.b16 %v2095
  %v2290 = vunpack.c.l.b16 %v2096
  %v2291 = vunpack.c.h.b16 %v2096
  %v2292 = vunpack.c.l.b16 %v2097
  %v2293 = vunpack.c.h.b16 %v2097
  %v2294 = vunpack.c.l.b16 %v2098
  %v2295 = vunpack.c.h.b16 %v2098
  %v2296 = vunpack.c.l.b16 %v2099
  %v2297 = vunpack.c.h.b16 %v2099
  %v2298 = vunpack.c.l.b16 %v2100
  %v2299 = vunpack.c.h.b16 %v2100
  %v2300 = vunpack.c.l.b16 %v2101
  %v2301 = vunpack.c.h.b16 %v2101
  %v2302 = vunpack.c.l.b16 %v2102
  %v2303 = vunpack.c.h.b16 %v2102
  %v2304 = vunpack.c.l.b16 %v2103
  %v2305 = vunpack.c.h.b16 %v2103
  %v2306 = vpack.c.b16 %v2182, %v2178
  %v2307 = vpack.c.b16 %v2183, %v2179
  %v2308 = vpack.c.b16 %v2184, %v2180
  %v2309 = vpack.c.b16 %v2185, %v2181
  %v2310 = vpack.c.b16 %v2190, %v2186
  %v2311 = vpack.c.b16 %v2191, %v2187
  %v2312 = vpack.c.b16 %v2192, %v2188
  %v2313 = vpack.c.b16 %v2193, %v2189
  %v2314 = vpack.c.b16 %v2198, %v2194
  %v2315 = vpack.c.b16 %v2199, %v2195
  %v2316 = vpack.c.b16 %v2200, %v2196
  %v2317 = vpack.c.b16 %v2201, %v2197
  %v2318 = vpack.c.b16 %v2206, %v2202
  %v2319 = vpack.c.b16 %v2207, %v2203
  %v2320 = vpack.c.b16 %v2208, %v2204
  %v2321 = vpack.c.b16 %v2209, %v2205
  %v2322 = vpack.c.b16 %v2214, %v2210
  %v2323 = vpack.c.b16 %v2215, %v2211
  %v2324 = vpack.c.b16 %v2216, %v2212
  %v2325 = vpack.c.b16 %v2217, %v2213
  %v2326 = vpack.c.b16 %v2222, %v2218
  %v2327 = vpack.c.b16 %v2223, %v2219
  %v2328 = vpack.c.b16 %v2224, %v2220
  %v2329 = vpack.c.b16 %v2225, %v2221
  %v2330 = vpack.c.b16 %v2230, %v2226
  %v2331 = vpack.c.b16 %v2231, %v2227
  %v2332 = vpack.c.b16 %v2232, %v2228
  %v2333 = vpack.c.b16 %v2233, %v2229
  %v2334 = vpack.c.b16 %v2238, %v2234
  %v2335 = vpack.c.b16 %v2239, %v2235
  %v2336 = vpack.c.b16 %v2240, %v2236
  %v2337 = vpack.c.b16 %v2241, %v2237
  %v2338 = vpack.c.b16 %v2246, %v2242
  %v2339 = vpack.c.b16 %v2247, %v2243
  %v2340 = vpack.c.b16 %v2248, %v2244
  %v2341 = vpack.c.b16 %v2249, %v2245
  %v2342 = vpack.c.b16 %v2254, %v2250
  %v2343 = vpack.c.b16 %v2255, %v2251
  %v2344 = vpack.c.b16 %v2256, %v2252
  %v2345 = vpack.c.b16 %v2257, %v2253
  %v2346 = vpack.c.b16 %v2262, %v2258
  %v2347 = vpack.c.b16 %v2263, %v2259
  %v2348 = vpack.c.b16 %v2264, %v2260
  %v2349 = vpack.c.b16 %v2265, %v2261
  %v2350 = vpack.c.b16 %v2270, %v2266
  %v2351 = vpack.c.b16 %v2271, %v2267
  %v2352 = vpack.c.b16 %v2272, %v2268
  %v2353 = vpack.c.b16 %v2273, %v2269
  %v2354 = vpack.c.b16 %v2278, %v2274
  %v2355 = vpack.c.b16 %v2279, %v2275
  %v2356 = vpack.c.b16 %v2280, %v2276
  %v2357 = vpack.c.b16 %v2281, %v2277
  %v2358 = vpack.c.b16 %v2286, %v2282
  %v2359 = vpack.c.b16 %v2287, %v2283
  %v2360 = vpack.c.b16 %v2288, %v2284
  %v2361 = vpack.c.b16 %v2289, %v2285
  %v2362 = vpack.c.b16 %v2294, %v2290
  %v2363 = vpack.c.b16 %v2295, %v2291
  %v2364 = vpack.c.b16 %v2296, %v2292
  %v2365 = vpack.c.b16 %v2297, %v2293
  %v2366 = vpack.c.b16 %v2302, %v2298
  %v2367 = vpack.c.b16 %v2303, %v2299
  %v2368 = vpack.c.b16 %v2304, %v2300
  %v2369 = vpack.c.b16 %v2305, %v2301
  %2434 = vmatpush.bf16.msra.mxu0 %v2334
  %2435 = vmatpush.bf16.msra.mxu0 %v2330
  %2436 = vmatpush.bf16.msra.mxu0 %v2326
  %2437 = vmatpush.bf16.msra.mxu0 %v2322
  %2438 = vmatpush.bf16.msra.mxu0 %v2318
  %2439 = vmatpush.bf16.msra.mxu0 %v2314
  %2440 = vmatpush.bf16.msra.mxu0 %v2310
  %2441 = vmatpush.bf16.msra.mxu0 %v2306
  %2442 = vmatmul.bf16.gmra.mxu0 %v2110
  %v2443 = vpop.f32.mrf.mxu0
  %v2444 = vadd.f32 %v113, %v2443
  %v2445 = vpop.f32.mrf.mxu0
  %v2446 = vadd.f32 %v113, %v2445
  %2447 = vdwg.mxu0
  %2448 = vmatpush.bf16.msra.mxu0 %v2366
  %2449 = vmatpush.bf16.msra.mxu0 %v2362
  %2450 = vmatpush.bf16.msra.mxu0 %v2358
  %2451 = vmatpush.bf16.msra.mxu0 %v2354
  %2452 = vmatpush.bf16.msra.mxu0 %v2350
  %2453 = vmatpush.bf16.msra.mxu0 %v2346
  %2454 = vmatpush.bf16.msra.mxu0 %v2342
  %2455 = vmatpush.bf16.msra.mxu0 %v2338
  %2456 = vmatmul.bf16.gmra.mxu0 %v2111
  %v2457 = vpop.f32.mrf.mxu0
  %v2458 = vadd.f32 %v2444, %v2457
  %v2459 = vpop.f32.mrf.mxu0
  %v2460 = vadd.f32 %v2446, %v2459
  %2461 = vdwg.mxu0
  %2462 = vmatpush.bf16.msra.mxu0 %v2335
  %2463 = vmatpush.bf16.msra.mxu0 %v2331
  %2464 = vmatpush.bf16.msra.mxu0 %v2327
  %2465 = vmatpush.bf16.msra.mxu0 %v2323
  %2466 = vmatpush.bf16.msra.mxu0 %v2319
  %2467 = vmatpush.bf16.msra.mxu0 %v2315
  %2468 = vmatpush.bf16.msra.mxu0 %v2311
  %2469 = vmatpush.bf16.msra.mxu0 %v2307
  %2470 = vmatmul.bf16.gmra.mxu0 %v2110
  %v2471 = vpop.f32.mrf.mxu0
  %v2472 = vadd.f32 %v114, %v2471
  %v2473 = vpop.f32.mrf.mxu0
  %v2474 = vadd.f32 %v114, %v2473
  %2475 = vdwg.mxu0
  %2476 = vmatpush.bf16.msra.mxu0 %v2367
  %2477 = vmatpush.bf16.msra.mxu0 %v2363
  %2478 = vmatpush.bf16.msra.mxu0 %v2359
  %2479 = vmatpush.bf16.msra.mxu0 %v2355
  %2480 = vmatpush.bf16.msra.mxu0 %v2351
  %2481 = vmatpush.bf16.msra.mxu0 %v2347
  %2482 = vmatpush.bf16.msra.mxu0 %v2343
  %2483 = vmatpush.bf16.msra.mxu0 %v2339
  %2484 = vmatmul.bf16.gmra.mxu0 %v2111
  %v2485 = vpop.f32.mrf.mxu0
  %v2486 = vadd.f32 %v2472, %v2485
  %v2487 = vpop.f32.mrf.mxu0
  %v2488 = vadd.f32 %v2474, %v2487
  %2489 = vdwg.mxu0
  %2490 = vmatpush.bf16.msra.mxu0 %v2336
  %2491 = vmatpush.bf16.msra.mxu0 %v2332
  %2492 = vmatpush.bf16.msra.mxu0 %v2328
  %2493 = vmatpush.bf16.msra.mxu0 %v2324
  %2494 = vmatpush.bf16.msra.mxu0 %v2320
  %2495 = vmatpush.bf16.msra.mxu0 %v2316
  %2496 = vmatpush.bf16.msra.mxu0 %v2312
  %2497 = vmatpush.bf16.msra.mxu0 %v2308
  %2498 = vmatmul.bf16.gmra.mxu0 %v2110
  %v2499 = vpop.f32.mrf.mxu0
  %v2500 = vadd.f32 %v115, %v2499
  %v2501 = vpop.f32.mrf.mxu0
  %v2502 = vadd.f32 %v115, %v2501
  %2503 = vdwg.mxu0
  %2504 = vmatpush.bf16.msra.mxu0 %v2368
  %2505 = vmatpush.bf16.msra.mxu0 %v2364
  %2506 = vmatpush.bf16.msra.mxu0 %v2360
  %2507 = vmatpush.bf16.msra.mxu0 %v2356
  %2508 = vmatpush.bf16.msra.mxu0 %v2352
  %2509 = vmatpush.bf16.msra.mxu0 %v2348
  %2510 = vmatpush.bf16.msra.mxu0 %v2344
  %2511 = vmatpush.bf16.msra.mxu0 %v2340
  %2512 = vmatmul.bf16.gmra.mxu0 %v2111
  %v2513 = vpop.f32.mrf.mxu0
  %v2514 = vadd.f32 %v2500, %v2513
  %v2515 = vpop.f32.mrf.mxu0
  %v2516 = vadd.f32 %v2502, %v2515
  %2517 = vdwg.mxu0
  %2518 = vmatpush.bf16.msra.mxu0 %v2337
  %2519 = vmatpush.bf16.msra.mxu0 %v2333
  %2520 = vmatpush.bf16.msra.mxu0 %v2329
  %2521 = vmatpush.bf16.msra.mxu0 %v2325
  %2522 = vmatpush.bf16.msra.mxu0 %v2321
  %2523 = vmatpush.bf16.msra.mxu0 %v2317
  %2524 = vmatpush.bf16.msra.mxu0 %v2313
  %2525 = vmatpush.bf16.msra.mxu0 %v2309
  %2526 = vmatmul.bf16.gmra.mxu0 %v2110
  %v2527 = vpop.f32.mrf.mxu0
  %v2528 = vadd.f32 %v116, %v2527
  %v2529 = vpop.f32.mrf.mxu0
  %v2530 = vadd.f32 %v116, %v2529
  %2531 = vdwg.mxu0
  %2532 = vmatpush.bf16.msra.mxu0 %v2369
  %2533 = vmatpush.bf16.msra.mxu0 %v2365
  %2534 = vmatpush.bf16.msra.mxu0 %v2361
  %2535 = vmatpush.bf16.msra.mxu0 %v2357
  %2536 = vmatpush.bf16.msra.mxu0 %v2353
  %2537 = vmatpush.bf16.msra.mxu0 %v2349
  %2538 = vmatpush.bf16.msra.mxu0 %v2345
  %2539 = vmatpush.bf16.msra.mxu0 %v2341
  %2540 = vmatmul.bf16.gmra.mxu0 %v2111
  %v2541 = vpop.f32.mrf.mxu0
  %v2542 = vadd.f32 %v2528, %v2541
  %v2543 = vpop.f32.mrf.mxu0
  %v2544 = vadd.f32 %v2530, %v2543
  %2545 = vdwg.mxu0
  %v2546 = vxor.u32 %v2458, 2147483648
  %v2547 = vxor.u32 %v2460, 2147483648
  %v2548 = vmul.f32 %v2546, 1.442695
  %v2549 = vpow.pop %v2548
  %v2550 = vmul.f32 %v2547, 1.442695
  %v2551 = vpow.pop %v2550
  %v2552 = vadd.f32 %v2549, 1.0
  %v2553 = vadd.f32 %v2551, 1.0
  %v2554 = vrcp.pop %v2552
  %v2555 = vmul.f32 %v2552, %v2554
  %v2556 = vsub.f32 1.0, %v2555
  %v2557 = vmul.f32 %v2554, %v2556
  %v2558 = vadd.f32 %v2554, %v2557
  %vm2559 = vweird.f32 %v2552
  %vm2560 = vweird.f32 %v2554
  %vm2561 = vmor %vm2559, %vm2560
  %v2562 = vsel %vm2561, %v2554, %v2558
  %v2563 = vand.u32 2147483647, %v2552
  %vm2564 = vcmp.eq.f32.partialorder %v2563, 8.507059e+37
  %v2565 = vand.u32 %v2552, 2147483648
  %v2566 = vor.u32 1.1754944e-38, %v2565
  %v2567 = vsel %vm2564, %v2566, %v2562
  %v2568 = vmul.f32 1.0, %v2567
  %v2569 = vrcp.pop %v2553
  %v2570 = vmul.f32 %v2553, %v2569
  %v2571 = vsub.f32 1.0, %v2570
  %v2572 = vmul.f32 %v2569, %v2571
  %v2573 = vadd.f32 %v2569, %v2572
  %vm2574 = vweird.f32 %v2553
  %vm2575 = vweird.f32 %v2569
  %vm2576 = vmor %vm2574, %vm2575
  %v2577 = vsel %vm2576, %v2569, %v2573
  %v2578 = vand.u32 2147483647, %v2553
  %vm2579 = vcmp.eq.f32.partialorder %v2578, 8.507059e+37
  %v2580 = vand.u32 %v2553, 2147483648
  %v2581 = vor.u32 1.1754944e-38, %v2580
  %v2582 = vsel %vm2579, %v2581, %v2577
  %v2583 = vmul.f32 1.0, %v2582
  %v2584 = vxor.u32 %v2486, 2147483648
  %v2585 = vxor.u32 %v2488, 2147483648
  %v2586 = vmul.f32 %v2584, 1.442695
  %v2587 = vpow.pop %v2586
  %v2588 = vmul.f32 %v2585, 1.442695
  %v2589 = vpow.pop %v2588
  %v2590 = vadd.f32 %v2587, 1.0
  %v2591 = vadd.f32 %v2589, 1.0
  %v2592 = vrcp.pop %v2590
  %v2593 = vmul.f32 %v2590, %v2592
  %v2594 = vsub.f32 1.0, %v2593
  %v2595 = vmul.f32 %v2592, %v2594
  %v2596 = vadd.f32 %v2592, %v2595
  %vm2597 = vweird.f32 %v2590
  %vm2598 = vweird.f32 %v2592
  %vm2599 = vmor %vm2597, %vm2598
  %v2600 = vsel %vm2599, %v2592, %v2596
  %v2601 = vand.u32 2147483647, %v2590
  %vm2602 = vcmp.eq.f32.partialorder %v2601, 8.507059e+37
  %v2603 = vand.u32 %v2590, 2147483648
  %v2604 = vor.u32 1.1754944e-38, %v2603
  %v2605 = vsel %vm2602, %v2604, %v2600
  %v2606 = vmul.f32 1.0, %v2605
  %v2607 = vrcp.pop %v2591
  %v2608 = vmul.f32 %v2591, %v2607
  %v2609 = vsub.f32 1.0, %v2608
  %v2610 = vmul.f32 %v2607, %v2609
  %v2611 = vadd.f32 %v2607, %v2610
  %vm2612 = vweird.f32 %v2591
  %vm2613 = vweird.f32 %v2607
  %vm2614 = vmor %vm2612, %vm2613
  %v2615 = vsel %vm2614, %v2607, %v2611
  %v2616 = vand.u32 2147483647, %v2591
  %vm2617 = vcmp.eq.f32.partialorder %v2616, 8.507059e+37
  %v2618 = vand.u32 %v2591, 2147483648
  %v2619 = vor.u32 1.1754944e-38, %v2618
  %v2620 = vsel %vm2617, %v2619, %v2615
  %v2621 = vmul.f32 1.0, %v2620
  %v2622 = vtanh.pop %v2514
  %v2623 = vtanh.pop %v2516
  %v2624 = vxor.u32 %v2542, 2147483648
  %v2625 = vxor.u32 %v2544, 2147483648
  %v2626 = vmul.f32 %v2624, 1.442695
  %v2627 = vpow.pop %v2626
  %v2628 = vmul.f32 %v2625, 1.442695
  %v2629 = vpow.pop %v2628
  %v2630 = vadd.f32 %v2627, 1.0
  %v2631 = vadd.f32 %v2629, 1.0
  %v2632 = vrcp.pop %v2630
  %v2633 = vmul.f32 %v2630, %v2632
  %v2634 = vsub.f32 1.0, %v2633
  %v2635 = vmul.f32 %v2632, %v2634
  %v2636 = vadd.f32 %v2632, %v2635
  %vm2637 = vweird.f32 %v2630
  %vm2638 = vweird.f32 %v2632
  %vm2639 = vmor %vm2637, %vm2638
  %v2640 = vsel %vm2639, %v2632, %v2636
  %v2641 = vand.u32 2147483647, %v2630
  %vm2642 = vcmp.eq.f32.partialorder %v2641, 8.507059e+37
  %v2643 = vand.u32 %v2630, 2147483648
  %v2644 = vor.u32 1.1754944e-38, %v2643
  %v2645 = vsel %vm2642, %v2644, %v2640
  %v2646 = vmul.f32 1.0, %v2645
  %v2647 = vrcp.pop %v2631
  %v2648 = vmul.f32 %v2631, %v2647
  %v2649 = vsub.f32 1.0, %v2648
  %v2650 = vmul.f32 %v2647, %v2649
  %v2651 = vadd.f32 %v2647, %v2650
  %vm2652 = vweird.f32 %v2631
  %vm2653 = vweird.f32 %v2647
  %vm2654 = vmor %vm2652, %vm2653
  %v2655 = vsel %vm2654, %v2647, %v2651
  %v2656 = vand.u32 2147483647, %v2631
  %vm2657 = vcmp.eq.f32.partialorder %v2656, 8.507059e+37
  %v2658 = vand.u32 %v2631, 2147483648
  %v2659 = vor.u32 1.1754944e-38, %v2658
  %v2660 = vsel %vm2657, %v2659, %v2655
  %v2661 = vmul.f32 1.0, %v2660
  %v2662 = vld [vmem:[#allocation3] sm:$0xff]
  %v2663 = vld [vmem:[#allocation3 + $0x8] sm:$0xff]
  %v2664 = vmul.f32 %v2606, %v2662
  %v2665 = vmul.f32 %v2621, %v2663
  %v2666 = vmul.f32 %v2568, %v2622
  %v2667 = vmul.f32 %v2583, %v2623
  %v2668 = vadd.f32 %v2664, %v2666
  %v2669 = vadd.f32 %v2665, %v2667
  %v2670 = vtanh.pop %v2668
  %v2671 = vtanh.pop %v2669
  %v2672 = vmul.f32 %v2646, %v2670
  %v2673 = vmul.f32 %v2661, %v2671
  %2674 = vst [vmem:[#allocation3] sm:$0xff] %v2668
  %2675 = vst [vmem:[#allocation3 + $0x8] sm:$0xff] %v2669
  %v2676 = vpack.c.bf16 %v2672, %v2672
  %v2677 = vpack.c.bf16 %v2673, %v2673
  %2678 = vst [vmem:[#allocation2 + $0x4] sm:$0xf] %v2676
  %2679 = vst [vmem:[#allocation2 + $0xc] sm:$0xf] %v2677
  %s2680 = scalar_lea.vmem %s0, 64
  %v2681 = vld [vmem:[%s2680] sm:$0xff]
  %v2682 = vld [vmem:[%s2680 + $0x8] sm:$0xff]
  %2683 = vset.pattern.permute.xlu0 0
  %2684 = vperm.xlu0 %2683, %v2681
  %v2685 = vpop.permute.xlu0 %2684
  %2686 = vset.pattern.permute.xlu0 0
  %2687 = vperm.xlu0 %2686, %v2682
  %v2688 = vpop.permute.xlu0 %2687
  %vm2689 = vcmp.eq.s32.totalorder %v26, %v2685
  %vm2690 = vcmp.eq.s32.totalorder %v26, %v2688
  %v2691 = vsel %vm2689, 1, 0
  %v2692 = vsel %vm2690, 1, 0
  %v2693 = vcvt.s32.f32 %v2691
  %v2694 = vcvt.s32.f32 %v2692
  %v2695 = vpack.c.bf16 %v2693, %v2693
  %v2696 = vpack.c.bf16 %v2694, %v2694
  %2697 = vst [vmem:[#allocation2] sm:$0xf] %v2695
  %2698 = vst [vmem:[#allocation2 + $0x8] sm:$0xf] %v2696
  %v2699 = vld [vmem:[#allocation2] sm:$0xff]
  %v2700 = vld [vmem:[#allocation2 + $0x8] sm:$0xff]
  %v2701 = vld [vmem:[%s1] sm:$0xff]
  %v2702 = vld [vmem:[%s1 + $0x8] sm:$0xff]
  %v2703 = vld [vmem:[%s1 + $0x10] sm:$0xff]
  %v2704 = vld [vmem:[%s1 + $0x18] sm:$0xff]
  %v2705 = vld [vmem:[%s1 + $0x20] sm:$0xff]
  %v2706 = vld [vmem:[%s1 + $0x28] sm:$0xff]
  %v2707 = vld [vmem:[%s1 + $0x30] sm:$0xff]
  %v2708 = vld [vmem:[%s1 + $0x38] sm:$0xff]
  %v2709 = vld [vmem:[%s1 + $0x40] sm:$0xff]
  %v2710 = vld [vmem:[%s1 + $0x48] sm:$0xff]
  %v2711 = vld [vmem:[%s1 + $0x50] sm:$0xff]
  %v2712 = vld [vmem:[%s1 + $0x58] sm:$0xff]
  %v2713 = vld [vmem:[%s1 + $0x60] sm:$0xff]
  %v2714 = vld [vmem:[%s1 + $0x68] sm:$0xff]
  %v2715 = vld [vmem:[%s1 + $0x70] sm:$0xff]
  %v2716 = vld [vmem:[%s1 + $0x78] sm:$0xff]
  %v2717 = vld [vmem:[%s1 + $0x80] sm:$0xff]
  %v2718 = vld [vmem:[%s1 + $0x88] sm:$0xff]
  %v2719 = vld [vmem:[%s1 + $0x90] sm:$0xff]
  %v2720 = vld [vmem:[%s1 + $0x98] sm:$0xff]
  %v2721 = vld [vmem:[%s1 + $0xa0] sm:$0xff]
  %v2722 = vld [vmem:[%s1 + $0xa8] sm:$0xff]
  %v2723 = vld [vmem:[%s1 + $0xb0] sm:$0xff]
  %v2724 = vld [vmem:[%s1 + $0xb8] sm:$0xff]
  %v2725 = vld [vmem:[%s1 + $0xc0] sm:$0xff]
  %v2726 = vld [vmem:[%s1 + $0xc8] sm:$0xff]
  %v2727 = vld [vmem:[%s1 + $0xd0] sm:$0xff]
  %v2728 = vld [vmem:[%s1 + $0xd8] sm:$0xff]
  %v2729 = vld [vmem:[%s1 + $0xe0] sm:$0xff]
  %v2730 = vld [vmem:[%s1 + $0xe8] sm:$0xff]
  %v2731 = vld [vmem:[%s1 + $0xf0] sm:$0xff]
  %v2732 = vld [vmem:[%s1 + $0xf8] sm:$0xff]
  %v2733 = vld [vmem:[%s1 + $0x100] sm:$0xff]
  %v2734 = vld [vmem:[%s1 + $0x108] sm:$0xff]
  %v2735 = vld [vmem:[%s1 + $0x110] sm:$0xff]
  %v2736 = vld [vmem:[%s1 + $0x118] sm:$0xff]
  %v2737 = vld [vmem:[%s1 + $0x120] sm:$0xff]
  %v2738 = vld [vmem:[%s1 + $0x128] sm:$0xff]
  %v2739 = vld [vmem:[%s1 + $0x130] sm:$0xff]
  %v2740 = vld [vmem:[%s1 + $0x138] sm:$0xff]
  %v2741 = vld [vmem:[%s1 + $0x140] sm:$0xff]
  %v2742 = vld [vmem:[%s1 + $0x148] sm:$0xff]
  %v2743 = vld [vmem:[%s1 + $0x150] sm:$0xff]
  %v2744 = vld [vmem:[%s1 + $0x158] sm:$0xff]
  %v2745 = vld [vmem:[%s1 + $0x160] sm:$0xff]
  %v2746 = vld [vmem:[%s1 + $0x168] sm:$0xff]
  %v2747 = vld [vmem:[%s1 + $0x170] sm:$0xff]
  %v2748 = vld [vmem:[%s1 + $0x178] sm:$0xff]
  %v2749 = vld [vmem:[%s1 + $0x180] sm:$0xff]
  %v2750 = vld [vmem:[%s1 + $0x188] sm:$0xff]
  %v2751 = vld [vmem:[%s1 + $0x190] sm:$0xff]
  %v2752 = vld [vmem:[%s1 + $0x198] sm:$0xff]
  %v2753 = vld [vmem:[%s1 + $0x1a0] sm:$0xff]
  %v2754 = vld [vmem:[%s1 + $0x1a8] sm:$0xff]
  %v2755 = vld [vmem:[%s1 + $0x1b0] sm:$0xff]
  %v2756 = vld [vmem:[%s1 + $0x1b8] sm:$0xff]
  %v2757 = vld [vmem:[%s1 + $0x1c0] sm:$0xff]
  %v2758 = vld [vmem:[%s1 + $0x1c8] sm:$0xff]
  %v2759 = vld [vmem:[%s1 + $0x1d0] sm:$0xff]
  %v2760 = vld [vmem:[%s1 + $0x1d8] sm:$0xff]
  %v2761 = vld [vmem:[%s1 + $0x1e0] sm:$0xff]
  %v2762 = vld [vmem:[%s1 + $0x1e8] sm:$0xff]
  %v2763 = vld [vmem:[%s1 + $0x1f0] sm:$0xff]
  %v2764 = vld [vmem:[%s1 + $0x1f8] sm:$0xff]
  %v2767 = vunpack.c.l.b16 %v2699
  %v2768 = vunpack.c.h.b16 %v2699
  %v2769 = vunpack.c.l.b16 %v2700
  %v2770 = vunpack.c.h.b16 %v2700
  %v2771 = vpack.c.b16 %v2769, %v2767
  %v2772 = vpack.c.b16 %v2770, %v2768
  %v2839 = vunpack.c.l.b16 %v2701
  %v2840 = vunpack.c.h.b16 %v2701
  %v2841 = vunpack.c.l.b16 %v2702
  %v2842 = vunpack.c.h.b16 %v2702
  %v2843 = vunpack.c.l.b16 %v2703
  %v2844 = vunpack.c.h.b16 %v2703
  %v2845 = vunpack.c.l.b16 %v2704
  %v2846 = vunpack.c.h.b16 %v2704
  %v2847 = vunpack.c.l.b16 %v2705
  %v2848 = vunpack.c.h.b16 %v2705
  %v2849 = vunpack.c.l.b16 %v2706
  %v2850 = vunpack.c.h.b16 %v2706
  %v2851 = vunpack.c.l.b16 %v2707
  %v2852 = vunpack.c.h.b16 %v2707
  %v2853 = vunpack.c.l.b16 %v2708
  %v2854 = vunpack.c.h.b16 %v2708
  %v2855 = vunpack.c.l.b16 %v2709
  %v2856 = vunpack.c.h.b16 %v2709
  %v2857 = vunpack.c.l.b16 %v2710
  %v2858 = vunpack.c.h.b16 %v2710
  %v2859 = vunpack.c.l.b16 %v2711
  %v2860 = vunpack.c.h.b16 %v2711
  %v2861 = vunpack.c.l.b16 %v2712
  %v2862 = vunpack.c.h.b16 %v2712
  %v2863 = vunpack.c.l.b16 %v2713
  %v2864 = vunpack.c.h.b16 %v2713
  %v2865 = vunpack.c.l.b16 %v2714
  %v2866 = vunpack.c.h.b16 %v2714
  %v2867 = vunpack.c.l.b16 %v2715
  %v2868 = vunpack.c.h.b16 %v2715
  %v2869 = vunpack.c.l.b16 %v2716
  %v2870 = vunpack.c.h.b16 %v2716
  %v2871 = vunpack.c.l.b16 %v2717
  %v2872 = vunpack.c.h.b16 %v2717
  %v2873 = vunpack.c.l.b16 %v2718
  %v2874 = vunpack.c.h.b16 %v2718
  %v2875 = vunpack.c.l.b16 %v2719
  %v2876 = vunpack.c.h.b16 %v2719
  %v2877 = vunpack.c.l.b16 %v2720
  %v2878 = vunpack.c.h.b16 %v2720
  %v2879 = vunpack.c.l.b16 %v2721
  %v2880 = vunpack.c.h.b16 %v2721
  %v2881 = vunpack.c.l.b16 %v2722
  %v2882 = vunpack.c.h.b16 %v2722
  %v2883 = vunpack.c.l.b16 %v2723
  %v2884 = vunpack.c.h.b16 %v2723
  %v2885 = vunpack.c.l.b16 %v2724
  %v2886 = vunpack.c.h.b16 %v2724
  %v2887 = vunpack.c.l.b16 %v2725
  %v2888 = vunpack.c.h.b16 %v2725
  %v2889 = vunpack.c.l.b16 %v2726
  %v2890 = vunpack.c.h.b16 %v2726
  %v2891 = vunpack.c.l.b16 %v2727
  %v2892 = vunpack.c.h.b16 %v2727
  %v2893 = vunpack.c.l.b16 %v2728
  %v2894 = vunpack.c.h.b16 %v2728
  %v2895 = vunpack.c.l.b16 %v2729
  %v2896 = vunpack.c.h.b16 %v2729
  %v2897 = vunpack.c.l.b16 %v2730
  %v2898 = vunpack.c.h.b16 %v2730
  %v2899 = vunpack.c.l.b16 %v2731
  %v2900 = vunpack.c.h.b16 %v2731
  %v2901 = vunpack.c.l.b16 %v2732
  %v2902 = vunpack.c.h.b16 %v2732
  %v2903 = vunpack.c.l.b16 %v2733
  %v2904 = vunpack.c.h.b16 %v2733
  %v2905 = vunpack.c.l.b16 %v2734
  %v2906 = vunpack.c.h.b16 %v2734
  %v2907 = vunpack.c.l.b16 %v2735
  %v2908 = vunpack.c.h.b16 %v2735
  %v2909 = vunpack.c.l.b16 %v2736
  %v2910 = vunpack.c.h.b16 %v2736
  %v2911 = vunpack.c.l.b16 %v2737
  %v2912 = vunpack.c.h.b16 %v2737
  %v2913 = vunpack.c.l.b16 %v2738
  %v2914 = vunpack.c.h.b16 %v2738
  %v2915 = vunpack.c.l.b16 %v2739
  %v2916 = vunpack.c.h.b16 %v2739
  %v2917 = vunpack.c.l.b16 %v2740
  %v2918 = vunpack.c.h.b16 %v2740
  %v2919 = vunpack.c.l.b16 %v2741
  %v2920 = vunpack.c.h.b16 %v2741
  %v2921 = vunpack.c.l.b16 %v2742
  %v2922 = vunpack.c.h.b16 %v2742
  %v2923 = vunpack.c.l.b16 %v2743
  %v2924 = vunpack.c.h.b16 %v2743
  %v2925 = vunpack.c.l.b16 %v2744
  %v2926 = vunpack.c.h.b16 %v2744
  %v2927 = vunpack.c.l.b16 %v2745
  %v2928 = vunpack.c.h.b16 %v2745
  %v2929 = vunpack.c.l.b16 %v2746
  %v2930 = vunpack.c.h.b16 %v2746
  %v2931 = vunpack.c.l.b16 %v2747
  %v2932 = vunpack.c.h.b16 %v2747
  %v2933 = vunpack.c.l.b16 %v2748
  %v2934 = vunpack.c.h.b16 %v2748
  %v2935 = vunpack.c.l.b16 %v2749
  %v2936 = vunpack.c.h.b16 %v2749
  %v2937 = vunpack.c.l.b16 %v2750
  %v2938 = vunpack.c.h.b16 %v2750
  %v2939 = vunpack.c.l.b16 %v2751
  %v2940 = vunpack.c.h.b16 %v2751
  %v2941 = vunpack.c.l.b16 %v2752
  %v2942 = vunpack.c.h.b16 %v2752
  %v2943 = vunpack.c.l.b16 %v2753
  %v2944 = vunpack.c.h.b16 %v2753
  %v2945 = vunpack.c.l.b16 %v2754
  %v2946 = vunpack.c.h.b16 %v2754
  %v2947 = vunpack.c.l.b16 %v2755
  %v2948 = vunpack.c.h.b16 %v2755
  %v2949 = vunpack.c.l.b16 %v2756
  %v2950 = vunpack.c.h.b16 %v2756
  %v2951 = vunpack.c.l.b16 %v2757
  %v2952 = vunpack.c.h.b16 %v2757
  %v2953 = vunpack.c.l.b16 %v2758
  %v2954 = vunpack.c.h.b16 %v2758
  %v2955 = vunpack.c.l.b16 %v2759
  %v2956 = vunpack.c.h.b16 %v2759
  %v2957 = vunpack.c.l.b16 %v2760
  %v2958 = vunpack.c.h.b16 %v2760
  %v2959 = vunpack.c.l.b16 %v2761
  %v2960 = vunpack.c.h.b16 %v2761
  %v2961 = vunpack.c.l.b16 %v2762
  %v2962 = vunpack.c.h.b16 %v2762
  %v2963 = vunpack.c.l.b16 %v2763
  %v2964 = vunpack.c.h.b16 %v2763
  %v2965 = vunpack.c.l.b16 %v2764
  %v2966 = vunpack.c.h.b16 %v2764
  %v2967 = vpack.c.b16 %v2843, %v2839
  %v2968 = vpack.c.b16 %v2844, %v2840
  %v2969 = vpack.c.b16 %v2845, %v2841
  %v2970 = vpack.c.b16 %v2846, %v2842
  %v2971 = vpack.c.b16 %v2851, %v2847
  %v2972 = vpack.c.b16 %v2852, %v2848
  %v2973 = vpack.c.b16 %v2853, %v2849
  %v2974 = vpack.c.b16 %v2854, %v2850
  %v2975 = vpack.c.b16 %v2859, %v2855
  %v2976 = vpack.c.b16 %v2860, %v2856
  %v2977 = vpack.c.b16 %v2861, %v2857
  %v2978 = vpack.c.b16 %v2862, %v2858
  %v2979 = vpack.c.b16 %v2867, %v2863
  %v2980 = vpack.c.b16 %v2868, %v2864
  %v2981 = vpack.c.b16 %v2869, %v2865
  %v2982 = vpack.c.b16 %v2870, %v2866
  %v2983 = vpack.c.b16 %v2875, %v2871
  %v2984 = vpack.c.b16 %v2876, %v2872
  %v2985 = vpack.c.b16 %v2877, %v2873
  %v2986 = vpack.c.b16 %v2878, %v2874
  %v2987 = vpack.c.b16 %v2883, %v2879
  %v2988 = vpack.c.b16 %v2884, %v2880
  %v2989 = vpack.c.b16 %v2885, %v2881
  %v2990 = vpack.c.b16 %v2886, %v2882
  %v2991 = vpack.c.b16 %v2891, %v2887
  %v2992 = vpack.c.b16 %v2892, %v2888
  %v2993 = vpack.c.b16 %v2893, %v2889
  %v2994 = vpack.c.b16 %v2894, %v2890
  %v2995 = vpack.c.b16 %v2899, %v2895
  %v2996 = vpack.c.b16 %v2900, %v2896
  %v2997 = vpack.c.b16 %v2901, %v2897
  %v2998 = vpack.c.b16 %v2902, %v2898
  %v2999 = vpack.c.b16 %v2907, %v2903
  %v3000 = vpack.c.b16 %v2908, %v2904
  %v3001 = vpack.c.b16 %v2909, %v2905
  %v3002 = vpack.c.b16 %v2910, %v2906
  %v3003 = vpack.c.b16 %v2915, %v2911
  %v3004 = vpack.c.b16 %v2916, %v2912
  %v3005 = vpack.c.b16 %v2917, %v2913
  %v3006 = vpack.c.b16 %v2918, %v2914
  %v3007 = vpack.c.b16 %v2923, %v2919
  %v3008 = vpack.c.b16 %v2924, %v2920
  %v3009 = vpack.c.b16 %v2925, %v2921
  %v3010 = vpack.c.b16 %v2926, %v2922
  %v3011 = vpack.c.b16 %v2931, %v2927
  %v3012 = vpack.c.b16 %v2932, %v2928
  %v3013 = vpack.c.b16 %v2933, %v2929
  %v3014 = vpack.c.b16 %v2934, %v2930
  %v3015 = vpack.c.b16 %v2939, %v2935
  %v3016 = vpack.c.b16 %v2940, %v2936
  %v3017 = vpack.c.b16 %v2941, %v2937
  %v3018 = vpack.c.b16 %v2942, %v2938
  %v3019 = vpack.c.b16 %v2947, %v2943
  %v3020 = vpack.c.b16 %v2948, %v2944
  %v3021 = vpack.c.b16 %v2949, %v2945
  %v3022 = vpack.c.b16 %v2950, %v2946
  %v3023 = vpack.c.b16 %v2955, %v2951
  %v3024 = vpack.c.b16 %v2956, %v2952
  %v3025 = vpack.c.b16 %v2957, %v2953
  %v3026 = vpack.c.b16 %v2958, %v2954
  %v3027 = vpack.c.b16 %v2963, %v2959
  %v3028 = vpack.c.b16 %v2964, %v2960
  %v3029 = vpack.c.b16 %v2965, %v2961
  %v3030 = vpack.c.b16 %v2966, %v2962
  %3095 = vmatpush.bf16.msra.mxu0 %v2995
  %3096 = vmatpush.bf16.msra.mxu0 %v2991
  %3097 = vmatpush.bf16.msra.mxu0 %v2987
  %3098 = vmatpush.bf16.msra.mxu0 %v2983
  %3099 = vmatpush.bf16.msra.mxu0 %v2979
  %3100 = vmatpush.bf16.msra.mxu0 %v2975
  %3101 = vmatpush.bf16.msra.mxu0 %v2971
  %3102 = vmatpush.bf16.msra.mxu0 %v2967
  %3103 = vmatmul.bf16.gmra.mxu0 %v2771
  %v3104 = vpop.f32.mrf.mxu0
  %v3105 = vadd.f32 %v113, %v3104
  %v3106 = vpop.f32.mrf.mxu0
  %v3107 = vadd.f32 %v113, %v3106
  %3108 = vdwg.mxu0
  %3109 = vmatpush.bf16.msra.mxu0 %v3027
  %3110 = vmatpush.bf16.msra.mxu0 %v3023
  %3111 = vmatpush.bf16.msra.mxu0 %v3019
  %3112 = vmatpush.bf16.msra.mxu0 %v3015
  %3113 = vmatpush.bf16.msra.mxu0 %v3011
  %3114 = vmatpush.bf16.msra.mxu0 %v3007
  %3115 = vmatpush.bf16.msra.mxu0 %v3003
  %3116 = vmatpush.bf16.msra.mxu0 %v2999
  %3117 = vmatmul.bf16.gmra.mxu0 %v2772
  %v3118 = vpop.f32.mrf.mxu0
  %v3119 = vadd.f32 %v3105, %v3118
  %v3120 = vpop.f32.mrf.mxu0
  %v3121 = vadd.f32 %v3107, %v3120
  %3122 = vdwg.mxu0
  %3123 = vmatpush.bf16.msra.mxu0 %v2996
  %3124 = vmatpush.bf16.msra.mxu0 %v2992
  %3125 = vmatpush.bf16.msra.mxu0 %v2988
  %3126 = vmatpush.bf16.msra.mxu0 %v2984
  %3127 = vmatpush.bf16.msra.mxu0 %v2980
  %3128 = vmatpush.bf16.msra.mxu0 %v2976
  %3129 = vmatpush.bf16.msra.mxu0 %v2972
  %3130 = vmatpush.bf16.msra.mxu0 %v2968
  %3131 = vmatmul.bf16.gmra.mxu0 %v2771
  %v3132 = vpop.f32.mrf.mxu0
  %v3133 = vadd.f32 %v114, %v3132
  %v3134 = vpop.f32.mrf.mxu0
  %v3135 = vadd.f32 %v114, %v3134
  %3136 = vdwg.mxu0
  %3137 = vmatpush.bf16.msra.mxu0 %v3028
  %3138 = vmatpush.bf16.msra.mxu0 %v3024
  %3139 = vmatpush.bf16.msra.mxu0 %v3020
  %3140 = vmatpush.bf16.msra.mxu0 %v3016
  %3141 = vmatpush.bf16.msra.mxu0 %v3012
  %3142 = vmatpush.bf16.msra.mxu0 %v3008
  %3143 = vmatpush.bf16.msra.mxu0 %v3004
  %3144 = vmatpush.bf16.msra.mxu0 %v3000
  %3145 = vmatmul.bf16.gmra.mxu0 %v2772
  %v3146 = vpop.f32.mrf.mxu0
  %v3147 = vadd.f32 %v3133, %v3146
  %v3148 = vpop.f32.mrf.mxu0
  %v3149 = vadd.f32 %v3135, %v3148
  %3150 = vdwg.mxu0
  %3151 = vmatpush.bf16.msra.mxu0 %v2997
  %3152 = vmatpush.bf16.msra.mxu0 %v2993
  %3153 = vmatpush.bf16.msra.mxu0 %v2989
  %3154 = vmatpush.bf16.msra.mxu0 %v2985
  %3155 = vmatpush.bf16.msra.mxu0 %v2981
  %3156 = vmatpush.bf16.msra.mxu0 %v2977
  %3157 = vmatpush.bf16.msra.mxu0 %v2973
  %3158 = vmatpush.bf16.msra.mxu0 %v2969
  %3159 = vmatmul.bf16.gmra.mxu0 %v2771
  %v3160 = vpop.f32.mrf.mxu0
  %v3161 = vadd.f32 %v115, %v3160
  %v3162 = vpop.f32.mrf.mxu0
  %v3163 = vadd.f32 %v115, %v3162
  %3164 = vdwg.mxu0
  %3165 = vmatpush.bf16.msra.mxu0 %v3029
  %3166 = vmatpush.bf16.msra.mxu0 %v3025
  %3167 = vmatpush.bf16.msra.mxu0 %v3021
  %3168 = vmatpush.bf16.msra.mxu0 %v3017
  %3169 = vmatpush.bf16.msra.mxu0 %v3013
  %3170 = vmatpush.bf16.msra.mxu0 %v3009
  %3171 = vmatpush.bf16.msra.mxu0 %v3005
  %3172 = vmatpush.bf16.msra.mxu0 %v3001
  %3173 = vmatmul.bf16.gmra.mxu0 %v2772
  %v3174 = vpop.f32.mrf.mxu0
  %v3175 = vadd.f32 %v3161, %v3174
  %v3176 = vpop.f32.mrf.mxu0
  %v3177 = vadd.f32 %v3163, %v3176
  %3178 = vdwg.mxu0
  %3179 = vmatpush.bf16.msra.mxu0 %v2998
  %3180 = vmatpush.bf16.msra.mxu0 %v2994
  %3181 = vmatpush.bf16.msra.mxu0 %v2990
  %3182 = vmatpush.bf16.msra.mxu0 %v2986
  %3183 = vmatpush.bf16.msra.mxu0 %v2982
  %3184 = vmatpush.bf16.msra.mxu0 %v2978
  %3185 = vmatpush.bf16.msra.mxu0 %v2974
  %3186 = vmatpush.bf16.msra.mxu0 %v2970
  %3187 = vmatmul.bf16.gmra.mxu0 %v2771
  %v3188 = vpop.f32.mrf.mxu0
  %v3189 = vadd.f32 %v116, %v3188
  %v3190 = vpop.f32.mrf.mxu0
  %v3191 = vadd.f32 %v116, %v3190
  %3192 = vdwg.mxu0
  %3193 = vmatpush.bf16.msra.mxu0 %v3030
  %3194 = vmatpush.bf16.msra.mxu0 %v3026
  %3195 = vmatpush.bf16.msra.mxu0 %v3022
  %3196 = vmatpush.bf16.msra.mxu0 %v3018
  %3197 = vmatpush.bf16.msra.mxu0 %v3014
  %3198 = vmatpush.bf16.msra.mxu0 %v3010
  %3199 = vmatpush.bf16.msra.mxu0 %v3006
  %3200 = vmatpush.bf16.msra.mxu0 %v3002
  %3201 = vmatmul.bf16.gmra.mxu0 %v2772
  %v3202 = vpop.f32.mrf.mxu0
  %v3203 = vadd.f32 %v3189, %v3202
  %v3204 = vpop.f32.mrf.mxu0
  %v3205 = vadd.f32 %v3191, %v3204
  %3206 = vdwg.mxu0
  %v3207 = vxor.u32 %v3119, 2147483648
  %v3208 = vxor.u32 %v3121, 2147483648
  %v3209 = vmul.f32 %v3207, 1.442695
  %v3210 = vpow.pop %v3209
  %v3211 = vmul.f32 %v3208, 1.442695
  %v3212 = vpow.pop %v3211
  %v3213 = vadd.f32 %v3210, 1.0
  %v3214 = vadd.f32 %v3212, 1.0
  %v3215 = vrcp.pop %v3213
  %v3216 = vmul.f32 %v3213, %v3215
  %v3217 = vsub.f32 1.0, %v3216
  %v3218 = vmul.f32 %v3215, %v3217
  %v3219 = vadd.f32 %v3215, %v3218
  %vm3220 = vweird.f32 %v3213
  %vm3221 = vweird.f32 %v3215
  %vm3222 = vmor %vm3220, %vm3221
  %v3223 = vsel %vm3222, %v3215, %v3219
  %v3224 = vand.u32 2147483647, %v3213
  %vm3225 = vcmp.eq.f32.partialorder %v3224, 8.507059e+37
  %v3226 = vand.u32 %v3213, 2147483648
  %v3227 = vor.u32 1.1754944e-38, %v3226
  %v3228 = vsel %vm3225, %v3227, %v3223
  %v3229 = vmul.f32 1.0, %v3228
  %v3230 = vrcp.pop %v3214
  %v3231 = vmul.f32 %v3214, %v3230
  %v3232 = vsub.f32 1.0, %v3231
  %v3233 = vmul.f32 %v3230, %v3232
  %v3234 = vadd.f32 %v3230, %v3233
  %vm3235 = vweird.f32 %v3214
  %vm3236 = vweird.f32 %v3230
  %vm3237 = vmor %vm3235, %vm3236
  %v3238 = vsel %vm3237, %v3230, %v3234
  %v3239 = vand.u32 2147483647, %v3214
  %vm3240 = vcmp.eq.f32.partialorder %v3239, 8.507059e+37
  %v3241 = vand.u32 %v3214, 2147483648
  %v3242 = vor.u32 1.1754944e-38, %v3241
  %v3243 = vsel %vm3240, %v3242, %v3238
  %v3244 = vmul.f32 1.0, %v3243
  %v3245 = vxor.u32 %v3147, 2147483648
  %v3246 = vxor.u32 %v3149, 2147483648
  %v3247 = vmul.f32 %v3245, 1.442695
  %v3248 = vpow.pop %v3247
  %v3249 = vmul.f32 %v3246, 1.442695
  %v3250 = vpow.pop %v3249
  %v3251 = vadd.f32 %v3248, 1.0
  %v3252 = vadd.f32 %v3250, 1.0
  %v3253 = vrcp.pop %v3251
  %v3254 = vmul.f32 %v3251, %v3253
  %v3255 = vsub.f32 1.0, %v3254
  %v3256 = vmul.f32 %v3253, %v3255
  %v3257 = vadd.f32 %v3253, %v3256
  %vm3258 = vweird.f32 %v3251
  %vm3259 = vweird.f32 %v3253
  %vm3260 = vmor %vm3258, %vm3259
  %v3261 = vsel %vm3260, %v3253, %v3257
  %v3262 = vand.u32 2147483647, %v3251
  %vm3263 = vcmp.eq.f32.partialorder %v3262, 8.507059e+37
  %v3264 = vand.u32 %v3251, 2147483648
  %v3265 = vor.u32 1.1754944e-38, %v3264
  %v3266 = vsel %vm3263, %v3265, %v3261
  %v3267 = vmul.f32 1.0, %v3266
  %v3268 = vrcp.pop %v3252
  %v3269 = vmul.f32 %v3252, %v3268
  %v3270 = vsub.f32 1.0, %v3269
  %v3271 = vmul.f32 %v3268, %v3270
  %v3272 = vadd.f32 %v3268, %v3271
  %vm3273 = vweird.f32 %v3252
  %vm3274 = vweird.f32 %v3268
  %vm3275 = vmor %vm3273, %vm3274
  %v3276 = vsel %vm3275, %v3268, %v3272
  %v3277 = vand.u32 2147483647, %v3252
  %vm3278 = vcmp.eq.f32.partialorder %v3277, 8.507059e+37
  %v3279 = vand.u32 %v3252, 2147483648
  %v3280 = vor.u32 1.1754944e-38, %v3279
  %v3281 = vsel %vm3278, %v3280, %v3276
  %v3282 = vmul.f32 1.0, %v3281
  %v3283 = vtanh.pop %v3175
  %v3284 = vtanh.pop %v3177
  %v3285 = vxor.u32 %v3203, 2147483648
  %v3286 = vxor.u32 %v3205, 2147483648
  %v3287 = vmul.f32 %v3285, 1.442695
  %v3288 = vpow.pop %v3287
  %v3289 = vmul.f32 %v3286, 1.442695
  %v3290 = vpow.pop %v3289
  %v3291 = vadd.f32 %v3288, 1.0
  %v3292 = vadd.f32 %v3290, 1.0
  %v3293 = vrcp.pop %v3291
  %v3294 = vmul.f32 %v3291, %v3293
  %v3295 = vsub.f32 1.0, %v3294
  %v3296 = vmul.f32 %v3293, %v3295
  %v3297 = vadd.f32 %v3293, %v3296
  %vm3298 = vweird.f32 %v3291
  %vm3299 = vweird.f32 %v3293
  %vm3300 = vmor %vm3298, %vm3299
  %v3301 = vsel %vm3300, %v3293, %v3297
  %v3302 = vand.u32 2147483647, %v3291
  %vm3303 = vcmp.eq.f32.partialorder %v3302, 8.507059e+37
  %v3304 = vand.u32 %v3291, 2147483648
  %v3305 = vor.u32 1.1754944e-38, %v3304
  %v3306 = vsel %vm3303, %v3305, %v3301
  %v3307 = vmul.f32 1.0, %v3306
  %v3308 = vrcp.pop %v3292
  %v3309 = vmul.f32 %v3292, %v3308
  %v3310 = vsub.f32 1.0, %v3309
  %v3311 = vmul.f32 %v3308, %v3310
  %v3312 = vadd.f32 %v3308, %v3311
  %vm3313 = vweird.f32 %v3292
  %vm3314 = vweird.f32 %v3308
  %vm3315 = vmor %vm3313, %vm3314
  %v3316 = vsel %vm3315, %v3308, %v3312
  %v3317 = vand.u32 2147483647, %v3292
  %vm3318 = vcmp.eq.f32.partialorder %v3317, 8.507059e+37
  %v3319 = vand.u32 %v3292, 2147483648
  %v3320 = vor.u32 1.1754944e-38, %v3319
  %v3321 = vsel %vm3318, %v3320, %v3316
  %v3322 = vmul.f32 1.0, %v3321
  %v3323 = vld [vmem:[#allocation3] sm:$0xff]
  %v3324 = vld [vmem:[#allocation3 + $0x8] sm:$0xff]
  %v3325 = vmul.f32 %v3267, %v3323
  %v3326 = vmul.f32 %v3282, %v3324
  %v3327 = vmul.f32 %v3229, %v3283
  %v3328 = vmul.f32 %v3244, %v3284
  %v3329 = vadd.f32 %v3325, %v3327
  %v3330 = vadd.f32 %v3326, %v3328
  %v3331 = vtanh.pop %v3329
  %v3332 = vtanh.pop %v3330
  %v3333 = vmul.f32 %v3307, %v3331
  %v3334 = vmul.f32 %v3322, %v3332
  %3335 = vst [vmem:[#allocation3] sm:$0xff] %v3329
  %3336 = vst [vmem:[#allocation3 + $0x8] sm:$0xff] %v3330
  %v3337 = vpack.c.bf16 %v3333, %v3333
  %v3338 = vpack.c.bf16 %v3334, %v3334
  %3339 = vst [vmem:[#allocation2 + $0x4] sm:$0xf] %v3337
  %3340 = vst [vmem:[#allocation2 + $0xc] sm:$0xf] %v3338
  %s3341 = scalar_lea.vmem %s0, 80
  %v3342 = vld [vmem:[%s3341] sm:$0xff]
  %v3343 = vld [vmem:[%s3341 + $0x8] sm:$0xff]
  %3344 = vset.pattern.permute.xlu0 0
  %3345 = vperm.xlu0 %3344, %v3342
  %v3346 = vpop.permute.xlu0 %3345
  %3347 = vset.pattern.permute.xlu0 0
  %3348 = vperm.xlu0 %3347, %v3343
  %v3349 = vpop.permute.xlu0 %3348
  %vm3350 = vcmp.eq.s32.totalorder %v26, %v3346
  %vm3351 = vcmp.eq.s32.totalorder %v26, %v3349
  %v3352 = vsel %vm3350, 1, 0
  %v3353 = vsel %vm3351, 1, 0
  %v3354 = vcvt.s32.f32 %v3352
  %v3355 = vcvt.s32.f32 %v3353
  %v3356 = vpack.c.bf16 %v3354, %v3354
  %v3357 = vpack.c.bf16 %v3355, %v3355
  %3358 = vst [vmem:[#allocation2] sm:$0xf] %v3356
  %3359 = vst [vmem:[#allocation2 + $0x8] sm:$0xf] %v3357
  %v3360 = vld [vmem:[#allocation2] sm:$0xff]
  %v3361 = vld [vmem:[#allocation2 + $0x8] sm:$0xff]
  %v3362 = vld [vmem:[%s1] sm:$0xff]
  %v3363 = vld [vmem:[%s1 + $0x8] sm:$0xff]
  %v3364 = vld [vmem:[%s1 + $0x10] sm:$0xff]
  %v3365 = vld [vmem:[%s1 + $0x18] sm:$0xff]
  %v3366 = vld [vmem:[%s1 + $0x20] sm:$0xff]
  %v3367 = vld [vmem:[%s1 + $0x28] sm:$0xff]
  %v3368 = vld [vmem:[%s1 + $0x30] sm:$0xff]
  %v3369 = vld [vmem:[%s1 + $0x38] sm:$0xff]
  %v3370 = vld [vmem:[%s1 + $0x40] sm:$0xff]
  %v3371 = vld [vmem:[%s1 + $0x48] sm:$0xff]
  %v3372 = vld [vmem:[%s1 + $0x50] sm:$0xff]
  %v3373 = vld [vmem:[%s1 + $0x58] sm:$0xff]
  %v3374 = vld [vmem:[%s1 + $0x60] sm:$0xff]
  %v3375 = vld [vmem:[%s1 + $0x68] sm:$0xff]
  %v3376 = vld [vmem:[%s1 + $0x70] sm:$0xff]
  %v3377 = vld [vmem:[%s1 + $0x78] sm:$0xff]
  %v3378 = vld [vmem:[%s1 + $0x80] sm:$0xff]
  %v3379 = vld [vmem:[%s1 + $0x88] sm:$0xff]
  %v3380 = vld [vmem:[%s1 + $0x90] sm:$0xff]
  %v3381 = vld [vmem:[%s1 + $0x98] sm:$0xff]
  %v3382 = vld [vmem:[%s1 + $0xa0] sm:$0xff]
  %v3383 = vld [vmem:[%s1 + $0xa8] sm:$0xff]
  %v3384 = vld [vmem:[%s1 + $0xb0] sm:$0xff]
  %v3385 = vld [vmem:[%s1 + $0xb8] sm:$0xff]
  %v3386 = vld [vmem:[%s1 + $0xc0] sm:$0xff]
  %v3387 = vld [vmem:[%s1 + $0xc8] sm:$0xff]
  %v3388 = vld [vmem:[%s1 + $0xd0] sm:$0xff]
  %v3389 = vld [vmem:[%s1 + $0xd8] sm:$0xff]
  %v3390 = vld [vmem:[%s1 + $0xe0] sm:$0xff]
  %v3391 = vld [vmem:[%s1 + $0xe8] sm:$0xff]
  %v3392 = vld [vmem:[%s1 + $0xf0] sm:$0xff]
  %v3393 = vld [vmem:[%s1 + $0xf8] sm:$0xff]
  %v3394 = vld [vmem:[%s1 + $0x100] sm:$0xff]
  %v3395 = vld [vmem:[%s1 + $0x108] sm:$0xff]
  %v3396 = vld [vmem:[%s1 + $0x110] sm:$0xff]
  %v3397 = vld [vmem:[%s1 + $0x118] sm:$0xff]
  %v3398 = vld [vmem:[%s1 + $0x120] sm:$0xff]
  %v3399 = vld [vmem:[%s1 + $0x128] sm:$0xff]
  %v3400 = vld [vmem:[%s1 + $0x130] sm:$0xff]
  %v3401 = vld [vmem:[%s1 + $0x138] sm:$0xff]
  %v3402 = vld [vmem:[%s1 + $0x140] sm:$0xff]
  %v3403 = vld [vmem:[%s1 + $0x148] sm:$0xff]
  %v3404 = vld [vmem:[%s1 + $0x150] sm:$0xff]
  %v3405 = vld [vmem:[%s1 + $0x158] sm:$0xff]
  %v3406 = vld [vmem:[%s1 + $0x160] sm:$0xff]
  %v3407 = vld [vmem:[%s1 + $0x168] sm:$0xff]
  %v3408 = vld [vmem:[%s1 + $0x170] sm:$0xff]
  %v3409 = vld [vmem:[%s1 + $0x178] sm:$0xff]
  %v3410 = vld [vmem:[%s1 + $0x180] sm:$0xff]
  %v3411 = vld [vmem:[%s1 + $0x188] sm:$0xff]
  %v3412 = vld [vmem:[%s1 + $0x190] sm:$0xff]
  %v3413 = vld [vmem:[%s1 + $0x198] sm:$0xff]
  %v3414 = vld [vmem:[%s1 + $0x1a0] sm:$0xff]
  %v3415 = vld [vmem:[%s1 + $0x1a8] sm:$0xff]
  %v3416 = vld [vmem:[%s1 + $0x1b0] sm:$0xff]
  %v3417 = vld [vmem:[%s1 + $0x1b8] sm:$0xff]
  %v3418 = vld [vmem:[%s1 + $0x1c0] sm:$0xff]
  %v3419 = vld [vmem:[%s1 + $0x1c8] sm:$0xff]
  %v3420 = vld [vmem:[%s1 + $0x1d0] sm:$0xff]
  %v3421 = vld [vmem:[%s1 + $0x1d8] sm:$0xff]
  %v3422 = vld [vmem:[%s1 + $0x1e0] sm:$0xff]
  %v3423 = vld [vmem:[%s1 + $0x1e8] sm:$0xff]
  %v3424 = vld [vmem:[%s1 + $0x1f0] sm:$0xff]
  %v3425 = vld [vmem:[%s1 + $0x1f8] sm:$0xff]
  %v3428 = vunpack.c.l.b16 %v3360
  %v3429 = vunpack.c.h.b16 %v3360
  %v3430 = vunpack.c.l.b16 %v3361
  %v3431 = vunpack.c.h.b16 %v3361
  %v3432 = vpack.c.b16 %v3430, %v3428
  %v3433 = vpack.c.b16 %v3431, %v3429
  %v3500 = vunpack.c.l.b16 %v3362
  %v3501 = vunpack.c.h.b16 %v3362
  %v3502 = vunpack.c.l.b16 %v3363
  %v3503 = vunpack.c.h.b16 %v3363
  %v3504 = vunpack.c.l.b16 %v3364
  %v3505 = vunpack.c.h.b16 %v3364
  %v3506 = vunpack.c.l.b16 %v3365
  %v3507 = vunpack.c.h.b16 %v3365
  %v3508 = vunpack.c.l.b16 %v3366
  %v3509 = vunpack.c.h.b16 %v3366
  %v3510 = vunpack.c.l.b16 %v3367
  %v3511 = vunpack.c.h.b16 %v3367
  %v3512 = vunpack.c.l.b16 %v3368
  %v3513 = vunpack.c.h.b16 %v3368
  %v3514 = vunpack.c.l.b16 %v3369
  %v3515 = vunpack.c.h.b16 %v3369
  %v3516 = vunpack.c.l.b16 %v3370
  %v3517 = vunpack.c.h.b16 %v3370
  %v3518 = vunpack.c.l.b16 %v3371
  %v3519 = vunpack.c.h.b16 %v3371
  %v3520 = vunpack.c.l.b16 %v3372
  %v3521 = vunpack.c.h.b16 %v3372
  %v3522 = vunpack.c.l.b16 %v3373
  %v3523 = vunpack.c.h.b16 %v3373
  %v3524 = vunpack.c.l.b16 %v3374
  %v3525 = vunpack.c.h.b16 %v3374
  %v3526 = vunpack.c.l.b16 %v3375
  %v3527 = vunpack.c.h.b16 %v3375
  %v3528 = vunpack.c.l.b16 %v3376
  %v3529 = vunpack.c.h.b16 %v3376
  %v3530 = vunpack.c.l.b16 %v3377
  %v3531 = vunpack.c.h.b16 %v3377
  %v3532 = vunpack.c.l.b16 %v3378
  %v3533 = vunpack.c.h.b16 %v3378
  %v3534 = vunpack.c.l.b16 %v3379
  %v3535 = vunpack.c.h.b16 %v3379
  %v3536 = vunpack.c.l.b16 %v3380
  %v3537 = vunpack.c.h.b16 %v3380
  %v3538 = vunpack.c.l.b16 %v3381
  %v3539 = vunpack.c.h.b16 %v3381
  %v3540 = vunpack.c.l.b16 %v3382
  %v3541 = vunpack.c.h.b16 %v3382
  %v3542 = vunpack.c.l.b16 %v3383
  %v3543 = vunpack.c.h.b16 %v3383
  %v3544 = vunpack.c.l.b16 %v3384
  %v3545 = vunpack.c.h.b16 %v3384
  %v3546 = vunpack.c.l.b16 %v3385
  %v3547 = vunpack.c.h.b16 %v3385
  %v3548 = vunpack.c.l.b16 %v3386
  %v3549 = vunpack.c.h.b16 %v3386
  %v3550 = vunpack.c.l.b16 %v3387
  %v3551 = vunpack.c.h.b16 %v3387
  %v3552 = vunpack.c.l.b16 %v3388
  %v3553 = vunpack.c.h.b16 %v3388
  %v3554 = vunpack.c.l.b16 %v3389
  %v3555 = vunpack.c.h.b16 %v3389
  %v3556 = vunpack.c.l.b16 %v3390
  %v3557 = vunpack.c.h.b16 %v3390
  %v3558 = vunpack.c.l.b16 %v3391
  %v3559 = vunpack.c.h.b16 %v3391
  %v3560 = vunpack.c.l.b16 %v3392
  %v3561 = vunpack.c.h.b16 %v3392
  %v3562 = vunpack.c.l.b16 %v3393
  %v3563 = vunpack.c.h.b16 %v3393
  %v3564 = vunpack.c.l.b16 %v3394
  %v3565 = vunpack.c.h.b16 %v3394
  %v3566 = vunpack.c.l.b16 %v3395
  %v3567 = vunpack.c.h.b16 %v3395
  %v3568 = vunpack.c.l.b16 %v3396
  %v3569 = vunpack.c.h.b16 %v3396
  %v3570 = vunpack.c.l.b16 %v3397
  %v3571 = vunpack.c.h.b16 %v3397
  %v3572 = vunpack.c.l.b16 %v3398
  %v3573 = vunpack.c.h.b16 %v3398
  %v3574 = vunpack.c.l.b16 %v3399
  %v3575 = vunpack.c.h.b16 %v3399
  %v3576 = vunpack.c.l.b16 %v3400
  %v3577 = vunpack.c.h.b16 %v3400
  %v3578 = vunpack.c.l.b16 %v3401
  %v3579 = vunpack.c.h.b16 %v3401
  %v3580 = vunpack.c.l.b16 %v3402
  %v3581 = vunpack.c.h.b16 %v3402
  %v3582 = vunpack.c.l.b16 %v3403
  %v3583 = vunpack.c.h.b16 %v3403
  %v3584 = vunpack.c.l.b16 %v3404
  %v3585 = vunpack.c.h.b16 %v3404
  %v3586 = vunpack.c.l.b16 %v3405
  %v3587 = vunpack.c.h.b16 %v3405
  %v3588 = vunpack.c.l.b16 %v3406
  %v3589 = vunpack.c.h.b16 %v3406
  %v3590 = vunpack.c.l.b16 %v3407
  %v3591 = vunpack.c.h.b16 %v3407
  %v3592 = vunpack.c.l.b16 %v3408
  %v3593 = vunpack.c.h.b16 %v3408
  %v3594 = vunpack.c.l.b16 %v3409
  %v3595 = vunpack.c.h.b16 %v3409
  %v3596 = vunpack.c.l.b16 %v3410
  %v3597 = vunpack.c.h.b16 %v3410
  %v3598 = vunpack.c.l.b16 %v3411
  %v3599 = vunpack.c.h.b16 %v3411
  %v3600 = vunpack.c.l.b16 %v3412
  %v3601 = vunpack.c.h.b16 %v3412
  %v3602 = vunpack.c.l.b16 %v3413
  %v3603 = vunpack.c.h.b16 %v3413
  %v3604 = vunpack.c.l.b16 %v3414
  %v3605 = vunpack.c.h.b16 %v3414
  %v3606 = vunpack.c.l.b16 %v3415
  %v3607 = vunpack.c.h.b16 %v3415
  %v3608 = vunpack.c.l.b16 %v3416
  %v3609 = vunpack.c.h.b16 %v3416
  %v3610 = vunpack.c.l.b16 %v3417
  %v3611 = vunpack.c.h.b16 %v3417
  %v3612 = vunpack.c.l.b16 %v3418
  %v3613 = vunpack.c.h.b16 %v3418
  %v3614 = vunpack.c.l.b16 %v3419
  %v3615 = vunpack.c.h.b16 %v3419
  %v3616 = vunpack.c.l.b16 %v3420
  %v3617 = vunpack.c.h.b16 %v3420
  %v3618 = vunpack.c.l.b16 %v3421
  %v3619 = vunpack.c.h.b16 %v3421
  %v3620 = vunpack.c.l.b16 %v3422
  %v3621 = vunpack.c.h.b16 %v3422
  %v3622 = vunpack.c.l.b16 %v3423
  %v3623 = vunpack.c.h.b16 %v3423
  %v3624 = vunpack.c.l.b16 %v3424
  %v3625 = vunpack.c.h.b16 %v3424
  %v3626 = vunpack.c.l.b16 %v3425
  %v3627 = vunpack.c.h.b16 %v3425
  %v3628 = vpack.c.b16 %v3504, %v3500
  %v3629 = vpack.c.b16 %v3505, %v3501
  %v3630 = vpack.c.b16 %v3506, %v3502
  %v3631 = vpack.c.b16 %v3507, %v3503
  %v3632 = vpack.c.b16 %v3512, %v3508
  %v3633 = vpack.c.b16 %v3513, %v3509
  %v3634 = vpack.c.b16 %v3514, %v3510
  %v3635 = vpack.c.b16 %v3515, %v3511
  %v3636 = vpack.c.b16 %v3520, %v3516
  %v3637 = vpack.c.b16 %v3521, %v3517
  %v3638 = vpack.c.b16 %v3522, %v3518
  %v3639 = vpack.c.b16 %v3523, %v3519
  %v3640 = vpack.c.b16 %v3528, %v3524
  %v3641 = vpack.c.b16 %v3529, %v3525
  %v3642 = vpack.c.b16 %v3530, %v3526
  %v3643 = vpack.c.b16 %v3531, %v3527
  %v3644 = vpack.c.b16 %v3536, %v3532
  %v3645 = vpack.c.b16 %v3537, %v3533
  %v3646 = vpack.c.b16 %v3538, %v3534
  %v3647 = vpack.c.b16 %v3539, %v3535
  %v3648 = vpack.c.b16 %v3544, %v3540
  %v3649 = vpack.c.b16 %v3545, %v3541
  %v3650 = vpack.c.b16 %v3546, %v3542
  %v3651 = vpack.c.b16 %v3547, %v3543
  %v3652 = vpack.c.b16 %v3552, %v3548
  %v3653 = vpack.c.b16 %v3553, %v3549
  %v3654 = vpack.c.b16 %v3554, %v3550
  %v3655 = vpack.c.b16 %v3555, %v3551
  %v3656 = vpack.c.b16 %v3560, %v3556
  %v3657 = vpack.c.b16 %v3561, %v3557
  %v3658 = vpack.c.b16 %v3562, %v3558
  %v3659 = vpack.c.b16 %v3563, %v3559
  %v3660 = vpack.c.b16 %v3568, %v3564
  %v3661 = vpack.c.b16 %v3569, %v3565
  %v3662 = vpack.c.b16 %v3570, %v3566
  %v3663 = vpack.c.b16 %v3571, %v3567
  %v3664 = vpack.c.b16 %v3576, %v3572
  %v3665 = vpack.c.b16 %v3577, %v3573
  %v3666 = vpack.c.b16 %v3578, %v3574
  %v3667 = vpack.c.b16 %v3579, %v3575
  %v3668 = vpack.c.b16 %v3584, %v3580
  %v3669 = vpack.c.b16 %v3585, %v3581
  %v3670 = vpack.c.b16 %v3586, %v3582
  %v3671 = vpack.c.b16 %v3587, %v3583
  %v3672 = vpack.c.b16 %v3592, %v3588
  %v3673 = vpack.c.b16 %v3593, %v3589
  %v3674 = vpack.c.b16 %v3594, %v3590
  %v3675 = vpack.c.b16 %v3595, %v3591
  %v3676 = vpack.c.b16 %v3600, %v3596
  %v3677 = vpack.c.b16 %v3601, %v3597
  %v3678 = vpack.c.b16 %v3602, %v3598
  %v3679 = vpack.c.b16 %v3603, %v3599
  %v3680 = vpack.c.b16 %v3608, %v3604
  %v3681 = vpack.c.b16 %v3609, %v3605
  %v3682 = vpack.c.b16 %v3610, %v3606
  %v3683 = vpack.c.b16 %v3611, %v3607
  %v3684 = vpack.c.b16 %v3616, %v3612
  %v3685 = vpack.c.b16 %v3617, %v3613
  %v3686 = vpack.c.b16 %v3618, %v3614
  %v3687 = vpack.c.b16 %v3619, %v3615
  %v3688 = vpack.c.b16 %v3624, %v3620
  %v3689 = vpack.c.b16 %v3625, %v3621
  %v3690 = vpack.c.b16 %v3626, %v3622
  %v3691 = vpack.c.b16 %v3627, %v3623
  %3756 = vmatpush.bf16.msra.mxu0 %v3656
  %3757 = vmatpush.bf16.msra.mxu0 %v3652
  %3758 = vmatpush.bf16.msra.mxu0 %v3648
  %3759 = vmatpush.bf16.msra.mxu0 %v3644
  %3760 = vmatpush.bf16.msra.mxu0 %v3640
  %3761 = vmatpush.bf16.msra.mxu0 %v3636
  %3762 = vmatpush.bf16.msra.mxu0 %v3632
  %3763 = vmatpush.bf16.msra.mxu0 %v3628
  %3764 = vmatmul.bf16.gmra.mxu0 %v3432
  %v3765 = vpop.f32.mrf.mxu0
  %v3766 = vadd.f32 %v113, %v3765
  %v3767 = vpop.f32.mrf.mxu0
  %v3768 = vadd.f32 %v113, %v3767
  %3769 = vdwg.mxu0
  %3770 = vmatpush.bf16.msra.mxu0 %v3688
  %3771 = vmatpush.bf16.msra.mxu0 %v3684
  %3772 = vmatpush.bf16.msra.mxu0 %v3680
  %3773 = vmatpush.bf16.msra.mxu0 %v3676
  %3774 = vmatpush.bf16.msra.mxu0 %v3672
  %3775 = vmatpush.bf16.msra.mxu0 %v3668
  %3776 = vmatpush.bf16.msra.mxu0 %v3664
  %3777 = vmatpush.bf16.msra.mxu0 %v3660
  %3778 = vmatmul.bf16.gmra.mxu0 %v3433
  %v3779 = vpop.f32.mrf.mxu0
  %v3780 = vadd.f32 %v3766, %v3779
  %v3781 = vpop.f32.mrf.mxu0
  %v3782 = vadd.f32 %v3768, %v3781
  %3783 = vdwg.mxu0
  %3784 = vmatpush.bf16.msra.mxu0 %v3657
  %3785 = vmatpush.bf16.msra.mxu0 %v3653
  %3786 = vmatpush.bf16.msra.mxu0 %v3649
  %3787 = vmatpush.bf16.msra.mxu0 %v3645
  %3788 = vmatpush.bf16.msra.mxu0 %v3641
  %3789 = vmatpush.bf16.msra.mxu0 %v3637
  %3790 = vmatpush.bf16.msra.mxu0 %v3633
  %3791 = vmatpush.bf16.msra.mxu0 %v3629
  %3792 = vmatmul.bf16.gmra.mxu0 %v3432
  %v3793 = vpop.f32.mrf.mxu0
  %v3794 = vadd.f32 %v114, %v3793
  %v3795 = vpop.f32.mrf.mxu0
  %v3796 = vadd.f32 %v114, %v3795
  %3797 = vdwg.mxu0
  %3798 = vmatpush.bf16.msra.mxu0 %v3689
  %3799 = vmatpush.bf16.msra.mxu0 %v3685
  %3800 = vmatpush.bf16.msra.mxu0 %v3681
  %3801 = vmatpush.bf16.msra.mxu0 %v3677
  %3802 = vmatpush.bf16.msra.mxu0 %v3673
  %3803 = vmatpush.bf16.msra.mxu0 %v3669
  %3804 = vmatpush.bf16.msra.mxu0 %v3665
  %3805 = vmatpush.bf16.msra.mxu0 %v3661
  %3806 = vmatmul.bf16.gmra.mxu0 %v3433
  %v3807 = vpop.f32.mrf.mxu0
  %v3808 = vadd.f32 %v3794, %v3807
  %v3809 = vpop.f32.mrf.mxu0
  %v3810 = vadd.f32 %v3796, %v3809
  %3811 = vdwg.mxu0
  %3812 = vmatpush.bf16.msra.mxu0 %v3658
  %3813 = vmatpush.bf16.msra.mxu0 %v3654
  %3814 = vmatpush.bf16.msra.mxu0 %v3650
  %3815 = vmatpush.bf16.msra.mxu0 %v3646
  %3816 = vmatpush.bf16.msra.mxu0 %v3642
  %3817 = vmatpush.bf16.msra.mxu0 %v3638
  %3818 = vmatpush.bf16.msra.mxu0 %v3634
  %3819 = vmatpush.bf16.msra.mxu0 %v3630
  %3820 = vmatmul.bf16.gmra.mxu0 %v3432
  %v3821 = vpop.f32.mrf.mxu0
  %v3822 = vadd.f32 %v115, %v3821
  %v3823 = vpop.f32.mrf.mxu0
  %v3824 = vadd.f32 %v115, %v3823
  %3825 = vdwg.mxu0
  %3826 = vmatpush.bf16.msra.mxu0 %v3690
  %3827 = vmatpush.bf16.msra.mxu0 %v3686
  %3828 = vmatpush.bf16.msra.mxu0 %v3682
  %3829 = vmatpush.bf16.msra.mxu0 %v3678
  %3830 = vmatpush.bf16.msra.mxu0 %v3674
  %3831 = vmatpush.bf16.msra.mxu0 %v3670
  %3832 = vmatpush.bf16.msra.mxu0 %v3666
  %3833 = vmatpush.bf16.msra.mxu0 %v3662
  %3834 = vmatmul.bf16.gmra.mxu0 %v3433
  %v3835 = vpop.f32.mrf.mxu0
  %v3836 = vadd.f32 %v3822, %v3835
  %v3837 = vpop.f32.mrf.mxu0
  %v3838 = vadd.f32 %v3824, %v3837
  %3839 = vdwg.mxu0
  %3840 = vmatpush.bf16.msra.mxu0 %v3659
  %3841 = vmatpush.bf16.msra.mxu0 %v3655
  %3842 = vmatpush.bf16.msra.mxu0 %v3651
  %3843 = vmatpush.bf16.msra.mxu0 %v3647
  %3844 = vmatpush.bf16.msra.mxu0 %v3643
  %3845 = vmatpush.bf16.msra.mxu0 %v3639
  %3846 = vmatpush.bf16.msra.mxu0 %v3635
  %3847 = vmatpush.bf16.msra.mxu0 %v3631
  %3848 = vmatmul.bf16.gmra.mxu0 %v3432
  %v3849 = vpop.f32.mrf.mxu0
  %v3850 = vadd.f32 %v116, %v3849
  %v3851 = vpop.f32.mrf.mxu0
  %v3852 = vadd.f32 %v116, %v3851
  %3853 = vdwg.mxu0
  %3854 = vmatpush.bf16.msra.mxu0 %v3691
  %3855 = vmatpush.bf16.msra.mxu0 %v3687
  %3856 = vmatpush.bf16.msra.mxu0 %v3683
  %3857 = vmatpush.bf16.msra.mxu0 %v3679
  %3858 = vmatpush.bf16.msra.mxu0 %v3675
  %3859 = vmatpush.bf16.msra.mxu0 %v3671
  %3860 = vmatpush.bf16.msra.mxu0 %v3667
  %3861 = vmatpush.bf16.msra.mxu0 %v3663
  %3862 = vmatmul.bf16.gmra.mxu0 %v3433
  %v3863 = vpop.f32.mrf.mxu0
  %v3864 = vadd.f32 %v3850, %v3863
  %v3865 = vpop.f32.mrf.mxu0
  %v3866 = vadd.f32 %v3852, %v3865
  %3867 = vdwg.mxu0
  %v3868 = vxor.u32 %v3780, 2147483648
  %v3869 = vxor.u32 %v3782, 2147483648
  %v3870 = vmul.f32 %v3868, 1.442695
  %v3871 = vpow.pop %v3870
  %v3872 = vmul.f32 %v3869, 1.442695
  %v3873 = vpow.pop %v3872
  %v3874 = vadd.f32 %v3871, 1.0
  %v3875 = vadd.f32 %v3873, 1.0
  %v3876 = vrcp.pop %v3874
  %v3877 = vmul.f32 %v3874, %v3876
  %v3878 = vsub.f32 1.0, %v3877
  %v3879 = vmul.f32 %v3876, %v3878
  %v3880 = vadd.f32 %v3876, %v3879
  %vm3881 = vweird.f32 %v3874
  %vm3882 = vweird.f32 %v3876
  %vm3883 = vmor %vm3881, %vm3882
  %v3884 = vsel %vm3883, %v3876, %v3880
  %v3885 = vand.u32 2147483647, %v3874
  %vm3886 = vcmp.eq.f32.partialorder %v3885, 8.507059e+37
  %v3887 = vand.u32 %v3874, 2147483648
  %v3888 = vor.u32 1.1754944e-38, %v3887
  %v3889 = vsel %vm3886, %v3888, %v3884
  %v3890 = vmul.f32 1.0, %v3889
  %v3891 = vrcp.pop %v3875
  %v3892 = vmul.f32 %v3875, %v3891
  %v3893 = vsub.f32 1.0, %v3892
  %v3894 = vmul.f32 %v3891, %v3893
  %v3895 = vadd.f32 %v3891, %v3894
  %vm3896 = vweird.f32 %v3875
  %vm3897 = vweird.f32 %v3891
  %vm3898 = vmor %vm3896, %vm3897
  %v3899 = vsel %vm3898, %v3891, %v3895
  %v3900 = vand.u32 2147483647, %v3875
  %vm3901 = vcmp.eq.f32.partialorder %v3900, 8.507059e+37
  %v3902 = vand.u32 %v3875, 2147483648
  %v3903 = vor.u32 1.1754944e-38, %v3902
  %v3904 = vsel %vm3901, %v3903, %v3899
  %v3905 = vmul.f32 1.0, %v3904
  %v3906 = vxor.u32 %v3808, 2147483648
  %v3907 = vxor.u32 %v3810, 2147483648
  %v3908 = vmul.f32 %v3906, 1.442695
  %v3909 = vpow.pop %v3908
  %v3910 = vmul.f32 %v3907, 1.442695
  %v3911 = vpow.pop %v3910
  %v3912 = vadd.f32 %v3909, 1.0
  %v3913 = vadd.f32 %v3911, 1.0
  %v3914 = vrcp.pop %v3912
  %v3915 = vmul.f32 %v3912, %v3914
  %v3916 = vsub.f32 1.0, %v3915
  %v3917 = vmul.f32 %v3914, %v3916
  %v3918 = vadd.f32 %v3914, %v3917
  %vm3919 = vweird.f32 %v3912
  %vm3920 = vweird.f32 %v3914
  %vm3921 = vmor %vm3919, %vm3920
  %v3922 = vsel %vm3921, %v3914, %v3918
  %v3923 = vand.u32 2147483647, %v3912
  %vm3924 = vcmp.eq.f32.partialorder %v3923, 8.507059e+37
  %v3925 = vand.u32 %v3912, 2147483648
  %v3926 = vor.u32 1.1754944e-38, %v3925
  %v3927 = vsel %vm3924, %v3926, %v3922
  %v3928 = vmul.f32 1.0, %v3927
  %v3929 = vrcp.pop %v3913
  %v3930 = vmul.f32 %v3913, %v3929
  %v3931 = vsub.f32 1.0, %v3930
  %v3932 = vmul.f32 %v3929, %v3931
  %v3933 = vadd.f32 %v3929, %v3932
  %vm3934 = vweird.f32 %v3913
  %vm3935 = vweird.f32 %v3929
  %vm3936 = vmor %vm3934, %vm3935
  %v3937 = vsel %vm3936, %v3929, %v3933
  %v3938 = vand.u32 2147483647, %v3913
  %vm3939 = vcmp.eq.f32.partialorder %v3938, 8.507059e+37
  %v3940 = vand.u32 %v3913, 2147483648
  %v3941 = vor.u32 1.1754944e-38, %v3940
  %v3942 = vsel %vm3939, %v3941, %v3937
  %v3943 = vmul.f32 1.0, %v3942
  %v3944 = vtanh.pop %v3836
  %v3945 = vtanh.pop %v3838
  %v3946 = vxor.u32 %v3864, 2147483648
  %v3947 = vxor.u32 %v3866, 2147483648
  %v3948 = vmul.f32 %v3946, 1.442695
  %v3949 = vpow.pop %v3948
  %v3950 = vmul.f32 %v3947, 1.442695
  %v3951 = vpow.pop %v3950
  %v3952 = vadd.f32 %v3949, 1.0
  %v3953 = vadd.f32 %v3951, 1.0
  %v3954 = vrcp.pop %v3952
  %v3955 = vmul.f32 %v3952, %v3954
  %v3956 = vsub.f32 1.0, %v3955
  %v3957 = vmul.f32 %v3954, %v3956
  %v3958 = vadd.f32 %v3954, %v3957
  %vm3959 = vweird.f32 %v3952
  %vm3960 = vweird.f32 %v3954
  %vm3961 = vmor %vm3959, %vm3960
  %v3962 = vsel %vm3961, %v3954, %v3958
  %v3963 = vand.u32 2147483647, %v3952
  %vm3964 = vcmp.eq.f32.partialorder %v3963, 8.507059e+37
  %v3965 = vand.u32 %v3952, 2147483648
  %v3966 = vor.u32 1.1754944e-38, %v3965
  %v3967 = vsel %vm3964, %v3966, %v3962
  %v3968 = vmul.f32 1.0, %v3967
  %v3969 = vrcp.pop %v3953
  %v3970 = vmul.f32 %v3953, %v3969
  %v3971 = vsub.f32 1.0, %v3970
  %v3972 = vmul.f32 %v3969, %v3971
  %v3973 = vadd.f32 %v3969, %v3972
  %vm3974 = vweird.f32 %v3953
  %vm3975 = vweird.f32 %v3969
  %vm3976 = vmor %vm3974, %vm3975
  %v3977 = vsel %vm3976, %v3969, %v3973
  %v3978 = vand.u32 2147483647, %v3953
  %vm3979 = vcmp.eq.f32.partialorder %v3978, 8.507059e+37
  %v3980 = vand.u32 %v3953, 2147483648
  %v3981 = vor.u32 1.1754944e-38, %v3980
  %v3982 = vsel %vm3979, %v3981, %v3977
  %v3983 = vmul.f32 1.0, %v3982
  %v3984 = vld [vmem:[#allocation3] sm:$0xff]
  %v3985 = vld [vmem:[#allocation3 + $0x8] sm:$0xff]
  %v3986 = vmul.f32 %v3928, %v3984
  %v3987 = vmul.f32 %v3943, %v3985
  %v3988 = vmul.f32 %v3890, %v3944
  %v3989 = vmul.f32 %v3905, %v3945
  %v3990 = vadd.f32 %v3986, %v3988
  %v3991 = vadd.f32 %v3987, %v3989
  %v3992 = vtanh.pop %v3990
  %v3993 = vtanh.pop %v3991
  %v3994 = vmul.f32 %v3968, %v3992
  %v3995 = vmul.f32 %v3983, %v3993
  %3996 = vst [vmem:[#allocation3] sm:$0xff] %v3990
  %3997 = vst [vmem:[#allocation3 + $0x8] sm:$0xff] %v3991
  %v3998 = vpack.c.bf16 %v3994, %v3994
  %v3999 = vpack.c.bf16 %v3995, %v3995
  %4000 = vst [vmem:[#allocation2 + $0x4] sm:$0xf] %v3998
  %4001 = vst [vmem:[#allocation2 + $0xc] sm:$0xf] %v3999
  %s4002 = scalar_lea.vmem %s0, 96
  %v4003 = vld [vmem:[%s4002] sm:$0xff]
  %v4004 = vld [vmem:[%s4002 + $0x8] sm:$0xff]
  %4005 = vset.pattern.permute.xlu0 0
  %4006 = vperm.xlu0 %4005, %v4003
  %v4007 = vpop.permute.xlu0 %4006
  %4008 = vset.pattern.permute.xlu0 0
  %4009 = vperm.xlu0 %4008, %v4004
  %v4010 = vpop.permute.xlu0 %4009
  %vm4011 = vcmp.eq.s32.totalorder %v26, %v4007
  %vm4012 = vcmp.eq.s32.totalorder %v26, %v4010
  %v4013 = vsel %vm4011, 1, 0
  %v4014 = vsel %vm4012, 1, 0
  %v4015 = vcvt.s32.f32 %v4013
  %v4016 = vcvt.s32.f32 %v4014
  %v4017 = vpack.c.bf16 %v4015, %v4015
  %v4018 = vpack.c.bf16 %v4016, %v4016
  %4019 = vst [vmem:[#allocation2] sm:$0xf] %v4017
  %4020 = vst [vmem:[#allocation2 + $0x8] sm:$0xf] %v4018
  %v4021 = vld [vmem:[#allocation2] sm:$0xff]
  %v4022 = vld [vmem:[#allocation2 + $0x8] sm:$0xff]
  %v4023 = vld [vmem:[%s1] sm:$0xff]
  %v4024 = vld [vmem:[%s1 + $0x8] sm:$0xff]
  %v4025 = vld [vmem:[%s1 + $0x10] sm:$0xff]
  %v4026 = vld [vmem:[%s1 + $0x18] sm:$0xff]
  %v4027 = vld [vmem:[%s1 + $0x20] sm:$0xff]
  %v4028 = vld [vmem:[%s1 + $0x28] sm:$0xff]
  %v4029 = vld [vmem:[%s1 + $0x30] sm:$0xff]
  %v4030 = vld [vmem:[%s1 + $0x38] sm:$0xff]
  %v4031 = vld [vmem:[%s1 + $0x40] sm:$0xff]
  %v4032 = vld [vmem:[%s1 + $0x48] sm:$0xff]
  %v4033 = vld [vmem:[%s1 + $0x50] sm:$0xff]
  %v4034 = vld [vmem:[%s1 + $0x58] sm:$0xff]
  %v4035 = vld [vmem:[%s1 + $0x60] sm:$0xff]
  %v4036 = vld [vmem:[%s1 + $0x68] sm:$0xff]
  %v4037 = vld [vmem:[%s1 + $0x70] sm:$0xff]
  %v4038 = vld [vmem:[%s1 + $0x78] sm:$0xff]
  %v4039 = vld [vmem:[%s1 + $0x80] sm:$0xff]
  %v4040 = vld [vmem:[%s1 + $0x88] sm:$0xff]
  %v4041 = vld [vmem:[%s1 + $0x90] sm:$0xff]
  %v4042 = vld [vmem:[%s1 + $0x98] sm:$0xff]
  %v4043 = vld [vmem:[%s1 + $0xa0] sm:$0xff]
  %v4044 = vld [vmem:[%s1 + $0xa8] sm:$0xff]
  %v4045 = vld [vmem:[%s1 + $0xb0] sm:$0xff]
  %v4046 = vld [vmem:[%s1 + $0xb8] sm:$0xff]
  %v4047 = vld [vmem:[%s1 + $0xc0] sm:$0xff]
  %v4048 = vld [vmem:[%s1 + $0xc8] sm:$0xff]
  %v4049 = vld [vmem:[%s1 + $0xd0] sm:$0xff]
  %v4050 = vld [vmem:[%s1 + $0xd8] sm:$0xff]
  %v4051 = vld [vmem:[%s1 + $0xe0] sm:$0xff]
  %v4052 = vld [vmem:[%s1 + $0xe8] sm:$0xff]
  %v4053 = vld [vmem:[%s1 + $0xf0] sm:$0xff]
  %v4054 = vld [vmem:[%s1 + $0xf8] sm:$0xff]
  %v4055 = vld [vmem:[%s1 + $0x100] sm:$0xff]
  %v4056 = vld [vmem:[%s1 + $0x108] sm:$0xff]
  %v4057 = vld [vmem:[%s1 + $0x110] sm:$0xff]
  %v4058 = vld [vmem:[%s1 + $0x118] sm:$0xff]
  %v4059 = vld [vmem:[%s1 + $0x120] sm:$0xff]
  %v4060 = vld [vmem:[%s1 + $0x128] sm:$0xff]
  %v4061 = vld [vmem:[%s1 + $0x130] sm:$0xff]
  %v4062 = vld [vmem:[%s1 + $0x138] sm:$0xff]
  %v4063 = vld [vmem:[%s1 + $0x140] sm:$0xff]
  %v4064 = vld [vmem:[%s1 + $0x148] sm:$0xff]
  %v4065 = vld [vmem:[%s1 + $0x150] sm:$0xff]
  %v4066 = vld [vmem:[%s1 + $0x158] sm:$0xff]
  %v4067 = vld [vmem:[%s1 + $0x160] sm:$0xff]
  %v4068 = vld [vmem:[%s1 + $0x168] sm:$0xff]
  %v4069 = vld [vmem:[%s1 + $0x170] sm:$0xff]
  %v4070 = vld [vmem:[%s1 + $0x178] sm:$0xff]
  %v4071 = vld [vmem:[%s1 + $0x180] sm:$0xff]
  %v4072 = vld [vmem:[%s1 + $0x188] sm:$0xff]
  %v4073 = vld [vmem:[%s1 + $0x190] sm:$0xff]
  %v4074 = vld [vmem:[%s1 + $0x198] sm:$0xff]
  %v4075 = vld [vmem:[%s1 + $0x1a0] sm:$0xff]
  %v4076 = vld [vmem:[%s1 + $0x1a8] sm:$0xff]
  %v4077 = vld [vmem:[%s1 + $0x1b0] sm:$0xff]
  %v4078 = vld [vmem:[%s1 + $0x1b8] sm:$0xff]
  %v4079 = vld [vmem:[%s1 + $0x1c0] sm:$0xff]
  %v4080 = vld [vmem:[%s1 + $0x1c8] sm:$0xff]
  %v4081 = vld [vmem:[%s1 + $0x1d0] sm:$0xff]
  %v4082 = vld [vmem:[%s1 + $0x1d8] sm:$0xff]
  %v4083 = vld [vmem:[%s1 + $0x1e0] sm:$0xff]
  %v4084 = vld [vmem:[%s1 + $0x1e8] sm:$0xff]
  %v4085 = vld [vmem:[%s1 + $0x1f0] sm:$0xff]
  %v4086 = vld [vmem:[%s1 + $0x1f8] sm:$0xff]
  %v4089 = vunpack.c.l.b16 %v4021
  %v4090 = vunpack.c.h.b16 %v4021
  %v4091 = vunpack.c.l.b16 %v4022
  %v4092 = vunpack.c.h.b16 %v4022
  %v4093 = vpack.c.b16 %v4091, %v4089
  %v4094 = vpack.c.b16 %v4092, %v4090
  %v4161 = vunpack.c.l.b16 %v4023
  %v4162 = vunpack.c.h.b16 %v4023
  %v4163 = vunpack.c.l.b16 %v4024
  %v4164 = vunpack.c.h.b16 %v4024
  %v4165 = vunpack.c.l.b16 %v4025
  %v4166 = vunpack.c.h.b16 %v4025
  %v4167 = vunpack.c.l.b16 %v4026
  %v4168 = vunpack.c.h.b16 %v4026
  %v4169 = vunpack.c.l.b16 %v4027
  %v4170 = vunpack.c.h.b16 %v4027
  %v4171 = vunpack.c.l.b16 %v4028
  %v4172 = vunpack.c.h.b16 %v4028
  %v4173 = vunpack.c.l.b16 %v4029
  %v4174 = vunpack.c.h.b16 %v4029
  %v4175 = vunpack.c.l.b16 %v4030
  %v4176 = vunpack.c.h.b16 %v4030
  %v4177 = vunpack.c.l.b16 %v4031
  %v4178 = vunpack.c.h.b16 %v4031
  %v4179 = vunpack.c.l.b16 %v4032
  %v4180 = vunpack.c.h.b16 %v4032
  %v4181 = vunpack.c.l.b16 %v4033
  %v4182 = vunpack.c.h.b16 %v4033
  %v4183 = vunpack.c.l.b16 %v4034
  %v4184 = vunpack.c.h.b16 %v4034
  %v4185 = vunpack.c.l.b16 %v4035
  %v4186 = vunpack.c.h.b16 %v4035
  %v4187 = vunpack.c.l.b16 %v4036
  %v4188 = vunpack.c.h.b16 %v4036
  %v4189 = vunpack.c.l.b16 %v4037
  %v4190 = vunpack.c.h.b16 %v4037
  %v4191 = vunpack.c.l.b16 %v4038
  %v4192 = vunpack.c.h.b16 %v4038
  %v4193 = vunpack.c.l.b16 %v4039
  %v4194 = vunpack.c.h.b16 %v4039
  %v4195 = vunpack.c.l.b16 %v4040
  %v4196 = vunpack.c.h.b16 %v4040
  %v4197 = vunpack.c.l.b16 %v4041
  %v4198 = vunpack.c.h.b16 %v4041
  %v4199 = vunpack.c.l.b16 %v4042
  %v4200 = vunpack.c.h.b16 %v4042
  %v4201 = vunpack.c.l.b16 %v4043
  %v4202 = vunpack.c.h.b16 %v4043
  %v4203 = vunpack.c.l.b16 %v4044
  %v4204 = vunpack.c.h.b16 %v4044
  %v4205 = vunpack.c.l.b16 %v4045
  %v4206 = vunpack.c.h.b16 %v4045
  %v4207 = vunpack.c.l.b16 %v4046
  %v4208 = vunpack.c.h.b16 %v4046
  %v4209 = vunpack.c.l.b16 %v4047
  %v4210 = vunpack.c.h.b16 %v4047
  %v4211 = vunpack.c.l.b16 %v4048
  %v4212 = vunpack.c.h.b16 %v4048
  %v4213 = vunpack.c.l.b16 %v4049
  %v4214 = vunpack.c.h.b16 %v4049
  %v4215 = vunpack.c.l.b16 %v4050
  %v4216 = vunpack.c.h.b16 %v4050
  %v4217 = vunpack.c.l.b16 %v4051
  %v4218 = vunpack.c.h.b16 %v4051
  %v4219 = vunpack.c.l.b16 %v4052
  %v4220 = vunpack.c.h.b16 %v4052
  %v4221 = vunpack.c.l.b16 %v4053
  %v4222 = vunpack.c.h.b16 %v4053
  %v4223 = vunpack.c.l.b16 %v4054
  %v4224 = vunpack.c.h.b16 %v4054
  %v4225 = vunpack.c.l.b16 %v4055
  %v4226 = vunpack.c.h.b16 %v4055
  %v4227 = vunpack.c.l.b16 %v4056
  %v4228 = vunpack.c.h.b16 %v4056
  %v4229 = vunpack.c.l.b16 %v4057
  %v4230 = vunpack.c.h.b16 %v4057
  %v4231 = vunpack.c.l.b16 %v4058
  %v4232 = vunpack.c.h.b16 %v4058
  %v4233 = vunpack.c.l.b16 %v4059
  %v4234 = vunpack.c.h.b16 %v4059
  %v4235 = vunpack.c.l.b16 %v4060
  %v4236 = vunpack.c.h.b16 %v4060
  %v4237 = vunpack.c.l.b16 %v4061
  %v4238 = vunpack.c.h.b16 %v4061
  %v4239 = vunpack.c.l.b16 %v4062
  %v4240 = vunpack.c.h.b16 %v4062
  %v4241 = vunpack.c.l.b16 %v4063
  %v4242 = vunpack.c.h.b16 %v4063
  %v4243 = vunpack.c.l.b16 %v4064
  %v4244 = vunpack.c.h.b16 %v4064
  %v4245 = vunpack.c.l.b16 %v4065
  %v4246 = vunpack.c.h.b16 %v4065
  %v4247 = vunpack.c.l.b16 %v4066
  %v4248 = vunpack.c.h.b16 %v4066
  %v4249 = vunpack.c.l.b16 %v4067
  %v4250 = vunpack.c.h.b16 %v4067
  %v4251 = vunpack.c.l.b16 %v4068
  %v4252 = vunpack.c.h.b16 %v4068
  %v4253 = vunpack.c.l.b16 %v4069
  %v4254 = vunpack.c.h.b16 %v4069
  %v4255 = vunpack.c.l.b16 %v4070
  %v4256 = vunpack.c.h.b16 %v4070
  %v4257 = vunpack.c.l.b16 %v4071
  %v4258 = vunpack.c.h.b16 %v4071
  %v4259 = vunpack.c.l.b16 %v4072
  %v4260 = vunpack.c.h.b16 %v4072
  %v4261 = vunpack.c.l.b16 %v4073
  %v4262 = vunpack.c.h.b16 %v4073
  %v4263 = vunpack.c.l.b16 %v4074
  %v4264 = vunpack.c.h.b16 %v4074
  %v4265 = vunpack.c.l.b16 %v4075
  %v4266 = vunpack.c.h.b16 %v4075
  %v4267 = vunpack.c.l.b16 %v4076
  %v4268 = vunpack.c.h.b16 %v4076
  %v4269 = vunpack.c.l.b16 %v4077
  %v4270 = vunpack.c.h.b16 %v4077
  %v4271 = vunpack.c.l.b16 %v4078
  %v4272 = vunpack.c.h.b16 %v4078
  %v4273 = vunpack.c.l.b16 %v4079
  %v4274 = vunpack.c.h.b16 %v4079
  %v4275 = vunpack.c.l.b16 %v4080
  %v4276 = vunpack.c.h.b16 %v4080
  %v4277 = vunpack.c.l.b16 %v4081
  %v4278 = vunpack.c.h.b16 %v4081
  %v4279 = vunpack.c.l.b16 %v4082
  %v4280 = vunpack.c.h.b16 %v4082
  %v4281 = vunpack.c.l.b16 %v4083
  %v4282 = vunpack.c.h.b16 %v4083
  %v4283 = vunpack.c.l.b16 %v4084
  %v4284 = vunpack.c.h.b16 %v4084
  %v4285 = vunpack.c.l.b16 %v4085
  %v4286 = vunpack.c.h.b16 %v4085
  %v4287 = vunpack.c.l.b16 %v4086
  %v4288 = vunpack.c.h.b16 %v4086
  %v4289 = vpack.c.b16 %v4165, %v4161
  %v4290 = vpack.c.b16 %v4166, %v4162
  %v4291 = vpack.c.b16 %v4167, %v4163
  %v4292 = vpack.c.b16 %v4168, %v4164
  %v4293 = vpack.c.b16 %v4173, %v4169
  %v4294 = vpack.c.b16 %v4174, %v4170
  %v4295 = vpack.c.b16 %v4175, %v4171
  %v4296 = vpack.c.b16 %v4176, %v4172
  %v4297 = vpack.c.b16 %v4181, %v4177
  %v4298 = vpack.c.b16 %v4182, %v4178
  %v4299 = vpack.c.b16 %v4183, %v4179
  %v4300 = vpack.c.b16 %v4184, %v4180
  %v4301 = vpack.c.b16 %v4189, %v4185
  %v4302 = vpack.c.b16 %v4190, %v4186
  %v4303 = vpack.c.b16 %v4191, %v4187
  %v4304 = vpack.c.b16 %v4192, %v4188
  %v4305 = vpack.c.b16 %v4197, %v4193
  %v4306 = vpack.c.b16 %v4198, %v4194
  %v4307 = vpack.c.b16 %v4199, %v4195
  %v4308 = vpack.c.b16 %v4200, %v4196
  %v4309 = vpack.c.b16 %v4205, %v4201
  %v4310 = vpack.c.b16 %v4206, %v4202
  %v4311 = vpack.c.b16 %v4207, %v4203
  %v4312 = vpack.c.b16 %v4208, %v4204
  %v4313 = vpack.c.b16 %v4213, %v4209
  %v4314 = vpack.c.b16 %v4214, %v4210
  %v4315 = vpack.c.b16 %v4215, %v4211
  %v4316 = vpack.c.b16 %v4216, %v4212
  %v4317 = vpack.c.b16 %v4221, %v4217
  %v4318 = vpack.c.b16 %v4222, %v4218
  %v4319 = vpack.c.b16 %v4223, %v4219
  %v4320 = vpack.c.b16 %v4224, %v4220
  %v4321 = vpack.c.b16 %v4229, %v4225
  %v4322 = vpack.c.b16 %v4230, %v4226
  %v4323 = vpack.c.b16 %v4231, %v4227
  %v4324 = vpack.c.b16 %v4232, %v4228
  %v4325 = vpack.c.b16 %v4237, %v4233
  %v4326 = vpack.c.b16 %v4238, %v4234
  %v4327 = vpack.c.b16 %v4239, %v4235
  %v4328 = vpack.c.b16 %v4240, %v4236
  %v4329 = vpack.c.b16 %v4245, %v4241
  %v4330 = vpack.c.b16 %v4246, %v4242
  %v4331 = vpack.c.b16 %v4247, %v4243
  %v4332 = vpack.c.b16 %v4248, %v4244
  %v4333 = vpack.c.b16 %v4253, %v4249
  %v4334 = vpack.c.b16 %v4254, %v4250
  %v4335 = vpack.c.b16 %v4255, %v4251
  %v4336 = vpack.c.b16 %v4256, %v4252
  %v4337 = vpack.c.b16 %v4261, %v4257
  %v4338 = vpack.c.b16 %v4262, %v4258
  %v4339 = vpack.c.b16 %v4263, %v4259
  %v4340 = vpack.c.b16 %v4264, %v4260
  %v4341 = vpack.c.b16 %v4269, %v4265
  %v4342 = vpack.c.b16 %v4270, %v4266
  %v4343 = vpack.c.b16 %v4271, %v4267
  %v4344 = vpack.c.b16 %v4272, %v4268
  %v4345 = vpack.c.b16 %v4277, %v4273
  %v4346 = vpack.c.b16 %v4278, %v4274
  %v4347 = vpack.c.b16 %v4279, %v4275
  %v4348 = vpack.c.b16 %v4280, %v4276
  %v4349 = vpack.c.b16 %v4285, %v4281
  %v4350 = vpack.c.b16 %v4286, %v4282
  %v4351 = vpack.c.b16 %v4287, %v4283
  %v4352 = vpack.c.b16 %v4288, %v4284
  %4417 = vmatpush.bf16.msra.mxu0 %v4317
  %4418 = vmatpush.bf16.msra.mxu0 %v4313
  %4419 = vmatpush.bf16.msra.mxu0 %v4309
  %4420 = vmatpush.bf16.msra.mxu0 %v4305
  %4421 = vmatpush.bf16.msra.mxu0 %v4301
  %4422 = vmatpush.bf16.msra.mxu0 %v4297
  %4423 = vmatpush.bf16.msra.mxu0 %v4293
  %4424 = vmatpush.bf16.msra.mxu0 %v4289
  %4425 = vmatmul.bf16.gmra.mxu0 %v4093
  %v4426 = vpop.f32.mrf.mxu0
  %v4427 = vadd.f32 %v113, %v4426
  %v4428 = vpop.f32.mrf.mxu0
  %v4429 = vadd.f32 %v113, %v4428
  %4430 = vdwg.mxu0
  %4431 = vmatpush.bf16.msra.mxu0 %v4349
  %4432 = vmatpush.bf16.msra.mxu0 %v4345
  %4433 = vmatpush.bf16.msra.mxu0 %v4341
  %4434 = vmatpush.bf16.msra.mxu0 %v4337
  %4435 = vmatpush.bf16.msra.mxu0 %v4333
  %4436 = vmatpush.bf16.msra.mxu0 %v4329
  %4437 = vmatpush.bf16.msra.mxu0 %v4325
  %4438 = vmatpush.bf16.msra.mxu0 %v4321
  %4439 = vmatmul.bf16.gmra.mxu0 %v4094
  %v4440 = vpop.f32.mrf.mxu0
  %v4441 = vadd.f32 %v4427, %v4440
  %v4442 = vpop.f32.mrf.mxu0
  %v4443 = vadd.f32 %v4429, %v4442
  %4444 = vdwg.mxu0
  %4445 = vmatpush.bf16.msra.mxu0 %v4318
  %4446 = vmatpush.bf16.msra.mxu0 %v4314
  %4447 = vmatpush.bf16.msra.mxu0 %v4310
  %4448 = vmatpush.bf16.msra.mxu0 %v4306
  %4449 = vmatpush.bf16.msra.mxu0 %v4302
  %4450 = vmatpush.bf16.msra.mxu0 %v4298
  %4451 = vmatpush.bf16.msra.mxu0 %v4294
  %4452 = vmatpush.bf16.msra.mxu0 %v4290
  %4453 = vmatmul.bf16.gmra.mxu0 %v4093
  %v4454 = vpop.f32.mrf.mxu0
  %v4455 = vadd.f32 %v114, %v4454
  %v4456 = vpop.f32.mrf.mxu0
  %v4457 = vadd.f32 %v114, %v4456
  %4458 = vdwg.mxu0
  %4459 = vmatpush.bf16.msra.mxu0 %v4350
  %4460 = vmatpush.bf16.msra.mxu0 %v4346
  %4461 = vmatpush.bf16.msra.mxu0 %v4342
  %4462 = vmatpush.bf16.msra.mxu0 %v4338
  %4463 = vmatpush.bf16.msra.mxu0 %v4334
  %4464 = vmatpush.bf16.msra.mxu0 %v4330
  %4465 = vmatpush.bf16.msra.mxu0 %v4326
  %4466 = vmatpush.bf16.msra.mxu0 %v4322
  %4467 = vmatmul.bf16.gmra.mxu0 %v4094
  %v4468 = vpop.f32.mrf.mxu0
  %v4469 = vadd.f32 %v4455, %v4468
  %v4470 = vpop.f32.mrf.mxu0
  %v4471 = vadd.f32 %v4457, %v4470
  %4472 = vdwg.mxu0
  %4473 = vmatpush.bf16.msra.mxu0 %v4319
  %4474 = vmatpush.bf16.msra.mxu0 %v4315
  %4475 = vmatpush.bf16.msra.mxu0 %v4311
  %4476 = vmatpush.bf16.msra.mxu0 %v4307
  %4477 = vmatpush.bf16.msra.mxu0 %v4303
  %4478 = vmatpush.bf16.msra.mxu0 %v4299
  %4479 = vmatpush.bf16.msra.mxu0 %v4295
  %4480 = vmatpush.bf16.msra.mxu0 %v4291
  %4481 = vmatmul.bf16.gmra.mxu0 %v4093
  %v4482 = vpop.f32.mrf.mxu0
  %v4483 = vadd.f32 %v115, %v4482
  %v4484 = vpop.f32.mrf.mxu0
  %v4485 = vadd.f32 %v115, %v4484
  %4486 = vdwg.mxu0
  %4487 = vmatpush.bf16.msra.mxu0 %v4351
  %4488 = vmatpush.bf16.msra.mxu0 %v4347
  %4489 = vmatpush.bf16.msra.mxu0 %v4343
  %4490 = vmatpush.bf16.msra.mxu0 %v4339
  %4491 = vmatpush.bf16.msra.mxu0 %v4335
  %4492 = vmatpush.bf16.msra.mxu0 %v4331
  %4493 = vmatpush.bf16.msra.mxu0 %v4327
  %4494 = vmatpush.bf16.msra.mxu0 %v4323
  %4495 = vmatmul.bf16.gmra.mxu0 %v4094
  %v4496 = vpop.f32.mrf.mxu0
  %v4497 = vadd.f32 %v4483, %v4496
  %v4498 = vpop.f32.mrf.mxu0
  %v4499 = vadd.f32 %v4485, %v4498
  %4500 = vdwg.mxu0
  %4501 = vmatpush.bf16.msra.mxu0 %v4320
  %4502 = vmatpush.bf16.msra.mxu0 %v4316
  %4503 = vmatpush.bf16.msra.mxu0 %v4312
  %4504 = vmatpush.bf16.msra.mxu0 %v4308
  %4505 = vmatpush.bf16.msra.mxu0 %v4304
  %4506 = vmatpush.bf16.msra.mxu0 %v4300
  %4507 = vmatpush.bf16.msra.mxu0 %v4296
  %4508 = vmatpush.bf16.msra.mxu0 %v4292
  %4509 = vmatmul.bf16.gmra.mxu0 %v4093
  %v4510 = vpop.f32.mrf.mxu0
  %v4511 = vadd.f32 %v116, %v4510
  %v4512 = vpop.f32.mrf.mxu0
  %v4513 = vadd.f32 %v116, %v4512
  %4514 = vdwg.mxu0
  %4515 = vmatpush.bf16.msra.mxu0 %v4352
  %4516 = vmatpush.bf16.msra.mxu0 %v4348
  %4517 = vmatpush.bf16.msra.mxu0 %v4344
  %4518 = vmatpush.bf16.msra.mxu0 %v4340
  %4519 = vmatpush.bf16.msra.mxu0 %v4336
  %4520 = vmatpush.bf16.msra.mxu0 %v4332
  %4521 = vmatpush.bf16.msra.mxu0 %v4328
  %4522 = vmatpush.bf16.msra.mxu0 %v4324
  %4523 = vmatmul.bf16.gmra.mxu0 %v4094
  %v4524 = vpop.f32.mrf.mxu0
  %v4525 = vadd.f32 %v4511, %v4524
  %v4526 = vpop.f32.mrf.mxu0
  %v4527 = vadd.f32 %v4513, %v4526
  %4528 = vdwg.mxu0
  %v4529 = vxor.u32 %v4441, 2147483648
  %v4530 = vxor.u32 %v4443, 2147483648
  %v4531 = vmul.f32 %v4529, 1.442695
  %v4532 = vpow.pop %v4531
  %v4533 = vmul.f32 %v4530, 1.442695
  %v4534 = vpow.pop %v4533
  %v4535 = vadd.f32 %v4532, 1.0
  %v4536 = vadd.f32 %v4534, 1.0
  %v4537 = vrcp.pop %v4535
  %v4538 = vmul.f32 %v4535, %v4537
  %v4539 = vsub.f32 1.0, %v4538
  %v4540 = vmul.f32 %v4537, %v4539
  %v4541 = vadd.f32 %v4537, %v4540
  %vm4542 = vweird.f32 %v4535
  %vm4543 = vweird.f32 %v4537
  %vm4544 = vmor %vm4542, %vm4543
  %v4545 = vsel %vm4544, %v4537, %v4541
  %v4546 = vand.u32 2147483647, %v4535
  %vm4547 = vcmp.eq.f32.partialorder %v4546, 8.507059e+37
  %v4548 = vand.u32 %v4535, 2147483648
  %v4549 = vor.u32 1.1754944e-38, %v4548
  %v4550 = vsel %vm4547, %v4549, %v4545
  %v4551 = vmul.f32 1.0, %v4550
  %v4552 = vrcp.pop %v4536
  %v4553 = vmul.f32 %v4536, %v4552
  %v4554 = vsub.f32 1.0, %v4553
  %v4555 = vmul.f32 %v4552, %v4554
  %v4556 = vadd.f32 %v4552, %v4555
  %vm4557 = vweird.f32 %v4536
  %vm4558 = vweird.f32 %v4552
  %vm4559 = vmor %vm4557, %vm4558
  %v4560 = vsel %vm4559, %v4552, %v4556
  %v4561 = vand.u32 2147483647, %v4536
  %vm4562 = vcmp.eq.f32.partialorder %v4561, 8.507059e+37
  %v4563 = vand.u32 %v4536, 2147483648
  %v4564 = vor.u32 1.1754944e-38, %v4563
  %v4565 = vsel %vm4562, %v4564, %v4560
  %v4566 = vmul.f32 1.0, %v4565
  %v4567 = vxor.u32 %v4469, 2147483648
  %v4568 = vxor.u32 %v4471, 2147483648
  %v4569 = vmul.f32 %v4567, 1.442695
  %v4570 = vpow.pop %v4569
  %v4571 = vmul.f32 %v4568, 1.442695
  %v4572 = vpow.pop %v4571
  %v4573 = vadd.f32 %v4570, 1.0
  %v4574 = vadd.f32 %v4572, 1.0
  %v4575 = vrcp.pop %v4573
  %v4576 = vmul.f32 %v4573, %v4575
  %v4577 = vsub.f32 1.0, %v4576
  %v4578 = vmul.f32 %v4575, %v4577
  %v4579 = vadd.f32 %v4575, %v4578
  %vm4580 = vweird.f32 %v4573
  %vm4581 = vweird.f32 %v4575
  %vm4582 = vmor %vm4580, %vm4581
  %v4583 = vsel %vm4582, %v4575, %v4579
  %v4584 = vand.u32 2147483647, %v4573
  %vm4585 = vcmp.eq.f32.partialorder %v4584, 8.507059e+37
  %v4586 = vand.u32 %v4573, 2147483648
  %v4587 = vor.u32 1.1754944e-38, %v4586
  %v4588 = vsel %vm4585, %v4587, %v4583
  %v4589 = vmul.f32 1.0, %v4588
  %v4590 = vrcp.pop %v4574
  %v4591 = vmul.f32 %v4574, %v4590
  %v4592 = vsub.f32 1.0, %v4591
  %v4593 = vmul.f32 %v4590, %v4592
  %v4594 = vadd.f32 %v4590, %v4593
  %vm4595 = vweird.f32 %v4574
  %vm4596 = vweird.f32 %v4590
  %vm4597 = vmor %vm4595, %vm4596
  %v4598 = vsel %vm4597, %v4590, %v4594
  %v4599 = vand.u32 2147483647, %v4574
  %vm4600 = vcmp.eq.f32.partialorder %v4599, 8.507059e+37
  %v4601 = vand.u32 %v4574, 2147483648
  %v4602 = vor.u32 1.1754944e-38, %v4601
  %v4603 = vsel %vm4600, %v4602, %v4598
  %v4604 = vmul.f32 1.0, %v4603
  %v4605 = vtanh.pop %v4497
  %v4606 = vtanh.pop %v4499
  %v4607 = vxor.u32 %v4525, 2147483648
  %v4608 = vxor.u32 %v4527, 2147483648
  %v4609 = vmul.f32 %v4607, 1.442695
  %v4610 = vpow.pop %v4609
  %v4611 = vmul.f32 %v4608, 1.442695
  %v4612 = vpow.pop %v4611
  %v4613 = vadd.f32 %v4610, 1.0
  %v4614 = vadd.f32 %v4612, 1.0
  %v4615 = vrcp.pop %v4613
  %v4616 = vmul.f32 %v4613, %v4615
  %v4617 = vsub.f32 1.0, %v4616
  %v4618 = vmul.f32 %v4615, %v4617
  %v4619 = vadd.f32 %v4615, %v4618
  %vm4620 = vweird.f32 %v4613
  %vm4621 = vweird.f32 %v4615
  %vm4622 = vmor %vm4620, %vm4621
  %v4623 = vsel %vm4622, %v4615, %v4619
  %v4624 = vand.u32 2147483647, %v4613
  %vm4625 = vcmp.eq.f32.partialorder %v4624, 8.507059e+37
  %v4626 = vand.u32 %v4613, 2147483648
  %v4627 = vor.u32 1.1754944e-38, %v4626
  %v4628 = vsel %vm4625, %v4627, %v4623
  %v4629 = vmul.f32 1.0, %v4628
  %v4630 = vrcp.pop %v4614
  %v4631 = vmul.f32 %v4614, %v4630
  %v4632 = vsub.f32 1.0, %v4631
  %v4633 = vmul.f32 %v4630, %v4632
  %v4634 = vadd.f32 %v4630, %v4633
  %vm4635 = vweird.f32 %v4614
  %vm4636 = vweird.f32 %v4630
  %vm4637 = vmor %vm4635, %vm4636
  %v4638 = vsel %vm4637, %v4630, %v4634
  %v4639 = vand.u32 2147483647, %v4614
  %vm4640 = vcmp.eq.f32.partialorder %v4639, 8.507059e+37
  %v4641 = vand.u32 %v4614, 2147483648
  %v4642 = vor.u32 1.1754944e-38, %v4641
  %v4643 = vsel %vm4640, %v4642, %v4638
  %v4644 = vmul.f32 1.0, %v4643
  %v4645 = vld [vmem:[#allocation3] sm:$0xff]
  %v4646 = vld [vmem:[#allocation3 + $0x8] sm:$0xff]
  %v4647 = vmul.f32 %v4589, %v4645
  %v4648 = vmul.f32 %v4604, %v4646
  %v4649 = vmul.f32 %v4551, %v4605
  %v4650 = vmul.f32 %v4566, %v4606
  %v4651 = vadd.f32 %v4647, %v4649
  %v4652 = vadd.f32 %v4648, %v4650
  %v4653 = vtanh.pop %v4651
  %v4654 = vtanh.pop %v4652
  %v4655 = vmul.f32 %v4629, %v4653
  %v4656 = vmul.f32 %v4644, %v4654
  %4657 = vst [vmem:[#allocation3] sm:$0xff] %v4651
  %4658 = vst [vmem:[#allocation3 + $0x8] sm:$0xff] %v4652
  %v4659 = vpack.c.bf16 %v4655, %v4655
  %v4660 = vpack.c.bf16 %v4656, %v4656
  %4661 = vst [vmem:[#allocation2 + $0x4] sm:$0xf] %v4659
  %4662 = vst [vmem:[#allocation2 + $0xc] sm:$0xf] %v4660
  %s4663 = scalar_lea.vmem %s0, 112
  %v4664 = vld [vmem:[%s4663] sm:$0xff]
  %v4665 = vld [vmem:[%s4663 + $0x8] sm:$0xff]
  %4666 = vset.pattern.permute.xlu0 0
  %4667 = vperm.xlu0 %4666, %v4664
  %v4668 = vpop.permute.xlu0 %4667
  %4669 = vset.pattern.permute.xlu0 0
  %4670 = vperm.xlu0 %4669, %v4665
  %v4671 = vpop.permute.xlu0 %4670
  %vm4672 = vcmp.eq.s32.totalorder %v26, %v4668
  %vm4673 = vcmp.eq.s32.totalorder %v26, %v4671
  %v4674 = vsel %vm4672, 1, 0
  %v4675 = vsel %vm4673, 1, 0
  %v4676 = vcvt.s32.f32 %v4674
  %v4677 = vcvt.s32.f32 %v4675
  %v4678 = vpack.c.bf16 %v4676, %v4676
  %v4679 = vpack.c.bf16 %v4677, %v4677
  %4680 = vst [vmem:[#allocation2] sm:$0xf] %v4678
  %4681 = vst [vmem:[#allocation2 + $0x8] sm:$0xf] %v4679
  %v4682 = vld [vmem:[#allocation2] sm:$0xff]
  %v4683 = vld [vmem:[#allocation2 + $0x8] sm:$0xff]
  %v4684 = vld [vmem:[%s1] sm:$0xff]
  %v4685 = vld [vmem:[%s1 + $0x8] sm:$0xff]
  %v4686 = vld [vmem:[%s1 + $0x10] sm:$0xff]
  %v4687 = vld [vmem:[%s1 + $0x18] sm:$0xff]
  %v4688 = vld [vmem:[%s1 + $0x20] sm:$0xff]
  %v4689 = vld [vmem:[%s1 + $0x28] sm:$0xff]
  %v4690 = vld [vmem:[%s1 + $0x30] sm:$0xff]
  %v4691 = vld [vmem:[%s1 + $0x38] sm:$0xff]
  %v4692 = vld [vmem:[%s1 + $0x40] sm:$0xff]
  %v4693 = vld [vmem:[%s1 + $0x48] sm:$0xff]
  %v4694 = vld [vmem:[%s1 + $0x50] sm:$0xff]
  %v4695 = vld [vmem:[%s1 + $0x58] sm:$0xff]
  %v4696 = vld [vmem:[%s1 + $0x60] sm:$0xff]
  %v4697 = vld [vmem:[%s1 + $0x68] sm:$0xff]
  %v4698 = vld [vmem:[%s1 + $0x70] sm:$0xff]
  %v4699 = vld [vmem:[%s1 + $0x78] sm:$0xff]
  %v4700 = vld [vmem:[%s1 + $0x80] sm:$0xff]
  %v4701 = vld [vmem:[%s1 + $0x88] sm:$0xff]
  %v4702 = vld [vmem:[%s1 + $0x90] sm:$0xff]
  %v4703 = vld [vmem:[%s1 + $0x98] sm:$0xff]
  %v4704 = vld [vmem:[%s1 + $0xa0] sm:$0xff]
  %v4705 = vld [vmem:[%s1 + $0xa8] sm:$0xff]
  %v4706 = vld [vmem:[%s1 + $0xb0] sm:$0xff]
  %v4707 = vld [vmem:[%s1 + $0xb8] sm:$0xff]
  %v4708 = vld [vmem:[%s1 + $0xc0] sm:$0xff]
  %v4709 = vld [vmem:[%s1 + $0xc8] sm:$0xff]
  %v4710 = vld [vmem:[%s1 + $0xd0] sm:$0xff]
  %v4711 = vld [vmem:[%s1 + $0xd8] sm:$0xff]
  %v4712 = vld [vmem:[%s1 + $0xe0] sm:$0xff]
  %v4713 = vld [vmem:[%s1 + $0xe8] sm:$0xff]
  %v4714 = vld [vmem:[%s1 + $0xf0] sm:$0xff]
  %v4715 = vld [vmem:[%s1 + $0xf8] sm:$0xff]
  %v4716 = vld [vmem:[%s1 + $0x100] sm:$0xff]
  %v4717 = vld [vmem:[%s1 + $0x108] sm:$0xff]
  %v4718 = vld [vmem:[%s1 + $0x110] sm:$0xff]
  %v4719 = vld [vmem:[%s1 + $0x118] sm:$0xff]
  %v4720 = vld [vmem:[%s1 + $0x120] sm:$0xff]
  %v4721 = vld [vmem:[%s1 + $0x128] sm:$0xff]
  %v4722 = vld [vmem:[%s1 + $0x130] sm:$0xff]
  %v4723 = vld [vmem:[%s1 + $0x138] sm:$0xff]
  %v4724 = vld [vmem:[%s1 + $0x140] sm:$0xff]
  %v4725 = vld [vmem:[%s1 + $0x148] sm:$0xff]
  %v4726 = vld [vmem:[%s1 + $0x150] sm:$0xff]
  %v4727 = vld [vmem:[%s1 + $0x158] sm:$0xff]
  %v4728 = vld [vmem:[%s1 + $0x160] sm:$0xff]
  %v4729 = vld [vmem:[%s1 + $0x168] sm:$0xff]
  %v4730 = vld [vmem:[%s1 + $0x170] sm:$0xff]
  %v4731 = vld [vmem:[%s1 + $0x178] sm:$0xff]
  %v4732 = vld [vmem:[%s1 + $0x180] sm:$0xff]
  %v4733 = vld [vmem:[%s1 + $0x188] sm:$0xff]
  %v4734 = vld [vmem:[%s1 + $0x190] sm:$0xff]
  %v4735 = vld [vmem:[%s1 + $0x198] sm:$0xff]
  %v4736 = vld [vmem:[%s1 + $0x1a0] sm:$0xff]
  %v4737 = vld [vmem:[%s1 + $0x1a8] sm:$0xff]
  %v4738 = vld [vmem:[%s1 + $0x1b0] sm:$0xff]
  %v4739 = vld [vmem:[%s1 + $0x1b8] sm:$0xff]
  %v4740 = vld [vmem:[%s1 + $0x1c0] sm:$0xff]
  %v4741 = vld [vmem:[%s1 + $0x1c8] sm:$0xff]
  %v4742 = vld [vmem:[%s1 + $0x1d0] sm:$0xff]
  %v4743 = vld [vmem:[%s1 + $0x1d8] sm:$0xff]
  %v4744 = vld [vmem:[%s1 + $0x1e0] sm:$0xff]
  %v4745 = vld [vmem:[%s1 + $0x1e8] sm:$0xff]
  %v4746 = vld [vmem:[%s1 + $0x1f0] sm:$0xff]
  %v4747 = vld [vmem:[%s1 + $0x1f8] sm:$0xff]
  %v4750 = vunpack.c.l.b16 %v4682
  %v4751 = vunpack.c.h.b16 %v4682
  %v4752 = vunpack.c.l.b16 %v4683
  %v4753 = vunpack.c.h.b16 %v4683
  %v4754 = vpack.c.b16 %v4752, %v4750
  %v4755 = vpack.c.b16 %v4753, %v4751
  %v4822 = vunpack.c.l.b16 %v4684
  %v4823 = vunpack.c.h.b16 %v4684
  %v4824 = vunpack.c.l.b16 %v4685
  %v4825 = vunpack.c.h.b16 %v4685
  %v4826 = vunpack.c.l.b16 %v4686
  %v4827 = vunpack.c.h.b16 %v4686
  %v4828 = vunpack.c.l.b16 %v4687
  %v4829 = vunpack.c.h.b16 %v4687
  %v4830 = vunpack.c.l.b16 %v4688
  %v4831 = vunpack.c.h.b16 %v4688
  %v4832 = vunpack.c.l.b16 %v4689
  %v4833 = vunpack.c.h.b16 %v4689
  %v4834 = vunpack.c.l.b16 %v4690
  %v4835 = vunpack.c.h.b16 %v4690
  %v4836 = vunpack.c.l.b16 %v4691
  %v4837 = vunpack.c.h.b16 %v4691
  %v4838 = vunpack.c.l.b16 %v4692
  %v4839 = vunpack.c.h.b16 %v4692
  %v4840 = vunpack.c.l.b16 %v4693
  %v4841 = vunpack.c.h.b16 %v4693
  %v4842 = vunpack.c.l.b16 %v4694
  %v4843 = vunpack.c.h.b16 %v4694
  %v4844 = vunpack.c.l.b16 %v4695
  %v4845 = vunpack.c.h.b16 %v4695
  %v4846 = vunpack.c.l.b16 %v4696
  %v4847 = vunpack.c.h.b16 %v4696
  %v4848 = vunpack.c.l.b16 %v4697
  %v4849 = vunpack.c.h.b16 %v4697
  %v4850 = vunpack.c.l.b16 %v4698
  %v4851 = vunpack.c.h.b16 %v4698
  %v4852 = vunpack.c.l.b16 %v4699
  %v4853 = vunpack.c.h.b16 %v4699
  %v4854 = vunpack.c.l.b16 %v4700
  %v4855 = vunpack.c.h.b16 %v4700
  %v4856 = vunpack.c.l.b16 %v4701
  %v4857 = vunpack.c.h.b16 %v4701
  %v4858 = vunpack.c.l.b16 %v4702
  %v4859 = vunpack.c.h.b16 %v4702
  %v4860 = vunpack.c.l.b16 %v4703
  %v4861 = vunpack.c.h.b16 %v4703
  %v4862 = vunpack.c.l.b16 %v4704
  %v4863 = vunpack.c.h.b16 %v4704
  %v4864 = vunpack.c.l.b16 %v4705
  %v4865 = vunpack.c.h.b16 %v4705
  %v4866 = vunpack.c.l.b16 %v4706
  %v4867 = vunpack.c.h.b16 %v4706
  %v4868 = vunpack.c.l.b16 %v4707
  %v4869 = vunpack.c.h.b16 %v4707
  %v4870 = vunpack.c.l.b16 %v4708
  %v4871 = vunpack.c.h.b16 %v4708
  %v4872 = vunpack.c.l.b16 %v4709
  %v4873 = vunpack.c.h.b16 %v4709
  %v4874 = vunpack.c.l.b16 %v4710
  %v4875 = vunpack.c.h.b16 %v4710
  %v4876 = vunpack.c.l.b16 %v4711
  %v4877 = vunpack.c.h.b16 %v4711
  %v4878 = vunpack.c.l.b16 %v4712
  %v4879 = vunpack.c.h.b16 %v4712
  %v4880 = vunpack.c.l.b16 %v4713
  %v4881 = vunpack.c.h.b16 %v4713
  %v4882 = vunpack.c.l.b16 %v4714
  %v4883 = vunpack.c.h.b16 %v4714
  %v4884 = vunpack.c.l.b16 %v4715
  %v4885 = vunpack.c.h.b16 %v4715
  %v4886 = vunpack.c.l.b16 %v4716
  %v4887 = vunpack.c.h.b16 %v4716
  %v4888 = vunpack.c.l.b16 %v4717
  %v4889 = vunpack.c.h.b16 %v4717
  %v4890 = vunpack.c.l.b16 %v4718
  %v4891 = vunpack.c.h.b16 %v4718
  %v4892 = vunpack.c.l.b16 %v4719
  %v4893 = vunpack.c.h.b16 %v4719
  %v4894 = vunpack.c.l.b16 %v4720
  %v4895 = vunpack.c.h.b16 %v4720
  %v4896 = vunpack.c.l.b16 %v4721
  %v4897 = vunpack.c.h.b16 %v4721
  %v4898 = vunpack.c.l.b16 %v4722
  %v4899 = vunpack.c.h.b16 %v4722
  %v4900 = vunpack.c.l.b16 %v4723
  %v4901 = vunpack.c.h.b16 %v4723
  %v4902 = vunpack.c.l.b16 %v4724
  %v4903 = vunpack.c.h.b16 %v4724
  %v4904 = vunpack.c.l.b16 %v4725
  %v4905 = vunpack.c.h.b16 %v4725
  %v4906 = vunpack.c.l.b16 %v4726
  %v4907 = vunpack.c.h.b16 %v4726
  %v4908 = vunpack.c.l.b16 %v4727
  %v4909 = vunpack.c.h.b16 %v4727
  %v4910 = vunpack.c.l.b16 %v4728
  %v4911 = vunpack.c.h.b16 %v4728
  %v4912 = vunpack.c.l.b16 %v4729
  %v4913 = vunpack.c.h.b16 %v4729
  %v4914 = vunpack.c.l.b16 %v4730
  %v4915 = vunpack.c.h.b16 %v4730
  %v4916 = vunpack.c.l.b16 %v4731
  %v4917 = vunpack.c.h.b16 %v4731
  %v4918 = vunpack.c.l.b16 %v4732
  %v4919 = vunpack.c.h.b16 %v4732
  %v4920 = vunpack.c.l.b16 %v4733
  %v4921 = vunpack.c.h.b16 %v4733
  %v4922 = vunpack.c.l.b16 %v4734
  %v4923 = vunpack.c.h.b16 %v4734
  %v4924 = vunpack.c.l.b16 %v4735
  %v4925 = vunpack.c.h.b16 %v4735
  %v4926 = vunpack.c.l.b16 %v4736
  %v4927 = vunpack.c.h.b16 %v4736
  %v4928 = vunpack.c.l.b16 %v4737
  %v4929 = vunpack.c.h.b16 %v4737
  %v4930 = vunpack.c.l.b16 %v4738
  %v4931 = vunpack.c.h.b16 %v4738
  %v4932 = vunpack.c.l.b16 %v4739
  %v4933 = vunpack.c.h.b16 %v4739
  %v4934 = vunpack.c.l.b16 %v4740
  %v4935 = vunpack.c.h.b16 %v4740
  %v4936 = vunpack.c.l.b16 %v4741
  %v4937 = vunpack.c.h.b16 %v4741
  %v4938 = vunpack.c.l.b16 %v4742
  %v4939 = vunpack.c.h.b16 %v4742
  %v4940 = vunpack.c.l.b16 %v4743
  %v4941 = vunpack.c.h.b16 %v4743
  %v4942 = vunpack.c.l.b16 %v4744
  %v4943 = vunpack.c.h.b16 %v4744
  %v4944 = vunpack.c.l.b16 %v4745
  %v4945 = vunpack.c.h.b16 %v4745
  %v4946 = vunpack.c.l.b16 %v4746
  %v4947 = vunpack.c.h.b16 %v4746
  %v4948 = vunpack.c.l.b16 %v4747
  %v4949 = vunpack.c.h.b16 %v4747
  %v4950 = vpack.c.b16 %v4826, %v4822
  %v4951 = vpack.c.b16 %v4827, %v4823
  %v4952 = vpack.c.b16 %v4828, %v4824
  %v4953 = vpack.c.b16 %v4829, %v4825
  %v4954 = vpack.c.b16 %v4834, %v4830
  %v4955 = vpack.c.b16 %v4835, %v4831
  %v4956 = vpack.c.b16 %v4836, %v4832
  %v4957 = vpack.c.b16 %v4837, %v4833
  %v4958 = vpack.c.b16 %v4842, %v4838
  %v4959 = vpack.c.b16 %v4843, %v4839
  %v4960 = vpack.c.b16 %v4844, %v4840
  %v4961 = vpack.c.b16 %v4845, %v4841
  %v4962 = vpack.c.b16 %v4850, %v4846
  %v4963 = vpack.c.b16 %v4851, %v4847
  %v4964 = vpack.c.b16 %v4852, %v4848
  %v4965 = vpack.c.b16 %v4853, %v4849
  %v4966 = vpack.c.b16 %v4858, %v4854
  %v4967 = vpack.c.b16 %v4859, %v4855
  %v4968 = vpack.c.b16 %v4860, %v4856
  %v4969 = vpack.c.b16 %v4861, %v4857
  %v4970 = vpack.c.b16 %v4866, %v4862
  %v4971 = vpack.c.b16 %v4867, %v4863
  %v4972 = vpack.c.b16 %v4868, %v4864
  %v4973 = vpack.c.b16 %v4869, %v4865
  %v4974 = vpack.c.b16 %v4874, %v4870
  %v4975 = vpack.c.b16 %v4875, %v4871
  %v4976 = vpack.c.b16 %v4876, %v4872
  %v4977 = vpack.c.b16 %v4877, %v4873
  %v4978 = vpack.c.b16 %v4882, %v4878
  %v4979 = vpack.c.b16 %v4883, %v4879
  %v4980 = vpack.c.b16 %v4884, %v4880
  %v4981 = vpack.c.b16 %v4885, %v4881
  %v4982 = vpack.c.b16 %v4890, %v4886
  %v4983 = vpack.c.b16 %v4891, %v4887
  %v4984 = vpack.c.b16 %v4892, %v4888
  %v4985 = vpack.c.b16 %v4893, %v4889
  %v4986 = vpack.c.b16 %v4898, %v4894
  %v4987 = vpack.c.b16 %v4899, %v4895
  %v4988 = vpack.c.b16 %v4900, %v4896
  %v4989 = vpack.c.b16 %v4901, %v4897
  %v4990 = vpack.c.b16 %v4906, %v4902
  %v4991 = vpack.c.b16 %v4907, %v4903
  %v4992 = vpack.c.b16 %v4908, %v4904
  %v4993 = vpack.c.b16 %v4909, %v4905
  %v4994 = vpack.c.b16 %v4914, %v4910
  %v4995 = vpack.c.b16 %v4915, %v4911
  %v4996 = vpack.c.b16 %v4916, %v4912
  %v4997 = vpack.c.b16 %v4917, %v4913
  %v4998 = vpack.c.b16 %v4922, %v4918
  %v4999 = vpack.c.b16 %v4923, %v4919
  %v5000 = vpack.c.b16 %v4924, %v4920
  %v5001 = vpack.c.b16 %v4925, %v4921
  %v5002 = vpack.c.b16 %v4930, %v4926
  %v5003 = vpack.c.b16 %v4931, %v4927
  %v5004 = vpack.c.b16 %v4932, %v4928
  %v5005 = vpack.c.b16 %v4933, %v4929
  %v5006 = vpack.c.b16 %v4938, %v4934
  %v5007 = vpack.c.b16 %v4939, %v4935
  %v5008 = vpack.c.b16 %v4940, %v4936
  %v5009 = vpack.c.b16 %v4941, %v4937
  %v5010 = vpack.c.b16 %v4946, %v4942
  %v5011 = vpack.c.b16 %v4947, %v4943
  %v5012 = vpack.c.b16 %v4948, %v4944
  %v5013 = vpack.c.b16 %v4949, %v4945
  %5078 = vmatpush.bf16.msra.mxu0 %v4978
  %5079 = vmatpush.bf16.msra.mxu0 %v4974
  %5080 = vmatpush.bf16.msra.mxu0 %v4970
  %5081 = vmatpush.bf16.msra.mxu0 %v4966
  %5082 = vmatpush.bf16.msra.mxu0 %v4962
  %5083 = vmatpush.bf16.msra.mxu0 %v4958
  %5084 = vmatpush.bf16.msra.mxu0 %v4954
  %5085 = vmatpush.bf16.msra.mxu0 %v4950
  %5086 = vmatmul.bf16.gmra.mxu0 %v4754
  %v5087 = vpop.f32.mrf.mxu0
  %v5088 = vadd.f32 %v113, %v5087
  %v5089 = vpop.f32.mrf.mxu0
  %v5090 = vadd.f32 %v113, %v5089
  %5091 = vdwg.mxu0
  %5092 = vmatpush.bf16.msra.mxu0 %v5010
  %5093 = vmatpush.bf16.msra.mxu0 %v5006
  %5094 = vmatpush.bf16.msra.mxu0 %v5002
  %5095 = vmatpush.bf16.msra.mxu0 %v4998
  %5096 = vmatpush.bf16.msra.mxu0 %v4994
  %5097 = vmatpush.bf16.msra.mxu0 %v4990
  %5098 = vmatpush.bf16.msra.mxu0 %v4986
  %5099 = vmatpush.bf16.msra.mxu0 %v4982
  %5100 = vmatmul.bf16.gmra.mxu0 %v4755
  %v5101 = vpop.f32.mrf.mxu0
  %v5102 = vadd.f32 %v5088, %v5101
  %v5103 = vpop.f32.mrf.mxu0
  %v5104 = vadd.f32 %v5090, %v5103
  %5105 = vdwg.mxu0
  %5106 = vmatpush.bf16.msra.mxu0 %v4979
  %5107 = vmatpush.bf16.msra.mxu0 %v4975
  %5108 = vmatpush.bf16.msra.mxu0 %v4971
  %5109 = vmatpush.bf16.msra.mxu0 %v4967
  %5110 = vmatpush.bf16.msra.mxu0 %v4963
  %5111 = vmatpush.bf16.msra.mxu0 %v4959
  %5112 = vmatpush.bf16.msra.mxu0 %v4955
  %5113 = vmatpush.bf16.msra.mxu0 %v4951
  %5114 = vmatmul.bf16.gmra.mxu0 %v4754
  %v5115 = vpop.f32.mrf.mxu0
  %v5116 = vadd.f32 %v114, %v5115
  %v5117 = vpop.f32.mrf.mxu0
  %v5118 = vadd.f32 %v114, %v5117
  %5119 = vdwg.mxu0
  %5120 = vmatpush.bf16.msra.mxu0 %v5011
  %5121 = vmatpush.bf16.msra.mxu0 %v5007
  %5122 = vmatpush.bf16.msra.mxu0 %v5003
  %5123 = vmatpush.bf16.msra.mxu0 %v4999
  %5124 = vmatpush.bf16.msra.mxu0 %v4995
  %5125 = vmatpush.bf16.msra.mxu0 %v4991
  %5126 = vmatpush.bf16.msra.mxu0 %v4987
  %5127 = vmatpush.bf16.msra.mxu0 %v4983
  %5128 = vmatmul.bf16.gmra.mxu0 %v4755
  %v5129 = vpop.f32.mrf.mxu0
  %v5130 = vadd.f32 %v5116, %v5129
  %v5131 = vpop.f32.mrf.mxu0
  %v5132 = vadd.f32 %v5118, %v5131
  %5133 = vdwg.mxu0
  %5134 = vmatpush.bf16.msra.mxu0 %v4980
  %5135 = vmatpush.bf16.msra.mxu0 %v4976
  %5136 = vmatpush.bf16.msra.mxu0 %v4972
  %5137 = vmatpush.bf16.msra.mxu0 %v4968
  %5138 = vmatpush.bf16.msra.mxu0 %v4964
  %5139 = vmatpush.bf16.msra.mxu0 %v4960
  %5140 = vmatpush.bf16.msra.mxu0 %v4956
  %5141 = vmatpush.bf16.msra.mxu0 %v4952
  %5142 = vmatmul.bf16.gmra.mxu0 %v4754
  %v5143 = vpop.f32.mrf.mxu0
  %v5144 = vadd.f32 %v115, %v5143
  %v5145 = vpop.f32.mrf.mxu0
  %v5146 = vadd.f32 %v115, %v5145
  %5147 = vdwg.mxu0
  %5148 = vmatpush.bf16.msra.mxu0 %v5012
  %5149 = vmatpush.bf16.msra.mxu0 %v5008
  %5150 = vmatpush.bf16.msra.mxu0 %v5004
  %5151 = vmatpush.bf16.msra.mxu0 %v5000
  %5152 = vmatpush.bf16.msra.mxu0 %v4996
  %5153 = vmatpush.bf16.msra.mxu0 %v4992
  %5154 = vmatpush.bf16.msra.mxu0 %v4988
  %5155 = vmatpush.bf16.msra.mxu0 %v4984
  %5156 = vmatmul.bf16.gmra.mxu0 %v4755
  %v5157 = vpop.f32.mrf.mxu0
  %v5158 = vadd.f32 %v5144, %v5157
  %v5159 = vpop.f32.mrf.mxu0
  %v5160 = vadd.f32 %v5146, %v5159
  %5161 = vdwg.mxu0
  %5162 = vmatpush.bf16.msra.mxu0 %v4981
  %5163 = vmatpush.bf16.msra.mxu0 %v4977
  %5164 = vmatpush.bf16.msra.mxu0 %v4973
  %5165 = vmatpush.bf16.msra.mxu0 %v4969
  %5166 = vmatpush.bf16.msra.mxu0 %v4965
  %5167 = vmatpush.bf16.msra.mxu0 %v4961
  %5168 = vmatpush.bf16.msra.mxu0 %v4957
  %5169 = vmatpush.bf16.msra.mxu0 %v4953
  %5170 = vmatmul.bf16.gmra.mxu0 %v4754
  %v5171 = vpop.f32.mrf.mxu0
  %v5172 = vadd.f32 %v116, %v5171
  %v5173 = vpop.f32.mrf.mxu0
  %v5174 = vadd.f32 %v116, %v5173
  %5175 = vdwg.mxu0
  %5176 = vmatpush.bf16.msra.mxu0 %v5013
  %5177 = vmatpush.bf16.msra.mxu0 %v5009
  %5178 = vmatpush.bf16.msra.mxu0 %v5005
  %5179 = vmatpush.bf16.msra.mxu0 %v5001
  %5180 = vmatpush.bf16.msra.mxu0 %v4997
  %5181 = vmatpush.bf16.msra.mxu0 %v4993
  %5182 = vmatpush.bf16.msra.mxu0 %v4989
  %5183 = vmatpush.bf16.msra.mxu0 %v4985
  %5184 = vmatmul.bf16.gmra.mxu0 %v4755
  %v5185 = vpop.f32.mrf.mxu0
  %v5186 = vadd.f32 %v5172, %v5185
  %v5187 = vpop.f32.mrf.mxu0
  %v5188 = vadd.f32 %v5174, %v5187
  %5189 = vdwg.mxu0
  %v5190 = vxor.u32 %v5102, 2147483648
  %v5191 = vxor.u32 %v5104, 2147483648
  %v5192 = vmul.f32 %v5190, 1.442695
  %v5193 = vpow.pop %v5192
  %v5194 = vmul.f32 %v5191, 1.442695
  %v5195 = vpow.pop %v5194
  %v5196 = vadd.f32 %v5193, 1.0
  %v5197 = vadd.f32 %v5195, 1.0
  %v5198 = vrcp.pop %v5196
  %v5199 = vmul.f32 %v5196, %v5198
  %v5200 = vsub.f32 1.0, %v5199
  %v5201 = vmul.f32 %v5198, %v5200
  %v5202 = vadd.f32 %v5198, %v5201
  %vm5203 = vweird.f32 %v5196
  %vm5204 = vweird.f32 %v5198
  %vm5205 = vmor %vm5203, %vm5204
  %v5206 = vsel %vm5205, %v5198, %v5202
  %v5207 = vand.u32 2147483647, %v5196
  %vm5208 = vcmp.eq.f32.partialorder %v5207, 8.507059e+37
  %v5209 = vand.u32 %v5196, 2147483648
  %v5210 = vor.u32 1.1754944e-38, %v5209
  %v5211 = vsel %vm5208, %v5210, %v5206
  %v5212 = vmul.f32 1.0, %v5211
  %v5213 = vrcp.pop %v5197
  %v5214 = vmul.f32 %v5197, %v5213
  %v5215 = vsub.f32 1.0, %v5214
  %v5216 = vmul.f32 %v5213, %v5215
  %v5217 = vadd.f32 %v5213, %v5216
  %vm5218 = vweird.f32 %v5197
  %vm5219 = vweird.f32 %v5213
  %vm5220 = vmor %vm5218, %vm5219
  %v5221 = vsel %vm5220, %v5213, %v5217
  %v5222 = vand.u32 2147483647, %v5197
  %vm5223 = vcmp.eq.f32.partialorder %v5222, 8.507059e+37
  %v5224 = vand.u32 %v5197, 2147483648
  %v5225 = vor.u32 1.1754944e-38, %v5224
  %v5226 = vsel %vm5223, %v5225, %v5221
  %v5227 = vmul.f32 1.0, %v5226
  %v5228 = vxor.u32 %v5130, 2147483648
  %v5229 = vxor.u32 %v5132, 2147483648
  %v5230 = vmul.f32 %v5228, 1.442695
  %v5231 = vpow.pop %v5230
  %v5232 = vmul.f32 %v5229, 1.442695
  %v5233 = vpow.pop %v5232
  %v5234 = vadd.f32 %v5231, 1.0
  %v5235 = vadd.f32 %v5233, 1.0
  %v5236 = vrcp.pop %v5234
  %v5237 = vmul.f32 %v5234, %v5236
  %v5238 = vsub.f32 1.0, %v5237
  %v5239 = vmul.f32 %v5236, %v5238
  %v5240 = vadd.f32 %v5236, %v5239
  %vm5241 = vweird.f32 %v5234
  %vm5242 = vweird.f32 %v5236
  %vm5243 = vmor %vm5241, %vm5242
  %v5244 = vsel %vm5243, %v5236, %v5240
  %v5245 = vand.u32 2147483647, %v5234
  %vm5246 = vcmp.eq.f32.partialorder %v5245, 8.507059e+37
  %v5247 = vand.u32 %v5234, 2147483648
  %v5248 = vor.u32 1.1754944e-38, %v5247
  %v5249 = vsel %vm5246, %v5248, %v5244
  %v5250 = vmul.f32 1.0, %v5249
  %v5251 = vrcp.pop %v5235
  %v5252 = vmul.f32 %v5235, %v5251
  %v5253 = vsub.f32 1.0, %v5252
  %v5254 = vmul.f32 %v5251, %v5253
  %v5255 = vadd.f32 %v5251, %v5254
  %vm5256 = vweird.f32 %v5235
  %vm5257 = vweird.f32 %v5251
  %vm5258 = vmor %vm5256, %vm5257
  %v5259 = vsel %vm5258, %v5251, %v5255
  %v5260 = vand.u32 2147483647, %v5235
  %vm5261 = vcmp.eq.f32.partialorder %v5260, 8.507059e+37
  %v5262 = vand.u32 %v5235, 2147483648
  %v5263 = vor.u32 1.1754944e-38, %v5262
  %v5264 = vsel %vm5261, %v5263, %v5259
  %v5265 = vmul.f32 1.0, %v5264
  %v5266 = vtanh.pop %v5158
  %v5267 = vtanh.pop %v5160
  %v5268 = vxor.u32 %v5186, 2147483648
  %v5269 = vxor.u32 %v5188, 2147483648
  %v5270 = vmul.f32 %v5268, 1.442695
  %v5271 = vpow.pop %v5270
  %v5272 = vmul.f32 %v5269, 1.442695
  %v5273 = vpow.pop %v5272
  %v5274 = vadd.f32 %v5271, 1.0
  %v5275 = vadd.f32 %v5273, 1.0
  %v5276 = vrcp.pop %v5274
  %v5277 = vmul.f32 %v5274, %v5276
  %v5278 = vsub.f32 1.0, %v5277
  %v5279 = vmul.f32 %v5276, %v5278
  %v5280 = vadd.f32 %v5276, %v5279
  %vm5281 = vweird.f32 %v5274
  %vm5282 = vweird.f32 %v5276
  %vm5283 = vmor %vm5281, %vm5282
  %v5284 = vsel %vm5283, %v5276, %v5280
  %v5285 = vand.u32 2147483647, %v5274
  %vm5286 = vcmp.eq.f32.partialorder %v5285, 8.507059e+37
  %v5287 = vand.u32 %v5274, 2147483648
  %v5288 = vor.u32 1.1754944e-38, %v5287
  %v5289 = vsel %vm5286, %v5288, %v5284
  %v5290 = vmul.f32 1.0, %v5289
  %v5291 = vrcp.pop %v5275
  %v5292 = vmul.f32 %v5275, %v5291
  %v5293 = vsub.f32 1.0, %v5292
  %v5294 = vmul.f32 %v5291, %v5293
  %v5295 = vadd.f32 %v5291, %v5294
  %vm5296 = vweird.f32 %v5275
  %vm5297 = vweird.f32 %v5291
  %vm5298 = vmor %vm5296, %vm5297
  %v5299 = vsel %vm5298, %v5291, %v5295
  %v5300 = vand.u32 2147483647, %v5275
  %vm5301 = vcmp.eq.f32.partialorder %v5300, 8.507059e+37
  %v5302 = vand.u32 %v5275, 2147483648
  %v5303 = vor.u32 1.1754944e-38, %v5302
  %v5304 = vsel %vm5301, %v5303, %v5299
  %v5305 = vmul.f32 1.0, %v5304
  %v5306 = vld [vmem:[#allocation3] sm:$0xff]
  %v5307 = vld [vmem:[#allocation3 + $0x8] sm:$0xff]
  %v5308 = vmul.f32 %v5250, %v5306
  %v5309 = vmul.f32 %v5265, %v5307
  %v5310 = vmul.f32 %v5212, %v5266
  %v5311 = vmul.f32 %v5227, %v5267
  %v5312 = vadd.f32 %v5308, %v5310
  %v5313 = vadd.f32 %v5309, %v5311
  %v5314 = vtanh.pop %v5312
  %v5315 = vtanh.pop %v5313
  %v5316 = vmul.f32 %v5290, %v5314
  %v5317 = vmul.f32 %v5305, %v5315
  %5318 = vst [vmem:[#allocation3] sm:$0xff] %v5312
  %5319 = vst [vmem:[#allocation3 + $0x8] sm:$0xff] %v5313
  %v5320 = vpack.c.bf16 %v5316, %v5316
  %v5321 = vpack.c.bf16 %v5317, %v5317
  %5322 = vst [vmem:[#allocation2 + $0x4] sm:$0xf] %v5320
  %5323 = vst [vmem:[#allocation2 + $0xc] sm:$0xf] %v5321
  %v5324 = vld [vmem:[#allocation2 + $0x4] sm:$0xf]
  %v5325 = vld [vmem:[#allocation2 + $0xc] sm:$0xf]
  %v5326 = vld [vmem:[%s3] sm:$0xf]
  %v5327 = vld [vmem:[%s3 + $0x4] sm:$0xf]
  %v5328 = vld [vmem:[%s3 + $0x8] sm:$0xf]
  %v5329 = vld [vmem:[%s3 + $0xc] sm:$0xf]
  %v5330 = vld [vmem:[%s3 + $0x10] sm:$0xf]
  %v5331 = vld [vmem:[%s3 + $0x14] sm:$0xf]
  %v5332 = vld [vmem:[%s3 + $0x18] sm:$0xf]
  %v5333 = vld [vmem:[%s3 + $0x1c] sm:$0xf]
  %v5334 = vld [vmem:[%s3 + $0x20] sm:$0xf]
  %v5335 = vld [vmem:[%s3 + $0x24] sm:$0xf]
  %v5336 = vld [vmem:[%s3 + $0x28] sm:$0xf]
  %v5337 = vld [vmem:[%s3 + $0x2c] sm:$0xf]
  %v5338 = vld [vmem:[%s3 + $0x30] sm:$0xf]
  %v5339 = vld [vmem:[%s3 + $0x34] sm:$0xf]
  %v5340 = vld [vmem:[%s3 + $0x38] sm:$0xf]
  %v5341 = vld [vmem:[%s3 + $0x3c] sm:$0xf]
  %v5342 = vld [vmem:[%s4] sm:$0x1]
  %v5344 = vperm.slane %v5342, 0
  %v5348 = vunpack.c.l.b16 %v5324
  %v5349 = vunpack.c.l.b16 %v5325
  %v5350 = vpack.c.b16 %v5349, %v5348
  %v5368 = vunpack.c.l.b16 %v5326
  %v5369 = vunpack.c.l.b16 %v5327
  %v5370 = vunpack.c.l.b16 %v5328
  %v5371 = vunpack.c.l.b16 %v5329
  %v5372 = vunpack.c.l.b16 %v5330
  %v5373 = vunpack.c.l.b16 %v5331
  %v5374 = vunpack.c.l.b16 %v5332
  %v5375 = vunpack.c.l.b16 %v5333
  %v5376 = vunpack.c.l.b16 %v5334
  %v5377 = vunpack.c.l.b16 %v5335
  %v5378 = vunpack.c.l.b16 %v5336
  %v5379 = vunpack.c.l.b16 %v5337
  %v5380 = vunpack.c.l.b16 %v5338
  %v5381 = vunpack.c.l.b16 %v5339
  %v5382 = vunpack.c.l.b16 %v5340
  %v5383 = vunpack.c.l.b16 %v5341
  %v5384 = vpack.c.b16 %v5369, %v5368
  %v5385 = vpack.c.b16 %v5371, %v5370
  %v5386 = vpack.c.b16 %v5373, %v5372
  %v5387 = vpack.c.b16 %v5375, %v5374
  %v5388 = vpack.c.b16 %v5377, %v5376
  %v5389 = vpack.c.b16 %v5379, %v5378
  %v5390 = vpack.c.b16 %v5381, %v5380
  %v5391 = vpack.c.b16 %v5383, %v5382
  %5400 = vmatpush.bf16.msra.mxu0 %v5391
  %5401 = vmatpush.bf16.msra.mxu0 %v5390
  %5402 = vmatpush.bf16.msra.mxu0 %v5389
  %5403 = vmatpush.bf16.msra.mxu0 %v5388
  %5404 = vmatpush.bf16.msra.mxu0 %v5387
  %5405 = vmatpush.bf16.msra.mxu0 %v5386
  %5406 = vmatpush.bf16.msra.mxu0 %v5385
  %5407 = vmatpush.bf16.msra.mxu0 %v5384
  %5408 = vmatmul.bf16.gmra.mxu0 %v5350
  %v5409 = vpop.f32.mrf.mxu0
  %v5410 = vadd.f32 %v5344, %v5409
  %v5411 = vpop.f32.mrf.mxu0
  %v5412 = vadd.f32 %v5344, %v5411
  %5413 = vdwg.mxu0
  %5414 = vst [vmem:[%s5] sm:$0xff] %v5410
  %5415 = vst [vmem:[%s5 + $0x8] sm:$0xff] %v5412
  // Predicated region
  $region22: #{language_module_forward.1} parent=0 // pred_check
    _
  $region23: #{language_module_forward.1} parent=0 // pred_check_branch
    %5417 = sbr.rel (0) target = $region25
  $region24: #{language_module_forward.1} parent=0 // pred_region
    _
  $region25: #{language_module_forward.1} parent=0 // pred_fallthru
    _
  // Predicated region
  $region26: #{language_module_forward.1} parent=0 // pred_check
    _
  $region27: #{language_module_forward.1} parent=0 // pred_check_branch
    %5419 = sbr.rel (0) target = $region29
  $region28: #{language_module_forward.1} parent=0 // pred_region
    _
  $region29: #{language_module_forward.1} parent=0 // pred_fallthru
    _

</llo_original>
